<compile_context>
chip_gen: v6e
topology: v6e:2x2x1
jax: 0.10.0
libtpu: 0.0.40
codegen_flags: <defaults>
</compile_context>

<pallas_src>
import functools
import numpy as np
import jax
import jax.numpy as jnp
from jax import lax
from jax.experimental import pallas as pl
from jax.experimental.pallas import tpu as pltpu


_VMEM = pl.BlockSpec(memory_space=pltpu.MemorySpace.VMEM)
_SMEM = pl.BlockSpec(memory_space=pltpu.MemorySpace.SMEM)


# ----------------------------------------------------------------------------
# Fused deformer kernel (3 blocks + pooling + losses, all VMEM-resident)
# ----------------------------------------------------------------------------
def _p2m_fused_kernel(
        # data
        x0_ref, c0_ref, a_ref, img_ref, gt_t_ref, gt_sq_ref, boff_ref, mask_ref,
        # stacked per-block weights (leading dim = n_blocks)
        w0a_x_ref, w0a_p_ref, w0a_c_ref, w1a_x_ref, w1a_p_ref, w1a_c_ref,
        ba_ref, w0b_ref, w1b_ref, bb_ref, wc_ref, bc_ref,
        # outputs
        x_out_ref, c_out_ref, loss_ref,
        *, n_blocks, H, W):
    f32 = jnp.float32
    V = x0_ref.shape[0]
    npix = img_ref.shape[0]                       # B * H * W

    a = a_ref[...]                                # (V, V) degree-normalized adjacency
    img = img_ref[...]                            # (B*H*W, C)
    boff = boff_ref[...]                          # (V, 1) int32, per-vertex batch*H*W
    lane = lax.broadcasted_iota(jnp.int32, (V, npix), 1)

    x = x0_ref[...]                               # (V, F) vertex features
    c = c0_ref[...]                               # (V, 2) coords in [-1, 1]

    def mm(p, q):
        return jnp.dot(p, q, preferred_element_type=f32)

    for b in range(n_blocks):                     # static unroll (3 blocks)
        # ---- perceptual pooling: bilinear weights as one (V, B*H*W) matrix ----
        px = (c[:, 0:1] + 1.0) * 0.5 * (W - 1)
        py = (c[:, 1:2] + 1.0) * 0.5 * (H - 1)
        x0f = jnp.clip(jnp.floor(px), 0.0, W - 1)
        y0f = jnp.clip(jnp.floor(py), 0.0, H - 1)
        x1f = jnp.clip(x0f + 1.0, 0.0, W - 1)
        y1f = jnp.clip(y0f + 1.0, 0.0, H - 1)
        wx = px - x0f
        wy = py - y0f
        x0i = x0f.astype(jnp.int32)
        x1i = x1f.astype(jnp.int32)
        y0i = y0f.astype(jnp.int32)
        y1i = y1f.astype(jnp.int32)
        i00 = boff + y0i * W + x0i
        i01 = boff + y0i * W + x1i
        i10 = boff + y1i * W + x0i
        i11 = boff + y1i * W + x1i
        w00 = (1.0 - wx) * (1.0 - wy)
        w01 = wx * (1.0 - wy)
        w10 = (1.0 - wx) * wy
        w11 = wx * wy
        wbil = (jnp.where(lane == i00, w00, 0.0)
                + jnp.where(lane == i01, w01, 0.0)
                + jnp.where(lane == i10, w10, 0.0)
                + jnp.where(lane == i11, w11, 0.0))
        percep = mm(wbil, img)                                        # (V, C)

        # ---- GCN layer a: relu(Xin@W0 + (A@Xin)@W1 + b), Xin = [x|percep|c]
        #      ((A@X)@W == A@(X@W); concat expressed as row-split dots)
        s0 = mm(x, w0a_x_ref[b]) + mm(percep, w0a_p_ref[b]) + mm(c, w0a_c_ref[b])
        s1 = mm(x, w1a_x_ref[b]) + mm(percep, w1a_p_ref[b]) + mm(c, w1a_c_ref[b])
        h = jnp.maximum(s0 + mm(a, s1) + ba_ref[b], 0.0)

        # ---- GCN layer b
        h = jnp.maximum(mm(h, w0b_ref[b]) + mm(a, mm(h, w1b_ref[b])) + bb_ref[b], 0.0)
        x = h

        # ---- coordinate head (residual_change=False -> fresh coords)
        c = jnp.tanh(mm(h, wc_ref[b]) + bc_ref[b])

    x_out_ref[...] = x
    c_out_ref[...] = c

    # ------------------------------ losses -----------------------------------
    anc = mm(a, c)                                # neighbor mean of coords (V, 2)
    lap = c - anc
    laploss = jnp.sum(lap * lap) / V
    # sum over directed edges ||c_dst - c_src||^2 == 4 * sum(c * (c - A_norm@c));
    # there are 2*V directed edges (degree-2 triangles) -> mean = 2*sum/V.
    eloss = 2.0 * jnp.sum(c * lap) / V

    # symmetric chamfer, batch-masked (cross-batch pairs penalized by +1e9)
    gt_t = gt_t_ref[...]                          # (2, B*Ng)
    gt_sq = gt_sq_ref[...]                        # (1, B*Ng)
    mask = mask_ref[...]                          # (V, B*Ng)
    p_sq = jnp.sum(c * c, axis=1, keepdims=True)  # (V, 1)
    d = p_sq + gt_sq - 2.0 * mm(c, gt_t)          # (V, B*Ng)
    d = jnp.maximum(d, 0.0) + mask                # clamp f32 cancellation
    closs = (jnp.mean(jnp.min(d, axis=1, keepdims=True))
             + jnp.mean(jnp.min(d, axis=0, keepdims=True)))

    nloss = 0.0  # TODO(synk): normal loss (nearest-gt normal matching) not implemented.
    loss_ref[0, 0] = closs
    loss_ref[0, 1] = eloss
    loss_ref[0, 2] = laploss
    loss_ref[0, 3] = closs + eloss + laploss + nloss


def deformer_forward_fused(x0, c0, a_norm, img_flat, gt_t, gt_sq, boff, mask, sw,
                           *, n_blocks, H, W):
    V, F = x0.shape
    kernel = functools.partial(_p2m_fused_kernel, n_blocks=n_blocks, H=H, W=W)
    args = (x0, c0, a_norm, img_flat, gt_t, gt_sq, boff, mask,
            sw["w0a_x"], sw["w0a_p"], sw["w0a_c"],
            sw["w1a_x"], sw["w1a_p"], sw["w1a_c"],
            sw["ba"], sw["w0b"], sw["w1b"], sw["bb"], sw["wc"], sw["bc"])
    return pl.pallas_call(
        kernel,
        out_shape=(jax.ShapeDtypeStruct((V, F), jnp.float32),
                   jax.ShapeDtypeStruct((V, 2), jnp.float32),
                   jax.ShapeDtypeStruct((1, 4), jnp.float32)),
        in_specs=[_VMEM] * len(args),
        out_specs=(_VMEM, _VMEM, _SMEM),
    )(*args)


# ----------------------------------------------------------------------------
# JAX glue (mesh construction, parameters)
# ----------------------------------------------------------------------------
def initial_mesh(batch_size, feature_size):
    c = np.array([[0.0, -0.9], [-0.9, 0.9], [0.9, 0.9]], np.float32)
    x = np.zeros((3, feature_size), np.float32)
    x[:, :2] = c
    return jnp.asarray(np.tile(x, (batch_size, 1))), jnp.asarray(np.tile(c, (batch_size, 1)))


def build_adjacency(batch_size):
    edges = np.array([[0, 1], [0, 2], [1, 0], [1, 2], [2, 0], [2, 1]])
    V = batch_size * 3
    A = np.zeros((V, V), np.float32)
    for b in range(batch_size):
        off = b * 3
        for s, d in edges:
            A[off + d, off + s] = 1.0
    deg = np.maximum(A.sum(axis=1, keepdims=True), 1.0)
    return jnp.asarray(A / deg)


def xavier(key, shape):
    fan_in, fan_out = shape
    limit = float(np.sqrt(6.0 / (fan_in + fan_out)))
    return jax.random.uniform(key, shape, jnp.float32, -limit, limit)


def init_deformer_weights(key, params):
    fs, cimg = params["feature_size"], params["img_channels"]
    fin = fs + cimg + 2                       # concat(features, perceptual feats, coords)
    blocks = []
    for _ in range(params["gbottlenecks"]):
        key, *ks = jax.random.split(key, 8)
        blocks.append(dict(
            w0a=xavier(ks[0], (fin, fs)), w1a=xavier(ks[1], (fin, fs)),
            ba=jnp.zeros((1, fs), jnp.float32),
            w0b=xavier(ks[2], (fs, fs)), w1b=xavier(ks[3], (fs, fs)),
            bb=jnp.zeros((1, fs), jnp.float32),
            wc=xavier(ks[4], (fs, 2)),
            bc=jnp.zeros((1, 2), jnp.float32),
        ))
    return blocks


def stack_and_split_weights(blocks, feature_size, img_channels):
    """Stack blocks along a leading axis and row-split the layer-a weights so the
    in-kernel concat([x, percep, c]) @ W becomes three plain dots."""
    F, C = feature_size, img_channels
    st = lambda k: jnp.stack([b[k] for b in blocks])
    w0a, w1a = st("w0a"), st("w1a")            # (nb, F+C+2, F)
    return dict(
        w0a_x=w0a[:, :F, :], w0a_p=w0a[:, F:F + C, :], w0a_c=w0a[:, F + C:, :],
        w1a_x=w1a[:, :F, :], w1a_p=w1a[:, F:F + C, :], w1a_c=w1a[:, F + C:, :],
        ba=st("ba"), w0b=st("w0b"), w1b=st("w1b"), bb=st("bb"),
        wc=st("wc"), bc=st("bc"))


# ----------------------------------------------------------------------------
# Pixel2Mesh forward (DeformerBlock db1), fully jitted -> one Pallas launch
# ----------------------------------------------------------------------------
@functools.partial(jax.jit,
                   static_argnames=("batch_size", "feature_size", "img_channels",
                                    "gbottlenecks", "img_size"))
def pixel2mesh_forward(image_features, gt, gtnormals, stacked_w, a_norm, *,
                       batch_size, feature_size, img_channels, gbottlenecks, img_size):
    del gtnormals  # TODO(synk): normal loss (nearest-gt normal matching) not implemented.
    B, C = batch_size, img_channels
    H = W = img_size
    Ng = gt.shape[1]

    # TODO(synk): `initial_adders` vertex-addition (mesh topology refinement) not implemented.
    x0, c0 = initial_mesh(B, feature_size)

    # One-time layout prep (traced once under jit).
    img_flat = jnp.transpose(image_features, (0, 2, 3, 1)).reshape(B * H * W, C)
    gt_flat = gt.reshape(B * Ng, 2).astype(jnp.float32)
    gt_t = gt_flat.T                                           # (2, B*Ng)
    gt_sq = jnp.sum(gt_flat * gt_flat, axis=1)[None, :]        # (1, B*Ng)

    vb = np.repeat(np.arange(B, dtype=np.int32), 3)            # vertex -> batch id
    gb = np.repeat(np.arange(B, dtype=np.int32), Ng)           # gt point -> batch id
    boff = jnp.asarray((vb * H * W)[:, None].astype(np.int32))                     # (V, 1)
    mask = jnp.asarray(np.where(vb[:, None] == gb[None, :], 0.0, 1e9).astype(np.float32))

    x_out, c_out, lv = deformer_forward_fused(
        x0, c0, a_norm, img_flat, gt_t, gt_sq, boff, mask, stacked_w,
        n_blocks=gbottlenecks, H=H, W=W)

    closs, eloss, laploss, loss = lv[0, 0], lv[0, 1], lv[0, 2], lv[0, 3]
    nloss = jnp.float32(0.0)
    losses = dict(closs=closs, nloss=nloss, eloss=eloss, laploss=laploss, loss=loss)
    return x_out, c_out, losses


# ----------------------------------------------------------------------------
# Main
# ----------------------------------------------------------------------------
if __name__ == "__main__":
    params = dict(
        batch_size=2,
        feature_size=32,
        gbottlenecks=3,
        initial_adders=0,
        img_channels=4,
        img_size=16,
    )

    key = jax.random.PRNGKey(0)
    k_img, k_gt, k_w = jax.random.split(key, 3)

    image_features = jax.random.normal(
        k_img, (params["batch_size"], params["img_channels"],
                params["img_size"], params["img_size"]), jnp.float32)
    gt = jax.random.uniform(k_gt, (params["batch_size"], 16, 2), jnp.float32, -1.0, 1.0)
    gtnormals = jax.random.normal(jax.random.PRNGKey(1),
                                  (params["batch_size"], 16, 2), jnp.float32)

    weights = init_deformer_weights(k_w, params)
    stacked_w = stack_and_split_weights(weights, params["feature_size"], params["img_channels"])
    a_norm = build_adjacency(params["batch_size"])

    batch_x1, batch_c1, losses = pixel2mesh_forward(
        image_features, gt, gtnormals, stacked_w, a_norm,
        batch_size=params["batch_size"], feature_size=params["feature_size"],
        img_channels=params["img_channels"], gbottlenecks=params["gbottlenecks"],
        img_size=params["img_size"])

    jax.block_until_ready(batch_x1)
    jax.block_until_ready(batch_c1)
    jax.block_until_ready(losses["loss"])

    assert batch_x1.shape == (params["batch_size"] * 3, params["feature_size"])
    assert batch_c1.shape == (params["batch_size"] * 3, 2)
    assert np.isfinite(np.asarray(losses["loss"]))
    print("KERNEL_OK")
</pallas_src>

<mosaic_0001>
module attributes {stable_mosaic.version = 11 : i64} {
  func.func @_p2m_fused_kernel(%arg0: memref<6x32xf32, #tpu.memory_space<vmem>>, %arg1: memref<6x2xf32, #tpu.memory_space<vmem>>, %arg2: memref<6x6xf32, #tpu.memory_space<vmem>>, %arg3: memref<512x4xf32, #tpu.memory_space<vmem>>, %arg4: memref<2x32xf32, #tpu.memory_space<vmem>>, %arg5: memref<1x32xf32, #tpu.memory_space<vmem>>, %arg6: memref<6x1xi32, #tpu.memory_space<vmem>>, %arg7: memref<6x32xf32, #tpu.memory_space<vmem>>, %arg8: memref<3x32x32xf32, #tpu.memory_space<vmem>>, %arg9: memref<3x4x32xf32, #tpu.memory_space<vmem>>, %arg10: memref<3x2x32xf32, #tpu.memory_space<vmem>>, %arg11: memref<3x32x32xf32, #tpu.memory_space<vmem>>, %arg12: memref<3x4x32xf32, #tpu.memory_space<vmem>>, %arg13: memref<3x2x32xf32, #tpu.memory_space<vmem>>, %arg14: memref<3x1x32xf32, #tpu.memory_space<vmem>>, %arg15: memref<3x32x32xf32, #tpu.memory_space<vmem>>, %arg16: memref<3x32x32xf32, #tpu.memory_space<vmem>>, %arg17: memref<3x1x32xf32, #tpu.memory_space<vmem>>, %arg18: memref<3x32x2xf32, #tpu.memory_space<vmem>>, %arg19: memref<3x1x2xf32, #tpu.memory_space<vmem>>, %arg20: memref<6x32xf32, #tpu.memory_space<vmem>>, %arg21: memref<6x2xf32, #tpu.memory_space<vmem>>, %arg22: memref<1x4xf32, #tpu.memory_space<smem>>) attributes {dimension_semantics = [], scalar_prefetch = 0 : i64, scratch_operands = 0 : i64, tpu.core_type = #tpu.core_type<tc>} {
    %c0 = arith.constant 0 : index
    %c0_0 = arith.constant 0 : index
    %0 = vector.load %arg2[%c0, %c0_0] : memref<6x6xf32, #tpu.memory_space<vmem>>, vector<6x6xf32>
    %c0_1 = arith.constant 0 : index
    %c0_2 = arith.constant 0 : index
    %1 = vector.load %arg3[%c0_1, %c0_2] : memref<512x4xf32, #tpu.memory_space<vmem>>, vector<512x4xf32>
    %c0_3 = arith.constant 0 : index
    %c0_4 = arith.constant 0 : index
    %2 = vector.load %arg6[%c0_3, %c0_4] : memref<6x1xi32, #tpu.memory_space<vmem>>, vector<6x1xi32>
    %3 = tpu.iota {dimensions = array<i32: 1>} : vector<6x512xi32>
    %c0_5 = arith.constant 0 : index
    %c0_6 = arith.constant 0 : index
    %4 = vector.load %arg0[%c0_5, %c0_6] : memref<6x32xf32, #tpu.memory_space<vmem>>, vector<6x32xf32>
    %c0_7 = arith.constant 0 : index
    %c0_8 = arith.constant 0 : index
    %5 = vector.load %arg1[%c0_7, %c0_8] : memref<6x2xf32, #tpu.memory_space<vmem>>, vector<6x2xf32>
    %6 = vector.extract_strided_slice %5 {offsets = [0, 0], sizes = [6, 1], strides = [1, 1]} : vector<6x2xf32> to vector<6x1xf32>
    %cst = arith.constant 1.000000e+00 : f32
    %7 = vector.broadcast %cst : f32 to vector<6x1xf32>
    %8 = arith.addf %6, %7 : vector<6x1xf32>
    %cst_9 = arith.constant 5.000000e-01 : f32
    %9 = vector.broadcast %cst_9 : f32 to vector<6x1xf32>
    %10 = arith.mulf %8, %9 : vector<6x1xf32>
    %cst_10 = arith.constant 1.500000e+01 : f32
    %11 = vector.broadcast %cst_10 : f32 to vector<6x1xf32>
    %12 = arith.mulf %10, %11 : vector<6x1xf32>
    %13 = vector.extract_strided_slice %5 {offsets = [0, 1], sizes = [6, 1], strides = [1, 1]} : vector<6x2xf32> to vector<6x1xf32>
    %cst_11 = arith.constant 1.000000e+00 : f32
    %14 = vector.broadcast %cst_11 : f32 to vector<6x1xf32>
    %15 = arith.addf %13, %14 : vector<6x1xf32>
    %cst_12 = arith.constant 5.000000e-01 : f32
    %16 = vector.broadcast %cst_12 : f32 to vector<6x1xf32>
    %17 = arith.mulf %15, %16 : vector<6x1xf32>
    %cst_13 = arith.constant 1.500000e+01 : f32
    %18 = vector.broadcast %cst_13 : f32 to vector<6x1xf32>
    %19 = arith.mulf %17, %18 : vector<6x1xf32>
    %20 = math.floor %12 : vector<6x1xf32>
    %cst_14 = arith.constant 0.000000e+00 : f32
    %c15_i32 = arith.constant 15 : i32
    %21 = vector.broadcast %cst_14 : f32 to vector<6x1xf32>
    %22 = arith.maximumf %21, %20 : vector<6x1xf32>
    %23 = arith.sitofp %c15_i32 : i32 to f32
    %24 = vector.broadcast %23 : f32 to vector<6x1xf32>
    %25 = arith.minimumf %24, %22 : vector<6x1xf32>
    %26 = math.floor %19 : vector<6x1xf32>
    %cst_15 = arith.constant 0.000000e+00 : f32
    %c15_i32_16 = arith.constant 15 : i32
    %27 = vector.broadcast %cst_15 : f32 to vector<6x1xf32>
    %28 = arith.maximumf %27, %26 : vector<6x1xf32>
    %29 = arith.sitofp %c15_i32_16 : i32 to f32
    %30 = vector.broadcast %29 : f32 to vector<6x1xf32>
    %31 = arith.minimumf %30, %28 : vector<6x1xf32>
    %cst_17 = arith.constant 1.000000e+00 : f32
    %32 = vector.broadcast %cst_17 : f32 to vector<6x1xf32>
    %33 = arith.addf %25, %32 : vector<6x1xf32>
    %cst_18 = arith.constant 0.000000e+00 : f32
    %c15_i32_19 = arith.constant 15 : i32
    %34 = vector.broadcast %cst_18 : f32 to vector<6x1xf32>
    %35 = arith.maximumf %34, %33 : vector<6x1xf32>
    %36 = arith.sitofp %c15_i32_19 : i32 to f32
    %37 = vector.broadcast %36 : f32 to vector<6x1xf32>
    %38 = arith.minimumf %37, %35 : vector<6x1xf32>
    %cst_20 = arith.constant 1.000000e+00 : f32
    %39 = vector.broadcast %cst_20 : f32 to vector<6x1xf32>
    %40 = arith.addf %31, %39 : vector<6x1xf32>
    %cst_21 = arith.constant 0.000000e+00 : f32
    %c15_i32_22 = arith.constant 15 : i32
    %41 = vector.broadcast %cst_21 : f32 to vector<6x1xf32>
    %42 = arith.maximumf %41, %40 : vector<6x1xf32>
    %43 = arith.sitofp %c15_i32_22 : i32 to f32
    %44 = vector.broadcast %43 : f32 to vector<6x1xf32>
    %45 = arith.minimumf %44, %42 : vector<6x1xf32>
    %46 = arith.subf %12, %25 : vector<6x1xf32>
    %47 = arith.subf %19, %31 : vector<6x1xf32>
    %48 = arith.fptosi %25 : vector<6x1xf32> to vector<6x1xi32>
    %49 = arith.fptosi %38 : vector<6x1xf32> to vector<6x1xi32>
    %50 = arith.fptosi %31 : vector<6x1xf32> to vector<6x1xi32>
    %51 = arith.fptosi %45 : vector<6x1xf32> to vector<6x1xi32>
    %c16_i32 = arith.constant 16 : i32
    %52 = vector.broadcast %c16_i32 : i32 to vector<6x1xi32>
    %53 = arith.muli %50, %52 : vector<6x1xi32>
    %54 = arith.addi %2, %53 : vector<6x1xi32>
    %55 = arith.addi %54, %48 : vector<6x1xi32>
    %c16_i32_23 = arith.constant 16 : i32
    %56 = vector.broadcast %c16_i32_23 : i32 to vector<6x1xi32>
    %57 = arith.muli %50, %56 : vector<6x1xi32>
    %58 = arith.addi %2, %57 : vector<6x1xi32>
    %59 = arith.addi %58, %49 : vector<6x1xi32>
    %c16_i32_24 = arith.constant 16 : i32
    %60 = vector.broadcast %c16_i32_24 : i32 to vector<6x1xi32>
    %61 = arith.muli %51, %60 : vector<6x1xi32>
    %62 = arith.addi %2, %61 : vector<6x1xi32>
    %63 = arith.addi %62, %48 : vector<6x1xi32>
    %c16_i32_25 = arith.constant 16 : i32
    %64 = vector.broadcast %c16_i32_25 : i32 to vector<6x1xi32>
    %65 = arith.muli %51, %64 : vector<6x1xi32>
    %66 = arith.addi %2, %65 : vector<6x1xi32>
    %67 = arith.addi %66, %49 : vector<6x1xi32>
    %cst_26 = arith.constant 1.000000e+00 : f32
    %68 = vector.broadcast %cst_26 : f32 to vector<6x1xf32>
    %69 = arith.subf %68, %46 : vector<6x1xf32>
    %cst_27 = arith.constant 1.000000e+00 : f32
    %70 = vector.broadcast %cst_27 : f32 to vector<6x1xf32>
    %71 = arith.subf %70, %47 : vector<6x1xf32>
    %72 = arith.mulf %69, %71 : vector<6x1xf32>
    %cst_28 = arith.constant 1.000000e+00 : f32
    %73 = vector.broadcast %cst_28 : f32 to vector<6x1xf32>
    %74 = arith.subf %73, %47 : vector<6x1xf32>
    %75 = arith.mulf %46, %74 : vector<6x1xf32>
    %cst_29 = arith.constant 1.000000e+00 : f32
    %76 = vector.broadcast %cst_29 : f32 to vector<6x1xf32>
    %77 = arith.subf %76, %46 : vector<6x1xf32>
    %78 = arith.mulf %77, %47 : vector<6x1xf32>
    %79 = arith.mulf %46, %47 : vector<6x1xf32>
    %80 = vector.broadcast %55 : vector<6x1xi32> to vector<6x512xi32>
    %81 = arith.cmpi eq, %3, %80 : vector<6x512xi32>
    %cst_30 = arith.constant 0.000000e+00 : f32
    %82 = vector.shape_cast %72 : vector<6x1xf32> to vector<6x1xf32>
    %83 = vector.broadcast %82 : vector<6x1xf32> to vector<6x512xf32>
    %84 = vector.broadcast %cst_30 : f32 to vector<6x512xf32>
    %85 = arith.select %81, %83, %84 : vector<6x512xi1>, vector<6x512xf32>
    %86 = vector.broadcast %59 : vector<6x1xi32> to vector<6x512xi32>
    %87 = arith.cmpi eq, %3, %86 : vector<6x512xi32>
    %cst_31 = arith.constant 0.000000e+00 : f32
    %88 = vector.shape_cast %75 : vector<6x1xf32> to vector<6x1xf32>
    %89 = vector.broadcast %88 : vector<6x1xf32> to vector<6x512xf32>
    %90 = vector.broadcast %cst_31 : f32 to vector<6x512xf32>
    %91 = arith.select %87, %89, %90 : vector<6x512xi1>, vector<6x512xf32>
    %92 = arith.addf %85, %91 : vector<6x512xf32>
    %93 = vector.broadcast %63 : vector<6x1xi32> to vector<6x512xi32>
    %94 = arith.cmpi eq, %3, %93 : vector<6x512xi32>
    %cst_32 = arith.constant 0.000000e+00 : f32
    %95 = vector.shape_cast %78 : vector<6x1xf32> to vector<6x1xf32>
    %96 = vector.broadcast %95 : vector<6x1xf32> to vector<6x512xf32>
    %97 = vector.broadcast %cst_32 : f32 to vector<6x512xf32>
    %98 = arith.select %94, %96, %97 : vector<6x512xi1>, vector<6x512xf32>
    %99 = arith.addf %92, %98 : vector<6x512xf32>
    %100 = vector.broadcast %67 : vector<6x1xi32> to vector<6x512xi32>
    %101 = arith.cmpi eq, %3, %100 : vector<6x512xi32>
    %cst_33 = arith.constant 0.000000e+00 : f32
    %102 = vector.shape_cast %79 : vector<6x1xf32> to vector<6x1xf32>
    %103 = vector.broadcast %102 : vector<6x1xf32> to vector<6x512xf32>
    %104 = vector.broadcast %cst_33 : f32 to vector<6x512xf32>
    %105 = arith.select %101, %103, %104 : vector<6x512xi1>, vector<6x512xf32>
    %106 = arith.addf %99, %105 : vector<6x512xf32>
    %cst_34 = arith.constant dense<0.000000e+00> : vector<6x4xf32>
    %107 = tpu.matmul %106, %1, %cst_34 {dimension_numbers = #tpu.dot_dimension_numbers<[1], [0], [0], [1], [0, 0, 1, 1], [], []>} : vector<6x512xf32>, vector<512x4xf32>, vector<6x4xf32> -> vector<6x4xf32>
    %c0_35 = arith.constant 0 : index
    %c0_36 = arith.constant 0 : index
    %c0_37 = arith.constant 0 : index
    %108 = vector.load %arg8[%c0_35, %c0_36, %c0_37] : memref<3x32x32xf32, #tpu.memory_space<vmem>>, vector<1x32x32xf32>
    %109 = vector.shape_cast %108 : vector<1x32x32xf32> to vector<32x32xf32>
    %cst_38 = arith.constant dense<0.000000e+00> : vector<6x32xf32>
    %110 = tpu.matmul %4, %109, %cst_38 {dimension_numbers = #tpu.dot_dimension_numbers<[1], [0], [0], [1], [0, 0, 1, 1], [], []>} : vector<6x32xf32>, vector<32x32xf32>, vector<6x32xf32> -> vector<6x32xf32>
    %c0_39 = arith.constant 0 : index
    %c0_40 = arith.constant 0 : index
    %c0_41 = arith.constant 0 : index
    %111 = vector.load %arg9[%c0_39, %c0_40, %c0_41] : memref<3x4x32xf32, #tpu.memory_space<vmem>>, vector<1x4x32xf32>
    %112 = vector.shape_cast %111 : vector<1x4x32xf32> to vector<4x32xf32>
    %cst_42 = arith.constant dense<0.000000e+00> : vector<6x32xf32>
    %113 = tpu.matmul %107, %112, %cst_42 {dimension_numbers = #tpu.dot_dimension_numbers<[1], [0], [0], [1], [0, 0, 1, 1], [], []>} : vector<6x4xf32>, vector<4x32xf32>, vector<6x32xf32> -> vector<6x32xf32>
    %114 = arith.addf %110, %113 : vector<6x32xf32>
    %c0_43 = arith.constant 0 : index
    %c0_44 = arith.constant 0 : index
    %c0_45 = arith.constant 0 : index
    %115 = vector.load %arg10[%c0_43, %c0_44, %c0_45] : memref<3x2x32xf32, #tpu.memory_space<vmem>>, vector<1x2x32xf32>
    %116 = vector.shape_cast %115 : vector<1x2x32xf32> to vector<2x32xf32>
    %cst_46 = arith.constant dense<0.000000e+00> : vector<6x32xf32>
    %117 = tpu.matmul %5, %116, %cst_46 {dimension_numbers = #tpu.dot_dimension_numbers<[1], [0], [0], [1], [0, 0, 1, 1], [], []>} : vector<6x2xf32>, vector<2x32xf32>, vector<6x32xf32> -> vector<6x32xf32>
    %118 = arith.addf %114, %117 : vector<6x32xf32>
    %c0_47 = arith.constant 0 : index
    %c0_48 = arith.constant 0 : index
    %c0_49 = arith.constant 0 : index
    %119 = vector.load %arg11[%c0_47, %c0_48, %c0_49] : memref<3x32x32xf32, #tpu.memory_space<vmem>>, vector<1x32x32xf32>
    %120 = vector.shape_cast %119 : vector<1x32x32xf32> to vector<32x32xf32>
    %cst_50 = arith.constant dense<0.000000e+00> : vector<6x32xf32>
    %121 = tpu.matmul %4, %120, %cst_50 {dimension_numbers = #tpu.dot_dimension_numbers<[1], [0], [0], [1], [0, 0, 1, 1], [], []>} : vector<6x32xf32>, vector<32x32xf32>, vector<6x32xf32> -> vector<6x32xf32>
    %c0_51 = arith.constant 0 : index
    %c0_52 = arith.constant 0 : index
    %c0_53 = arith.constant 0 : index
    %122 = vector.load %arg12[%c0_51, %c0_52, %c0_53] : memref<3x4x32xf32, #tpu.memory_space<vmem>>, vector<1x4x32xf32>
    %123 = vector.shape_cast %122 : vector<1x4x32xf32> to vector<4x32xf32>
    %cst_54 = arith.constant dense<0.000000e+00> : vector<6x32xf32>
    %124 = tpu.matmul %107, %123, %cst_54 {dimension_numbers = #tpu.dot_dimension_numbers<[1], [0], [0], [1], [0, 0, 1, 1], [], []>} : vector<6x4xf32>, vector<4x32xf32>, vector<6x32xf32> -> vector<6x32xf32>
    %125 = arith.addf %121, %124 : vector<6x32xf32>
    %c0_55 = arith.constant 0 : index
    %c0_56 = arith.constant 0 : index
    %c0_57 = arith.constant 0 : index
    %126 = vector.load %arg13[%c0_55, %c0_56, %c0_57] : memref<3x2x32xf32, #tpu.memory_space<vmem>>, vector<1x2x32xf32>
    %127 = vector.shape_cast %126 : vector<1x2x32xf32> to vector<2x32xf32>
    %cst_58 = arith.constant dense<0.000000e+00> : vector<6x32xf32>
    %128 = tpu.matmul %5, %127, %cst_58 {dimension_numbers = #tpu.dot_dimension_numbers<[1], [0], [0], [1], [0, 0, 1, 1], [], []>} : vector<6x2xf32>, vector<2x32xf32>, vector<6x32xf32> -> vector<6x32xf32>
    %129 = arith.addf %125, %128 : vector<6x32xf32>
    %cst_59 = arith.constant dense<0.000000e+00> : vector<6x32xf32>
    %130 = tpu.matmul %0, %129, %cst_59 {dimension_numbers = #tpu.dot_dimension_numbers<[1], [0], [0], [1], [0, 0, 1, 1], [], []>} : vector<6x6xf32>, vector<6x32xf32>, vector<6x32xf32> -> vector<6x32xf32>
    %131 = arith.addf %118, %130 : vector<6x32xf32>
    %c0_60 = arith.constant 0 : index
    %c0_61 = arith.constant 0 : index
    %c0_62 = arith.constant 0 : index
    %132 = vector.load %arg14[%c0_60, %c0_61, %c0_62] : memref<3x1x32xf32, #tpu.memory_space<vmem>>, vector<1x1x32xf32>
    %133 = vector.shape_cast %132 : vector<1x1x32xf32> to vector<1x32xf32>
    %134 = vector.broadcast %133 : vector<1x32xf32> to vector<6x32xf32>
    %135 = arith.addf %131, %134 : vector<6x32xf32>
    %cst_63 = arith.constant 0.000000e+00 : f32
    %136 = vector.broadcast %cst_63 : f32 to vector<6x32xf32>
    %137 = arith.maximumf %135, %136 : vector<6x32xf32>
    %c0_64 = arith.constant 0 : index
    %c0_65 = arith.constant 0 : index
    %c0_66 = arith.constant 0 : index
    %138 = vector.load %arg15[%c0_64, %c0_65, %c0_66] : memref<3x32x32xf32, #tpu.memory_space<vmem>>, vector<1x32x32xf32>
    %139 = vector.shape_cast %138 : vector<1x32x32xf32> to vector<32x32xf32>
    %cst_67 = arith.constant dense<0.000000e+00> : vector<6x32xf32>
    %140 = tpu.matmul %137, %139, %cst_67 {dimension_numbers = #tpu.dot_dimension_numbers<[1], [0], [0], [1], [0, 0, 1, 1], [], []>} : vector<6x32xf32>, vector<32x32xf32>, vector<6x32xf32> -> vector<6x32xf32>
    %c0_68 = arith.constant 0 : index
    %c0_69 = arith.constant 0 : index
    %c0_70 = arith.constant 0 : index
    %141 = vector.load %arg16[%c0_68, %c0_69, %c0_70] : memref<3x32x32xf32, #tpu.memory_space<vmem>>, vector<1x32x32xf32>
    %142 = vector.shape_cast %141 : vector<1x32x32xf32> to vector<32x32xf32>
    %cst_71 = arith.constant dense<0.000000e+00> : vector<6x32xf32>
    %143 = tpu.matmul %137, %142, %cst_71 {dimension_numbers = #tpu.dot_dimension_numbers<[1], [0], [0], [1], [0, 0, 1, 1], [], []>} : vector<6x32xf32>, vector<32x32xf32>, vector<6x32xf32> -> vector<6x32xf32>
    %cst_72 = arith.constant dense<0.000000e+00> : vector<6x32xf32>
    %144 = tpu.matmul %0, %143, %cst_72 {dimension_numbers = #tpu.dot_dimension_numbers<[1], [0], [0], [1], [0, 0, 1, 1], [], []>} : vector<6x6xf32>, vector<6x32xf32>, vector<6x32xf32> -> vector<6x32xf32>
    %145 = arith.addf %140, %144 : vector<6x32xf32>
    %c0_73 = arith.constant 0 : index
    %c0_74 = arith.constant 0 : index
    %c0_75 = arith.constant 0 : index
    %146 = vector.load %arg17[%c0_73, %c0_74, %c0_75] : memref<3x1x32xf32, #tpu.memory_space<vmem>>, vector<1x1x32xf32>
    %147 = vector.shape_cast %146 : vector<1x1x32xf32> to vector<1x32xf32>
    %148 = vector.broadcast %147 : vector<1x32xf32> to vector<6x32xf32>
    %149 = arith.addf %145, %148 : vector<6x32xf32>
    %cst_76 = arith.constant 0.000000e+00 : f32
    %150 = vector.broadcast %cst_76 : f32 to vector<6x32xf32>
    %151 = arith.maximumf %149, %150 : vector<6x32xf32>
    %c0_77 = arith.constant 0 : index
    %c0_78 = arith.constant 0 : index
    %c0_79 = arith.constant 0 : index
    %152 = vector.load %arg18[%c0_77, %c0_78, %c0_79] : memref<3x32x2xf32, #tpu.memory_space<vmem>>, vector<1x32x2xf32>
    %153 = vector.shape_cast %152 : vector<1x32x2xf32> to vector<32x2xf32>
    %cst_80 = arith.constant dense<0.000000e+00> : vector<6x2xf32>
    %154 = tpu.matmul %151, %153, %cst_80 {dimension_numbers = #tpu.dot_dimension_numbers<[1], [0], [0], [1], [0, 0, 1, 1], [], []>} : vector<6x32xf32>, vector<32x2xf32>, vector<6x2xf32> -> vector<6x2xf32>
    %c0_81 = arith.constant 0 : index
    %c0_82 = arith.constant 0 : index
    %c0_83 = arith.constant 0 : index
    %155 = vector.load %arg19[%c0_81, %c0_82, %c0_83] : memref<3x1x2xf32, #tpu.memory_space<vmem>>, vector<1x1x2xf32>
    %156 = vector.shape_cast %155 : vector<1x1x2xf32> to vector<1x2xf32>
    %157 = vector.broadcast %156 : vector<1x2xf32> to vector<6x2xf32>
    %158 = arith.addf %154, %157 : vector<6x2xf32>
    %159 = math.tanh %158 : vector<6x2xf32>
    %160 = vector.extract_strided_slice %159 {offsets = [0, 0], sizes = [6, 1], strides = [1, 1]} : vector<6x2xf32> to vector<6x1xf32>
    %cst_84 = arith.constant 1.000000e+00 : f32
    %161 = vector.broadcast %cst_84 : f32 to vector<6x1xf32>
    %162 = arith.addf %160, %161 : vector<6x1xf32>
    %cst_85 = arith.constant 5.000000e-01 : f32
    %163 = vector.broadcast %cst_85 : f32 to vector<6x1xf32>
    %164 = arith.mulf %162, %163 : vector<6x1xf32>
    %cst_86 = arith.constant 1.500000e+01 : f32
    %165 = vector.broadcast %cst_86 : f32 to vector<6x1xf32>
    %166 = arith.mulf %164, %165 : vector<6x1xf32>
    %167 = vector.extract_strided_slice %159 {offsets = [0, 1], sizes = [6, 1], strides = [1, 1]} : vector<6x2xf32> to vector<6x1xf32>
    %cst_87 = arith.constant 1.000000e+00 : f32
    %168 = vector.broadcast %cst_87 : f32 to vector<6x1xf32>
    %169 = arith.addf %167, %168 : vector<6x1xf32>
    %cst_88 = arith.constant 5.000000e-01 : f32
    %170 = vector.broadcast %cst_88 : f32 to vector<6x1xf32>
    %171 = arith.mulf %169, %170 : vector<6x1xf32>
    %cst_89 = arith.constant 1.500000e+01 : f32
    %172 = vector.broadcast %cst_89 : f32 to vector<6x1xf32>
    %173 = arith.mulf %171, %172 : vector<6x1xf32>
    %174 = math.floor %166 : vector<6x1xf32>
    %cst_90 = arith.constant 0.000000e+00 : f32
    %c15_i32_91 = arith.constant 15 : i32
    %175 = vector.broadcast %cst_90 : f32 to vector<6x1xf32>
    %176 = arith.maximumf %175, %174 : vector<6x1xf32>
    %177 = arith.sitofp %c15_i32_91 : i32 to f32
    %178 = vector.broadcast %177 : f32 to vector<6x1xf32>
    %179 = arith.minimumf %178, %176 : vector<6x1xf32>
    %180 = math.floor %173 : vector<6x1xf32>
    %cst_92 = arith.constant 0.000000e+00 : f32
    %c15_i32_93 = arith.constant 15 : i32
    %181 = vector.broadcast %cst_92 : f32 to vector<6x1xf32>
    %182 = arith.maximumf %181, %180 : vector<6x1xf32>
    %183 = arith.sitofp %c15_i32_93 : i32 to f32
    %184 = vector.broadcast %183 : f32 to vector<6x1xf32>
    %185 = arith.minimumf %184, %182 : vector<6x1xf32>
    %cst_94 = arith.constant 1.000000e+00 : f32
    %186 = vector.broadcast %cst_94 : f32 to vector<6x1xf32>
    %187 = arith.addf %179, %186 : vector<6x1xf32>
    %cst_95 = arith.constant 0.000000e+00 : f32
    %c15_i32_96 = arith.constant 15 : i32
    %188 = vector.broadcast %cst_95 : f32 to vector<6x1xf32>
    %189 = arith.maximumf %188, %187 : vector<6x1xf32>
    %190 = arith.sitofp %c15_i32_96 : i32 to f32
    %191 = vector.broadcast %190 : f32 to vector<6x1xf32>
    %192 = arith.minimumf %191, %189 : vector<6x1xf32>
    %cst_97 = arith.constant 1.000000e+00 : f32
    %193 = vector.broadcast %cst_97 : f32 to vector<6x1xf32>
    %194 = arith.addf %185, %193 : vector<6x1xf32>
    %cst_98 = arith.constant 0.000000e+00 : f32
    %c15_i32_99 = arith.constant 15 : i32
    %195 = vector.broadcast %cst_98 : f32 to vector<6x1xf32>
    %196 = arith.maximumf %195, %194 : vector<6x1xf32>
    %197 = arith.sitofp %c15_i32_99 : i32 to f32
    %198 = vector.broadcast %197 : f32 to vector<6x1xf32>
    %199 = arith.minimumf %198, %196 : vector<6x1xf32>
    %200 = arith.subf %166, %179 : vector<6x1xf32>
    %201 = arith.subf %173, %185 : vector<6x1xf32>
    %202 = arith.fptosi %179 : vector<6x1xf32> to vector<6x1xi32>
    %203 = arith.fptosi %192 : vector<6x1xf32> to vector<6x1xi32>
    %204 = arith.fptosi %185 : vector<6x1xf32> to vector<6x1xi32>
    %205 = arith.fptosi %199 : vector<6x1xf32> to vector<6x1xi32>
    %c16_i32_100 = arith.constant 16 : i32
    %206 = vector.broadcast %c16_i32_100 : i32 to vector<6x1xi32>
    %207 = arith.muli %204, %206 : vector<6x1xi32>
    %208 = arith.addi %2, %207 : vector<6x1xi32>
    %209 = arith.addi %208, %202 : vector<6x1xi32>
    %c16_i32_101 = arith.constant 16 : i32
    %210 = vector.broadcast %c16_i32_101 : i32 to vector<6x1xi32>
    %211 = arith.muli %204, %210 : vector<6x1xi32>
    %212 = arith.addi %2, %211 : vector<6x1xi32>
    %213 = arith.addi %212, %203 : vector<6x1xi32>
    %c16_i32_102 = arith.constant 16 : i32
    %214 = vector.broadcast %c16_i32_102 : i32 to vector<6x1xi32>
    %215 = arith.muli %205, %214 : vector<6x1xi32>
    %216 = arith.addi %2, %215 : vector<6x1xi32>
    %217 = arith.addi %216, %202 : vector<6x1xi32>
    %c16_i32_103 = arith.constant 16 : i32
    %218 = vector.broadcast %c16_i32_103 : i32 to vector<6x1xi32>
    %219 = arith.muli %205, %218 : vector<6x1xi32>
    %220 = arith.addi %2, %219 : vector<6x1xi32>
    %221 = arith.addi %220, %203 : vector<6x1xi32>
    %cst_104 = arith.constant 1.000000e+00 : f32
    %222 = vector.broadcast %cst_104 : f32 to vector<6x1xf32>
    %223 = arith.subf %222, %200 : vector<6x1xf32>
    %cst_105 = arith.constant 1.000000e+00 : f32
    %224 = vector.broadcast %cst_105 : f32 to vector<6x1xf32>
    %225 = arith.subf %224, %201 : vector<6x1xf32>
    %226 = arith.mulf %223, %225 : vector<6x1xf32>
    %cst_106 = arith.constant 1.000000e+00 : f32
    %227 = vector.broadcast %cst_106 : f32 to vector<6x1xf32>
    %228 = arith.subf %227, %201 : vector<6x1xf32>
    %229 = arith.mulf %200, %228 : vector<6x1xf32>
    %cst_107 = arith.constant 1.000000e+00 : f32
    %230 = vector.broadcast %cst_107 : f32 to vector<6x1xf32>
    %231 = arith.subf %230, %200 : vector<6x1xf32>
    %232 = arith.mulf %231, %201 : vector<6x1xf32>
    %233 = arith.mulf %200, %201 : vector<6x1xf32>
    %234 = vector.broadcast %209 : vector<6x1xi32> to vector<6x512xi32>
    %235 = arith.cmpi eq, %3, %234 : vector<6x512xi32>
    %cst_108 = arith.constant 0.000000e+00 : f32
    %236 = vector.shape_cast %226 : vector<6x1xf32> to vector<6x1xf32>
    %237 = vector.broadcast %236 : vector<6x1xf32> to vector<6x512xf32>
    %238 = vector.broadcast %cst_108 : f32 to vector<6x512xf32>
    %239 = arith.select %235, %237, %238 : vector<6x512xi1>, vector<6x512xf32>
    %240 = vector.broadcast %213 : vector<6x1xi32> to vector<6x512xi32>
    %241 = arith.cmpi eq, %3, %240 : vector<6x512xi32>
    %cst_109 = arith.constant 0.000000e+00 : f32
    %242 = vector.shape_cast %229 : vector<6x1xf32> to vector<6x1xf32>
    %243 = vector.broadcast %242 : vector<6x1xf32> to vector<6x512xf32>
    %244 = vector.broadcast %cst_109 : f32 to vector<6x512xf32>
    %245 = arith.select %241, %243, %244 : vector<6x512xi1>, vector<6x512xf32>
    %246 = arith.addf %239, %245 : vector<6x512xf32>
    %247 = vector.broadcast %217 : vector<6x1xi32> to vector<6x512xi32>
    %248 = arith.cmpi eq, %3, %247 : vector<6x512xi32>
    %cst_110 = arith.constant 0.000000e+00 : f32
    %249 = vector.shape_cast %232 : vector<6x1xf32> to vector<6x1xf32>
    %250 = vector.broadcast %249 : vector<6x1xf32> to vector<6x512xf32>
    %251 = vector.broadcast %cst_110 : f32 to vector<6x512xf32>
    %252 = arith.select %248, %250, %251 : vector<6x512xi1>, vector<6x512xf32>
    %253 = arith.addf %246, %252 : vector<6x512xf32>
    %254 = vector.broadcast %221 : vector<6x1xi32> to vector<6x512xi32>
    %255 = arith.cmpi eq, %3, %254 : vector<6x512xi32>
    %cst_111 = arith.constant 0.000000e+00 : f32
    %256 = vector.shape_cast %233 : vector<6x1xf32> to vector<6x1xf32>
    %257 = vector.broadcast %256 : vector<6x1xf32> to vector<6x512xf32>
    %258 = vector.broadcast %cst_111 : f32 to vector<6x512xf32>
    %259 = arith.select %255, %257, %258 : vector<6x512xi1>, vector<6x512xf32>
    %260 = arith.addf %253, %259 : vector<6x512xf32>
    %cst_112 = arith.constant dense<0.000000e+00> : vector<6x4xf32>
    %261 = tpu.matmul %260, %1, %cst_112 {dimension_numbers = #tpu.dot_dimension_numbers<[1], [0], [0], [1], [0, 0, 1, 1], [], []>} : vector<6x512xf32>, vector<512x4xf32>, vector<6x4xf32> -> vector<6x4xf32>
    %c1 = arith.constant 1 : index
    %c0_113 = arith.constant 0 : index
    %c0_114 = arith.constant 0 : index
    %262 = vector.load %arg8[%c1, %c0_113, %c0_114] : memref<3x32x32xf32, #tpu.memory_space<vmem>>, vector<1x32x32xf32>
    %263 = vector.shape_cast %262 : vector<1x32x32xf32> to vector<32x32xf32>
    %cst_115 = arith.constant dense<0.000000e+00> : vector<6x32xf32>
    %264 = tpu.matmul %151, %263, %cst_115 {dimension_numbers = #tpu.dot_dimension_numbers<[1], [0], [0], [1], [0, 0, 1, 1], [], []>} : vector<6x32xf32>, vector<32x32xf32>, vector<6x32xf32> -> vector<6x32xf32>
    %c1_116 = arith.constant 1 : index
    %c0_117 = arith.constant 0 : index
    %c0_118 = arith.constant 0 : index
    %265 = vector.load %arg9[%c1_116, %c0_117, %c0_118] : memref<3x4x32xf32, #tpu.memory_space<vmem>>, vector<1x4x32xf32>
    %266 = vector.shape_cast %265 : vector<1x4x32xf32> to vector<4x32xf32>
    %cst_119 = arith.constant dense<0.000000e+00> : vector<6x32xf32>
    %267 = tpu.matmul %261, %266, %cst_119 {dimension_numbers = #tpu.dot_dimension_numbers<[1], [0], [0], [1], [0, 0, 1, 1], [], []>} : vector<6x4xf32>, vector<4x32xf32>, vector<6x32xf32> -> vector<6x32xf32>
    %268 = arith.addf %264, %267 : vector<6x32xf32>
    %c1_120 = arith.constant 1 : index
    %c0_121 = arith.constant 0 : index
    %c0_122 = arith.constant 0 : index
    %269 = vector.load %arg10[%c1_120, %c0_121, %c0_122] : memref<3x2x32xf32, #tpu.memory_space<vmem>>, vector<1x2x32xf32>
    %270 = vector.shape_cast %269 : vector<1x2x32xf32> to vector<2x32xf32>
    %cst_123 = arith.constant dense<0.000000e+00> : vector<6x32xf32>
    %271 = tpu.matmul %159, %270, %cst_123 {dimension_numbers = #tpu.dot_dimension_numbers<[1], [0], [0], [1], [0, 0, 1, 1], [], []>} : vector<6x2xf32>, vector<2x32xf32>, vector<6x32xf32> -> vector<6x32xf32>
    %272 = arith.addf %268, %271 : vector<6x32xf32>
    %c1_124 = arith.constant 1 : index
    %c0_125 = arith.constant 0 : index
    %c0_126 = arith.constant 0 : index
    %273 = vector.load %arg11[%c1_124, %c0_125, %c0_126] : memref<3x32x32xf32, #tpu.memory_space<vmem>>, vector<1x32x32xf32>
    %274 = vector.shape_cast %273 : vector<1x32x32xf32> to vector<32x32xf32>
    %cst_127 = arith.constant dense<0.000000e+00> : vector<6x32xf32>
    %275 = tpu.matmul %151, %274, %cst_127 {dimension_numbers = #tpu.dot_dimension_numbers<[1], [0], [0], [1], [0, 0, 1, 1], [], []>} : vector<6x32xf32>, vector<32x32xf32>, vector<6x32xf32> -> vector<6x32xf32>
    %c1_128 = arith.constant 1 : index
    %c0_129 = arith.constant 0 : index
    %c0_130 = arith.constant 0 : index
    %276 = vector.load %arg12[%c1_128, %c0_129, %c0_130] : memref<3x4x32xf32, #tpu.memory_space<vmem>>, vector<1x4x32xf32>
    %277 = vector.shape_cast %276 : vector<1x4x32xf32> to vector<4x32xf32>
    %cst_131 = arith.constant dense<0.000000e+00> : vector<6x32xf32>
    %278 = tpu.matmul %261, %277, %cst_131 {dimension_numbers = #tpu.dot_dimension_numbers<[1], [0], [0], [1], [0, 0, 1, 1], [], []>} : vector<6x4xf32>, vector<4x32xf32>, vector<6x32xf32> -> vector<6x32xf32>
    %279 = arith.addf %275, %278 : vector<6x32xf32>
    %c1_132 = arith.constant 1 : index
    %c0_133 = arith.constant 0 : index
    %c0_134 = arith.constant 0 : index
    %280 = vector.load %arg13[%c1_132, %c0_133, %c0_134] : memref<3x2x32xf32, #tpu.memory_space<vmem>>, vector<1x2x32xf32>
    %281 = vector.shape_cast %280 : vector<1x2x32xf32> to vector<2x32xf32>
    %cst_135 = arith.constant dense<0.000000e+00> : vector<6x32xf32>
    %282 = tpu.matmul %159, %281, %cst_135 {dimension_numbers = #tpu.dot_dimension_numbers<[1], [0], [0], [1], [0, 0, 1, 1], [], []>} : vector<6x2xf32>, vector<2x32xf32>, vector<6x32xf32> -> vector<6x32xf32>
    %283 = arith.addf %279, %282 : vector<6x32xf32>
    %cst_136 = arith.constant dense<0.000000e+00> : vector<6x32xf32>
    %284 = tpu.matmul %0, %283, %cst_136 {dimension_numbers = #tpu.dot_dimension_numbers<[1], [0], [0], [1], [0, 0, 1, 1], [], []>} : vector<6x6xf32>, vector<6x32xf32>, vector<6x32xf32> -> vector<6x32xf32>
    %285 = arith.addf %272, %284 : vector<6x32xf32>
    %c1_137 = arith.constant 1 : index
    %c0_138 = arith.constant 0 : index
    %c0_139 = arith.constant 0 : index
    %286 = vector.load %arg14[%c1_137, %c0_138, %c0_139] : memref<3x1x32xf32, #tpu.memory_space<vmem>>, vector<1x1x32xf32>
    %287 = vector.shape_cast %286 : vector<1x1x32xf32> to vector<1x32xf32>
    %288 = vector.broadcast %287 : vector<1x32xf32> to vector<6x32xf32>
    %289 = arith.addf %285, %288 : vector<6x32xf32>
    %cst_140 = arith.constant 0.000000e+00 : f32
    %290 = vector.broadcast %cst_140 : f32 to vector<6x32xf32>
    %291 = arith.maximumf %289, %290 : vector<6x32xf32>
    %c1_141 = arith.constant 1 : index
    %c0_142 = arith.constant 0 : index
    %c0_143 = arith.constant 0 : index
    %292 = vector.load %arg15[%c1_141, %c0_142, %c0_143] : memref<3x32x32xf32, #tpu.memory_space<vmem>>, vector<1x32x32xf32>
    %293 = vector.shape_cast %292 : vector<1x32x32xf32> to vector<32x32xf32>
    %cst_144 = arith.constant dense<0.000000e+00> : vector<6x32xf32>
    %294 = tpu.matmul %291, %293, %cst_144 {dimension_numbers = #tpu.dot_dimension_numbers<[1], [0], [0], [1], [0, 0, 1, 1], [], []>} : vector<6x32xf32>, vector<32x32xf32>, vector<6x32xf32> -> vector<6x32xf32>
    %c1_145 = arith.constant 1 : index
    %c0_146 = arith.constant 0 : index
    %c0_147 = arith.constant 0 : index
    %295 = vector.load %arg16[%c1_145, %c0_146, %c0_147] : memref<3x32x32xf32, #tpu.memory_space<vmem>>, vector<1x32x32xf32>
    %296 = vector.shape_cast %295 : vector<1x32x32xf32> to vector<32x32xf32>
    %cst_148 = arith.constant dense<0.000000e+00> : vector<6x32xf32>
    %297 = tpu.matmul %291, %296, %cst_148 {dimension_numbers = #tpu.dot_dimension_numbers<[1], [0], [0], [1], [0, 0, 1, 1], [], []>} : vector<6x32xf32>, vector<32x32xf32>, vector<6x32xf32> -> vector<6x32xf32>
    %cst_149 = arith.constant dense<0.000000e+00> : vector<6x32xf32>
    %298 = tpu.matmul %0, %297, %cst_149 {dimension_numbers = #tpu.dot_dimension_numbers<[1], [0], [0], [1], [0, 0, 1, 1], [], []>} : vector<6x6xf32>, vector<6x32xf32>, vector<6x32xf32> -> vector<6x32xf32>
    %299 = arith.addf %294, %298 : vector<6x32xf32>
    %c1_150 = arith.constant 1 : index
    %c0_151 = arith.constant 0 : index
    %c0_152 = arith.constant 0 : index
    %300 = vector.load %arg17[%c1_150, %c0_151, %c0_152] : memref<3x1x32xf32, #tpu.memory_space<vmem>>, vector<1x1x32xf32>
    %301 = vector.shape_cast %300 : vector<1x1x32xf32> to vector<1x32xf32>
    %302 = vector.broadcast %301 : vector<1x32xf32> to vector<6x32xf32>
    %303 = arith.addf %299, %302 : vector<6x32xf32>
    %cst_153 = arith.constant 0.000000e+00 : f32
    %304 = vector.broadcast %cst_153 : f32 to vector<6x32xf32>
    %305 = arith.maximumf %303, %304 : vector<6x32xf32>
    %c1_154 = arith.constant 1 : index
    %c0_155 = arith.constant 0 : index
    %c0_156 = arith.constant 0 : index
    %306 = vector.load %arg18[%c1_154, %c0_155, %c0_156] : memref<3x32x2xf32, #tpu.memory_space<vmem>>, vector<1x32x2xf32>
    %307 = vector.shape_cast %306 : vector<1x32x2xf32> to vector<32x2xf32>
    %cst_157 = arith.constant dense<0.000000e+00> : vector<6x2xf32>
    %308 = tpu.matmul %305, %307, %cst_157 {dimension_numbers = #tpu.dot_dimension_numbers<[1], [0], [0], [1], [0, 0, 1, 1], [], []>} : vector<6x32xf32>, vector<32x2xf32>, vector<6x2xf32> -> vector<6x2xf32>
    %c1_158 = arith.constant 1 : index
    %c0_159 = arith.constant 0 : index
    %c0_160 = arith.constant 0 : index
    %309 = vector.load %arg19[%c1_158, %c0_159, %c0_160] : memref<3x1x2xf32, #tpu.memory_space<vmem>>, vector<1x1x2xf32>
    %310 = vector.shape_cast %309 : vector<1x1x2xf32> to vector<1x2xf32>
    %311 = vector.broadcast %310 : vector<1x2xf32> to vector<6x2xf32>
    %312 = arith.addf %308, %311 : vector<6x2xf32>
    %313 = math.tanh %312 : vector<6x2xf32>
    %314 = vector.extract_strided_slice %313 {offsets = [0, 0], sizes = [6, 1], strides = [1, 1]} : vector<6x2xf32> to vector<6x1xf32>
    %cst_161 = arith.constant 1.000000e+00 : f32
    %315 = vector.broadcast %cst_161 : f32 to vector<6x1xf32>
    %316 = arith.addf %314, %315 : vector<6x1xf32>
    %cst_162 = arith.constant 5.000000e-01 : f32
    %317 = vector.broadcast %cst_162 : f32 to vector<6x1xf32>
    %318 = arith.mulf %316, %317 : vector<6x1xf32>
    %cst_163 = arith.constant 1.500000e+01 : f32
    %319 = vector.broadcast %cst_163 : f32 to vector<6x1xf32>
    %320 = arith.mulf %318, %319 : vector<6x1xf32>
    %321 = vector.extract_strided_slice %313 {offsets = [0, 1], sizes = [6, 1], strides = [1, 1]} : vector<6x2xf32> to vector<6x1xf32>
    %cst_164 = arith.constant 1.000000e+00 : f32
    %322 = vector.broadcast %cst_164 : f32 to vector<6x1xf32>
    %323 = arith.addf %321, %322 : vector<6x1xf32>
    %cst_165 = arith.constant 5.000000e-01 : f32
    %324 = vector.broadcast %cst_165 : f32 to vector<6x1xf32>
    %325 = arith.mulf %323, %324 : vector<6x1xf32>
    %cst_166 = arith.constant 1.500000e+01 : f32
    %326 = vector.broadcast %cst_166 : f32 to vector<6x1xf32>
    %327 = arith.mulf %325, %326 : vector<6x1xf32>
    %328 = math.floor %320 : vector<6x1xf32>
    %cst_167 = arith.constant 0.000000e+00 : f32
    %c15_i32_168 = arith.constant 15 : i32
    %329 = vector.broadcast %cst_167 : f32 to vector<6x1xf32>
    %330 = arith.maximumf %329, %328 : vector<6x1xf32>
    %331 = arith.sitofp %c15_i32_168 : i32 to f32
    %332 = vector.broadcast %331 : f32 to vector<6x1xf32>
    %333 = arith.minimumf %332, %330 : vector<6x1xf32>
    %334 = math.floor %327 : vector<6x1xf32>
    %cst_169 = arith.constant 0.000000e+00 : f32
    %c15_i32_170 = arith.constant 15 : i32
    %335 = vector.broadcast %cst_169 : f32 to vector<6x1xf32>
    %336 = arith.maximumf %335, %334 : vector<6x1xf32>
    %337 = arith.sitofp %c15_i32_170 : i32 to f32
    %338 = vector.broadcast %337 : f32 to vector<6x1xf32>
    %339 = arith.minimumf %338, %336 : vector<6x1xf32>
    %cst_171 = arith.constant 1.000000e+00 : f32
    %340 = vector.broadcast %cst_171 : f32 to vector<6x1xf32>
    %341 = arith.addf %333, %340 : vector<6x1xf32>
    %cst_172 = arith.constant 0.000000e+00 : f32
    %c15_i32_173 = arith.constant 15 : i32
    %342 = vector.broadcast %cst_172 : f32 to vector<6x1xf32>
    %343 = arith.maximumf %342, %341 : vector<6x1xf32>
    %344 = arith.sitofp %c15_i32_173 : i32 to f32
    %345 = vector.broadcast %344 : f32 to vector<6x1xf32>
    %346 = arith.minimumf %345, %343 : vector<6x1xf32>
    %cst_174 = arith.constant 1.000000e+00 : f32
    %347 = vector.broadcast %cst_174 : f32 to vector<6x1xf32>
    %348 = arith.addf %339, %347 : vector<6x1xf32>
    %cst_175 = arith.constant 0.000000e+00 : f32
    %c15_i32_176 = arith.constant 15 : i32
    %349 = vector.broadcast %cst_175 : f32 to vector<6x1xf32>
    %350 = arith.maximumf %349, %348 : vector<6x1xf32>
    %351 = arith.sitofp %c15_i32_176 : i32 to f32
    %352 = vector.broadcast %351 : f32 to vector<6x1xf32>
    %353 = arith.minimumf %352, %350 : vector<6x1xf32>
    %354 = arith.subf %320, %333 : vector<6x1xf32>
    %355 = arith.subf %327, %339 : vector<6x1xf32>
    %356 = arith.fptosi %333 : vector<6x1xf32> to vector<6x1xi32>
    %357 = arith.fptosi %346 : vector<6x1xf32> to vector<6x1xi32>
    %358 = arith.fptosi %339 : vector<6x1xf32> to vector<6x1xi32>
    %359 = arith.fptosi %353 : vector<6x1xf32> to vector<6x1xi32>
    %c16_i32_177 = arith.constant 16 : i32
    %360 = vector.broadcast %c16_i32_177 : i32 to vector<6x1xi32>
    %361 = arith.muli %358, %360 : vector<6x1xi32>
    %362 = arith.addi %2, %361 : vector<6x1xi32>
    %363 = arith.addi %362, %356 : vector<6x1xi32>
    %c16_i32_178 = arith.constant 16 : i32
    %364 = vector.broadcast %c16_i32_178 : i32 to vector<6x1xi32>
    %365 = arith.muli %358, %364 : vector<6x1xi32>
    %366 = arith.addi %2, %365 : vector<6x1xi32>
    %367 = arith.addi %366, %357 : vector<6x1xi32>
    %c16_i32_179 = arith.constant 16 : i32
    %368 = vector.broadcast %c16_i32_179 : i32 to vector<6x1xi32>
    %369 = arith.muli %359, %368 : vector<6x1xi32>
    %370 = arith.addi %2, %369 : vector<6x1xi32>
    %371 = arith.addi %370, %356 : vector<6x1xi32>
    %c16_i32_180 = arith.constant 16 : i32
    %372 = vector.broadcast %c16_i32_180 : i32 to vector<6x1xi32>
    %373 = arith.muli %359, %372 : vector<6x1xi32>
    %374 = arith.addi %2, %373 : vector<6x1xi32>
    %375 = arith.addi %374, %357 : vector<6x1xi32>
    %cst_181 = arith.constant 1.000000e+00 : f32
    %376 = vector.broadcast %cst_181 : f32 to vector<6x1xf32>
    %377 = arith.subf %376, %354 : vector<6x1xf32>
    %cst_182 = arith.constant 1.000000e+00 : f32
    %378 = vector.broadcast %cst_182 : f32 to vector<6x1xf32>
    %379 = arith.subf %378, %355 : vector<6x1xf32>
    %380 = arith.mulf %377, %379 : vector<6x1xf32>
    %cst_183 = arith.constant 1.000000e+00 : f32
    %381 = vector.broadcast %cst_183 : f32 to vector<6x1xf32>
    %382 = arith.subf %381, %355 : vector<6x1xf32>
    %383 = arith.mulf %354, %382 : vector<6x1xf32>
    %cst_184 = arith.constant 1.000000e+00 : f32
    %384 = vector.broadcast %cst_184 : f32 to vector<6x1xf32>
    %385 = arith.subf %384, %354 : vector<6x1xf32>
    %386 = arith.mulf %385, %355 : vector<6x1xf32>
    %387 = arith.mulf %354, %355 : vector<6x1xf32>
    %388 = vector.broadcast %363 : vector<6x1xi32> to vector<6x512xi32>
    %389 = arith.cmpi eq, %3, %388 : vector<6x512xi32>
    %cst_185 = arith.constant 0.000000e+00 : f32
    %390 = vector.shape_cast %380 : vector<6x1xf32> to vector<6x1xf32>
    %391 = vector.broadcast %390 : vector<6x1xf32> to vector<6x512xf32>
    %392 = vector.broadcast %cst_185 : f32 to vector<6x512xf32>
    %393 = arith.select %389, %391, %392 : vector<6x512xi1>, vector<6x512xf32>
    %394 = vector.broadcast %367 : vector<6x1xi32> to vector<6x512xi32>
    %395 = arith.cmpi eq, %3, %394 : vector<6x512xi32>
    %cst_186 = arith.constant 0.000000e+00 : f32
    %396 = vector.shape_cast %383 : vector<6x1xf32> to vector<6x1xf32>
    %397 = vector.broadcast %396 : vector<6x1xf32> to vector<6x512xf32>
    %398 = vector.broadcast %cst_186 : f32 to vector<6x512xf32>
    %399 = arith.select %395, %397, %398 : vector<6x512xi1>, vector<6x512xf32>
    %400 = arith.addf %393, %399 : vector<6x512xf32>
    %401 = vector.broadcast %371 : vector<6x1xi32> to vector<6x512xi32>
    %402 = arith.cmpi eq, %3, %401 : vector<6x512xi32>
    %cst_187 = arith.constant 0.000000e+00 : f32
    %403 = vector.shape_cast %386 : vector<6x1xf32> to vector<6x1xf32>
    %404 = vector.broadcast %403 : vector<6x1xf32> to vector<6x512xf32>
    %405 = vector.broadcast %cst_187 : f32 to vector<6x512xf32>
    %406 = arith.select %402, %404, %405 : vector<6x512xi1>, vector<6x512xf32>
    %407 = arith.addf %400, %406 : vector<6x512xf32>
    %408 = vector.broadcast %375 : vector<6x1xi32> to vector<6x512xi32>
    %409 = arith.cmpi eq, %3, %408 : vector<6x512xi32>
    %cst_188 = arith.constant 0.000000e+00 : f32
    %410 = vector.shape_cast %387 : vector<6x1xf32> to vector<6x1xf32>
    %411 = vector.broadcast %410 : vector<6x1xf32> to vector<6x512xf32>
    %412 = vector.broadcast %cst_188 : f32 to vector<6x512xf32>
    %413 = arith.select %409, %411, %412 : vector<6x512xi1>, vector<6x512xf32>
    %414 = arith.addf %407, %413 : vector<6x512xf32>
    %cst_189 = arith.constant dense<0.000000e+00> : vector<6x4xf32>
    %415 = tpu.matmul %414, %1, %cst_189 {dimension_numbers = #tpu.dot_dimension_numbers<[1], [0], [0], [1], [0, 0, 1, 1], [], []>} : vector<6x512xf32>, vector<512x4xf32>, vector<6x4xf32> -> vector<6x4xf32>
    %c2 = arith.constant 2 : index
    %c0_190 = arith.constant 0 : index
    %c0_191 = arith.constant 0 : index
    %416 = vector.load %arg8[%c2, %c0_190, %c0_191] : memref<3x32x32xf32, #tpu.memory_space<vmem>>, vector<1x32x32xf32>
    %417 = vector.shape_cast %416 : vector<1x32x32xf32> to vector<32x32xf32>
    %cst_192 = arith.constant dense<0.000000e+00> : vector<6x32xf32>
    %418 = tpu.matmul %305, %417, %cst_192 {dimension_numbers = #tpu.dot_dimension_numbers<[1], [0], [0], [1], [0, 0, 1, 1], [], []>} : vector<6x32xf32>, vector<32x32xf32>, vector<6x32xf32> -> vector<6x32xf32>
    %c2_193 = arith.constant 2 : index
    %c0_194 = arith.constant 0 : index
    %c0_195 = arith.constant 0 : index
    %419 = vector.load %arg9[%c2_193, %c0_194, %c0_195] : memref<3x4x32xf32, #tpu.memory_space<vmem>>, vector<1x4x32xf32>
    %420 = vector.shape_cast %419 : vector<1x4x32xf32> to vector<4x32xf32>
    %cst_196 = arith.constant dense<0.000000e+00> : vector<6x32xf32>
    %421 = tpu.matmul %415, %420, %cst_196 {dimension_numbers = #tpu.dot_dimension_numbers<[1], [0], [0], [1], [0, 0, 1, 1], [], []>} : vector<6x4xf32>, vector<4x32xf32>, vector<6x32xf32> -> vector<6x32xf32>
    %422 = arith.addf %418, %421 : vector<6x32xf32>
    %c2_197 = arith.constant 2 : index
    %c0_198 = arith.constant 0 : index
    %c0_199 = arith.constant 0 : index
    %423 = vector.load %arg10[%c2_197, %c0_198, %c0_199] : memref<3x2x32xf32, #tpu.memory_space<vmem>>, vector<1x2x32xf32>
    %424 = vector.shape_cast %423 : vector<1x2x32xf32> to vector<2x32xf32>
    %cst_200 = arith.constant dense<0.000000e+00> : vector<6x32xf32>
    %425 = tpu.matmul %313, %424, %cst_200 {dimension_numbers = #tpu.dot_dimension_numbers<[1], [0], [0], [1], [0, 0, 1, 1], [], []>} : vector<6x2xf32>, vector<2x32xf32>, vector<6x32xf32> -> vector<6x32xf32>
    %426 = arith.addf %422, %425 : vector<6x32xf32>
    %c2_201 = arith.constant 2 : index
    %c0_202 = arith.constant 0 : index
    %c0_203 = arith.constant 0 : index
    %427 = vector.load %arg11[%c2_201, %c0_202, %c0_203] : memref<3x32x32xf32, #tpu.memory_space<vmem>>, vector<1x32x32xf32>
    %428 = vector.shape_cast %427 : vector<1x32x32xf32> to vector<32x32xf32>
    %cst_204 = arith.constant dense<0.000000e+00> : vector<6x32xf32>
    %429 = tpu.matmul %305, %428, %cst_204 {dimension_numbers = #tpu.dot_dimension_numbers<[1], [0], [0], [1], [0, 0, 1, 1], [], []>} : vector<6x32xf32>, vector<32x32xf32>, vector<6x32xf32> -> vector<6x32xf32>
    %c2_205 = arith.constant 2 : index
    %c0_206 = arith.constant 0 : index
    %c0_207 = arith.constant 0 : index
    %430 = vector.load %arg12[%c2_205, %c0_206, %c0_207] : memref<3x4x32xf32, #tpu.memory_space<vmem>>, vector<1x4x32xf32>
    %431 = vector.shape_cast %430 : vector<1x4x32xf32> to vector<4x32xf32>
    %cst_208 = arith.constant dense<0.000000e+00> : vector<6x32xf32>
    %432 = tpu.matmul %415, %431, %cst_208 {dimension_numbers = #tpu.dot_dimension_numbers<[1], [0], [0], [1], [0, 0, 1, 1], [], []>} : vector<6x4xf32>, vector<4x32xf32>, vector<6x32xf32> -> vector<6x32xf32>
    %433 = arith.addf %429, %432 : vector<6x32xf32>
    %c2_209 = arith.constant 2 : index
    %c0_210 = arith.constant 0 : index
    %c0_211 = arith.constant 0 : index
    %434 = vector.load %arg13[%c2_209, %c0_210, %c0_211] : memref<3x2x32xf32, #tpu.memory_space<vmem>>, vector<1x2x32xf32>
    %435 = vector.shape_cast %434 : vector<1x2x32xf32> to vector<2x32xf32>
    %cst_212 = arith.constant dense<0.000000e+00> : vector<6x32xf32>
    %436 = tpu.matmul %313, %435, %cst_212 {dimension_numbers = #tpu.dot_dimension_numbers<[1], [0], [0], [1], [0, 0, 1, 1], [], []>} : vector<6x2xf32>, vector<2x32xf32>, vector<6x32xf32> -> vector<6x32xf32>
    %437 = arith.addf %433, %436 : vector<6x32xf32>
    %cst_213 = arith.constant dense<0.000000e+00> : vector<6x32xf32>
    %438 = tpu.matmul %0, %437, %cst_213 {dimension_numbers = #tpu.dot_dimension_numbers<[1], [0], [0], [1], [0, 0, 1, 1], [], []>} : vector<6x6xf32>, vector<6x32xf32>, vector<6x32xf32> -> vector<6x32xf32>
    %439 = arith.addf %426, %438 : vector<6x32xf32>
    %c2_214 = arith.constant 2 : index
    %c0_215 = arith.constant 0 : index
    %c0_216 = arith.constant 0 : index
    %440 = vector.load %arg14[%c2_214, %c0_215, %c0_216] : memref<3x1x32xf32, #tpu.memory_space<vmem>>, vector<1x1x32xf32>
    %441 = vector.shape_cast %440 : vector<1x1x32xf32> to vector<1x32xf32>
    %442 = vector.broadcast %441 : vector<1x32xf32> to vector<6x32xf32>
    %443 = arith.addf %439, %442 : vector<6x32xf32>
    %cst_217 = arith.constant 0.000000e+00 : f32
    %444 = vector.broadcast %cst_217 : f32 to vector<6x32xf32>
    %445 = arith.maximumf %443, %444 : vector<6x32xf32>
    %c2_218 = arith.constant 2 : index
    %c0_219 = arith.constant 0 : index
    %c0_220 = arith.constant 0 : index
    %446 = vector.load %arg15[%c2_218, %c0_219, %c0_220] : memref<3x32x32xf32, #tpu.memory_space<vmem>>, vector<1x32x32xf32>
    %447 = vector.shape_cast %446 : vector<1x32x32xf32> to vector<32x32xf32>
    %cst_221 = arith.constant dense<0.000000e+00> : vector<6x32xf32>
    %448 = tpu.matmul %445, %447, %cst_221 {dimension_numbers = #tpu.dot_dimension_numbers<[1], [0], [0], [1], [0, 0, 1, 1], [], []>} : vector<6x32xf32>, vector<32x32xf32>, vector<6x32xf32> -> vector<6x32xf32>
    %c2_222 = arith.constant 2 : index
    %c0_223 = arith.constant 0 : index
    %c0_224 = arith.constant 0 : index
    %449 = vector.load %arg16[%c2_222, %c0_223, %c0_224] : memref<3x32x32xf32, #tpu.memory_space<vmem>>, vector<1x32x32xf32>
    %450 = vector.shape_cast %449 : vector<1x32x32xf32> to vector<32x32xf32>
    %cst_225 = arith.constant dense<0.000000e+00> : vector<6x32xf32>
    %451 = tpu.matmul %445, %450, %cst_225 {dimension_numbers = #tpu.dot_dimension_numbers<[1], [0], [0], [1], [0, 0, 1, 1], [], []>} : vector<6x32xf32>, vector<32x32xf32>, vector<6x32xf32> -> vector<6x32xf32>
    %cst_226 = arith.constant dense<0.000000e+00> : vector<6x32xf32>
    %452 = tpu.matmul %0, %451, %cst_226 {dimension_numbers = #tpu.dot_dimension_numbers<[1], [0], [0], [1], [0, 0, 1, 1], [], []>} : vector<6x6xf32>, vector<6x32xf32>, vector<6x32xf32> -> vector<6x32xf32>
    %453 = arith.addf %448, %452 : vector<6x32xf32>
    %c2_227 = arith.constant 2 : index
    %c0_228 = arith.constant 0 : index
    %c0_229 = arith.constant 0 : index
    %454 = vector.load %arg17[%c2_227, %c0_228, %c0_229] : memref<3x1x32xf32, #tpu.memory_space<vmem>>, vector<1x1x32xf32>
    %455 = vector.shape_cast %454 : vector<1x1x32xf32> to vector<1x32xf32>
    %456 = vector.broadcast %455 : vector<1x32xf32> to vector<6x32xf32>
    %457 = arith.addf %453, %456 : vector<6x32xf32>
    %cst_230 = arith.constant 0.000000e+00 : f32
    %458 = vector.broadcast %cst_230 : f32 to vector<6x32xf32>
    %459 = arith.maximumf %457, %458 : vector<6x32xf32>
    %c2_231 = arith.constant 2 : index
    %c0_232 = arith.constant 0 : index
    %c0_233 = arith.constant 0 : index
    %460 = vector.load %arg18[%c2_231, %c0_232, %c0_233] : memref<3x32x2xf32, #tpu.memory_space<vmem>>, vector<1x32x2xf32>
    %461 = vector.shape_cast %460 : vector<1x32x2xf32> to vector<32x2xf32>
    %cst_234 = arith.constant dense<0.000000e+00> : vector<6x2xf32>
    %462 = tpu.matmul %459, %461, %cst_234 {dimension_numbers = #tpu.dot_dimension_numbers<[1], [0], [0], [1], [0, 0, 1, 1], [], []>} : vector<6x32xf32>, vector<32x2xf32>, vector<6x2xf32> -> vector<6x2xf32>
    %c2_235 = arith.constant 2 : index
    %c0_236 = arith.constant 0 : index
    %c0_237 = arith.constant 0 : index
    %463 = vector.load %arg19[%c2_235, %c0_236, %c0_237] : memref<3x1x2xf32, #tpu.memory_space<vmem>>, vector<1x1x2xf32>
    %464 = vector.shape_cast %463 : vector<1x1x2xf32> to vector<1x2xf32>
    %465 = vector.broadcast %464 : vector<1x2xf32> to vector<6x2xf32>
    %466 = arith.addf %462, %465 : vector<6x2xf32>
    %467 = math.tanh %466 : vector<6x2xf32>
    %c0_238 = arith.constant 0 : index
    %c0_239 = arith.constant 0 : index
    %468 = vector.load %arg20[%c0_238, %c0_239] : memref<6x32xf32, #tpu.memory_space<vmem>>, vector<6x32xf32>
    tpu.vector_store %arg20[%c0_238, %c0_239], %459 {strides = array<i32>} : memref<6x32xf32, #tpu.memory_space<vmem>>, vector<6x32xf32>,
    %c0_240 = arith.constant 0 : index
    %c0_241 = arith.constant 0 : index
    %469 = vector.load %arg21[%c0_240, %c0_241] : memref<6x2xf32, #tpu.memory_space<vmem>>, vector<6x2xf32>
    tpu.vector_store %arg21[%c0_240, %c0_241], %467 {strides = array<i32>} : memref<6x2xf32, #tpu.memory_space<vmem>>, vector<6x2xf32>,
    %cst_242 = arith.constant dense<0.000000e+00> : vector<6x2xf32>
    %470 = tpu.matmul %0, %467, %cst_242 {dimension_numbers = #tpu.dot_dimension_numbers<[1], [0], [0], [1], [0, 0, 1, 1], [], []>} : vector<6x6xf32>, vector<6x2xf32>, vector<6x2xf32> -> vector<6x2xf32>
    %471 = arith.subf %467, %470 : vector<6x2xf32>
    %472 = arith.mulf %471, %471 : vector<6x2xf32>
    %473 = vector.shape_cast %472 : vector<6x2xf32> to vector<1x6x2xf32>
    %cst_243 = arith.constant dense<0.000000e+00> : vector<1xf32>
    %474 = vector.multi_reduction <add>, %473, %cst_243 [1, 2] : vector<1x6x2xf32> to vector<1xf32>
    %475 = vector.shape_cast %474 : vector<1xf32> to vector<1x1x1xf32>
    %476 = vector.extract %475[0, 0, 0] : f32 from vector<1x1x1xf32>
    %cst_244 = arith.constant 6.000000e+00 : f32
    %477 = arith.divf %476, %cst_244 : f32
    %478 = arith.mulf %467, %471 : vector<6x2xf32>
    %479 = vector.shape_cast %478 : vector<6x2xf32> to vector<1x6x2xf32>
    %cst_245 = arith.constant dense<0.000000e+00> : vector<1xf32>
    %480 = vector.multi_reduction <add>, %479, %cst_245 [1, 2] : vector<1x6x2xf32> to vector<1xf32>
    %481 = vector.shape_cast %480 : vector<1xf32> to vector<1x1x1xf32>
    %482 = vector.extract %481[0, 0, 0] : f32 from vector<1x1x1xf32>
    %cst_246 = arith.constant 2.000000e+00 : f32
    %483 = arith.mulf %cst_246, %482 : f32
    %cst_247 = arith.constant 6.000000e+00 : f32
    %484 = arith.divf %483, %cst_247 : f32
    %c0_248 = arith.constant 0 : index
    %c0_249 = arith.constant 0 : index
    %485 = vector.load %arg4[%c0_248, %c0_249] : memref<2x32xf32, #tpu.memory_space<vmem>>, vector<2x32xf32>
    %c0_250 = arith.constant 0 : index
    %c0_251 = arith.constant 0 : index
    %486 = vector.load %arg5[%c0_250, %c0_251] : memref<1x32xf32, #tpu.memory_space<vmem>>, vector<1x32xf32>
    %c0_252 = arith.constant 0 : index
    %c0_253 = arith.constant 0 : index
    %487 = vector.load %arg7[%c0_252, %c0_253] : memref<6x32xf32, #tpu.memory_space<vmem>>, vector<6x32xf32>
    %488 = arith.mulf %467, %467 : vector<6x2xf32>
    %cst_254 = arith.constant dense<0.000000e+00> : vector<6xf32>
    %489 = vector.multi_reduction <add>, %488, %cst_254 [1] : vector<6x2xf32> to vector<6xf32>
    %490 = vector.shape_cast %489 : vector<6xf32> to vector<6x1xf32>
    %491 = vector.broadcast %490 : vector<6x1xf32> to vector<6x32xf32>
    %492 = vector.broadcast %486 : vector<1x32xf32> to vector<6x32xf32>
    %493 = arith.addf %491, %492 : vector<6x32xf32>
    %cst_255 = arith.constant dense<0.000000e+00> : vector<6x32xf32>
    %494 = tpu.matmul %467, %485, %cst_255 {dimension_numbers = #tpu.dot_dimension_numbers<[1], [0], [0], [1], [0, 0, 1, 1], [], []>} : vector<6x2xf32>, vector<2x32xf32>, vector<6x32xf32> -> vector<6x32xf32>
    %cst_256 = arith.constant 2.000000e+00 : f32
    %495 = vector.broadcast %cst_256 : f32 to vector<6x32xf32>
    %496 = arith.mulf %495, %494 : vector<6x32xf32>
    %497 = arith.subf %493, %496 : vector<6x32xf32>
    %cst_257 = arith.constant 0.000000e+00 : f32
    %498 = vector.broadcast %cst_257 : f32 to vector<6x32xf32>
    %499 = arith.maximumf %497, %498 : vector<6x32xf32>
    %500 = arith.addf %499, %487 : vector<6x32xf32>
    %cst_258 = arith.constant dense<0x7F800000> : vector<6xf32>
    %501 = vector.multi_reduction <minimumf>, %500, %cst_258 [1] : vector<6x32xf32> to vector<6xf32>
    %502 = vector.shape_cast %501 : vector<6xf32> to vector<6x1xf32>
    %503 = vector.shape_cast %502 : vector<6x1xf32> to vector<1x6x1xf32>
    %cst_259 = arith.constant dense<0.000000e+00> : vector<1xf32>
    %504 = vector.multi_reduction <add>, %503, %cst_259 [1, 2] : vector<1x6x1xf32> to vector<1xf32>
    %505 = vector.shape_cast %504 : vector<1xf32> to vector<1x1x1xf32>
    %506 = vector.extract %505[0, 0, 0] : f32 from vector<1x1x1xf32>
    %cst_260 = arith.constant 6.000000e+00 : f32
    %507 = arith.divf %506, %cst_260 : f32
    %cst_261 = arith.constant dense<0x7F800000> : vector<32xf32>
    %508 = vector.multi_reduction <minimumf>, %500, %cst_261 [0] : vector<6x32xf32> to vector<32xf32>
    %509 = vector.shape_cast %508 : vector<32xf32> to vector<1x32xf32>
    %510 = vector.shape_cast %509 : vector<1x32xf32> to vector<1x1x32xf32>
    %cst_262 = arith.constant dense<0.000000e+00> : vector<1xf32>
    %511 = vector.multi_reduction <add>, %510, %cst_262 [1, 2] : vector<1x1x32xf32> to vector<1xf32>
    %512 = vector.shape_cast %511 : vector<1xf32> to vector<1x1x1xf32>
    %513 = vector.extract %512[0, 0, 0] : f32 from vector<1x1x1xf32>
    %cst_263 = arith.constant 3.200000e+01 : f32
    %514 = arith.divf %513, %cst_263 : f32
    %515 = arith.addf %507, %514 : f32
    %c0_264 = arith.constant 0 : index
    %c0_265 = arith.constant 0 : index
    %516 = memref.load %arg22[%c0_264, %c0_265] : memref<1x4xf32, #tpu.memory_space<smem>>
    memref.store %515, %arg22[%c0_264, %c0_265] : memref<1x4xf32, #tpu.memory_space<smem>>
    %c0_266 = arith.constant 0 : index
    %c1_267 = arith.constant 1 : index
    %517 = memref.load %arg22[%c0_266, %c1_267] : memref<1x4xf32, #tpu.memory_space<smem>>
    memref.store %484, %arg22[%c0_266, %c1_267] : memref<1x4xf32, #tpu.memory_space<smem>>
    %c0_268 = arith.constant 0 : index
    %c2_269 = arith.constant 2 : index
    %518 = memref.load %arg22[%c0_268, %c2_269] : memref<1x4xf32, #tpu.memory_space<smem>>
    memref.store %477, %arg22[%c0_268, %c2_269] : memref<1x4xf32, #tpu.memory_space<smem>>
    %519 = arith.addf %515, %484 : f32
    %520 = arith.addf %519, %477 : f32
    %cst_270 = arith.constant 0.000000e+00 : f32
    %521 = arith.addf %520, %cst_270 : f32
    %c0_271 = arith.constant 0 : index
    %c3 = arith.constant 3 : index
    %522 = memref.load %arg22[%c0_271, %c3] : memref<1x4xf32, #tpu.memory_space<smem>>
    memref.store %521, %arg22[%c0_271, %c3] : memref<1x4xf32, #tpu.memory_space<smem>>
    return
  }
}

</mosaic_0001>

<llo_original>
// kernel: pixel2mesh_forward.1
$region0: #{pixel2mesh_forward.1}
  #allocation0 [shape = 'u32[]', space=smem, size = 0x4, offset = 0x4, fixed_abs, tag = 'smem constant byte address 0x4 - core index']
  #allocation1 [shape = 'u32[144,128]{1,0:T(1,128)}', space=vmem, size = 0x12000, scoped, tag = 'internal scratch']
  %s0 = inlined_call_operand.vmem [shape: f32[6,32], index: 0, kind: input, shape index: {}]
  %s1 = inlined_call_operand.vmem [shape: f32[6,2], index: 1, kind: input, shape index: {}]
  %s2 = inlined_call_operand.vmem [shape: f32[6,6], index: 2, kind: input, shape index: {}]
  %s3 = inlined_call_operand.vmem [shape: f32[512,4], index: 3, kind: input, shape index: {}]
  %s4 = inlined_call_operand.vmem [shape: f32[2,32], index: 4, kind: input, shape index: {}]
  %s5 = inlined_call_operand.vmem [shape: f32[1,32], index: 5, kind: input, shape index: {}]
  %s6 = inlined_call_operand.vmem [shape: s32[6,1], index: 6, kind: input, shape index: {}]
  %s7 = inlined_call_operand.vmem [shape: f32[6,32], index: 7, kind: input, shape index: {}]
  %s8 = inlined_call_operand.vmem [shape: f32[3,32,32], index: 8, kind: input, shape index: {}]
  %s9 = inlined_call_operand.vmem [shape: f32[3,4,32], index: 9, kind: input, shape index: {}]
  %s10 = inlined_call_operand.vmem [shape: f32[3,2,32], index: 10, kind: input, shape index: {}]
  %s11 = inlined_call_operand.vmem [shape: f32[3,32,32], index: 11, kind: input, shape index: {}]
  %s12 = inlined_call_operand.vmem [shape: f32[3,4,32], index: 12, kind: input, shape index: {}]
  %s13 = inlined_call_operand.vmem [shape: f32[3,2,32], index: 13, kind: input, shape index: {}]
  %s14 = inlined_call_operand.vmem [shape: f32[3,1,32], index: 14, kind: input, shape index: {}]
  %s15 = inlined_call_operand.vmem [shape: f32[3,32,32], index: 15, kind: input, shape index: {}]
  %s16 = inlined_call_operand.vmem [shape: f32[3,32,32], index: 16, kind: input, shape index: {}]
  %s17 = inlined_call_operand.vmem [shape: f32[3,1,32], index: 17, kind: input, shape index: {}]
  %s18 = inlined_call_operand.vmem [shape: f32[3,32,2], index: 18, kind: input, shape index: {}]
  %s19 = inlined_call_operand.vmem [shape: f32[3,1,2], index: 19, kind: input, shape index: {}]
  %s20 = inlined_call_operand.hbm [shape: f32[6,32], index: 20, kind: output, shape index: {0}]
  %s21 = inlined_call_operand.vmem [shape: f32[6,2], index: 21, kind: output, shape index: {1}]
  %s22 = inlined_call_operand.vmem [shape: f32[1,4], index: 22, kind: output, shape index: {2}]
  %23 = xla_tuple %s20, %s21, %s22
  %s24 = sld [smem:[#allocation0]]
  $region106: #{pixel2mesh_forward.1} parent=0
    _
  %s26 = ssub.s32 1, %s24
  %s27 = scalar_select 0, %s26, %s24
  $region1: #{pixel2mesh_forward.1} parent=0
    #allocation2 [shape = 'u8[4096]{0}', space=vmem, size = 0x1000, scoped, tag = 'output window, operand 0, single buffered']
    #allocation3 [shape = 's32[1]{0}', space=sflag, size = 0x4, scoped, tag = 'scoped memory for pixel2mesh_forward.1']
    #allocation4 [shape = 's32[1]{0}', space=sflag, size = 0x4, scoped, tag = 'scoped memory for pixel2mesh_forward.1']
    #allocation5 [shape = 'u8[512]{0}', space=smem, size = 0x200, scoped, tag = 'output window, operand 2, single buffered']
    %28 = vsyncpa [#allocation3], 0
    %29 = vsyncpa [#allocation4], 0
    // Predicated region
    $region2: #{pixel2mesh_forward.1} parent=1 // pred_check
      _
    $region3: #{pixel2mesh_forward.1} parent=1 // pred_check_branch
      %31 = sbr.rel (0) target = $region5
    $region4: #{pixel2mesh_forward.1} parent=1 // pred_region
      _
    $region5: #{pixel2mesh_forward.1} parent=1 // pred_fallthru
      _
    // Predicated region
    $region6: #{pixel2mesh_forward.1} parent=1 // pred_check
      _
    $region7: #{pixel2mesh_forward.1} parent=1 // pred_check_branch
      %33 = sbr.rel (0) target = $region9
    $region8: #{pixel2mesh_forward.1} parent=1 // pred_region
      _
    $region9: #{pixel2mesh_forward.1} parent=1 // pred_fallthru
      _
    // Predicated region
    $region10: #{pixel2mesh_forward.1} parent=1 // pred_check
      _
    $region11: #{pixel2mesh_forward.1} parent=1 // pred_check_branch
      %35 = sbr.rel (0) target = $region13
    $region12: #{pixel2mesh_forward.1} parent=1 // pred_region
      _
    $region13: #{pixel2mesh_forward.1} parent=1 // pred_fallthru
      _
    // Predicated region
    $region14: #{pixel2mesh_forward.1} parent=1 // pred_check
      _
    $region15: #{pixel2mesh_forward.1} parent=1 // pred_check_branch
      %37 = sbr.rel (0) target = $region17
    $region16: #{pixel2mesh_forward.1} parent=1 // pred_region
      _
    $region17: #{pixel2mesh_forward.1} parent=1 // pred_fallthru
      _
    // Predicated region
    $region18: #{pixel2mesh_forward.1} parent=1 // pred_check
      _
    $region19: #{pixel2mesh_forward.1} parent=1 // pred_check_branch
      %39 = sbr.rel (0) target = $region21
    $region20: #{pixel2mesh_forward.1} parent=1 // pred_region
      _
    $region21: #{pixel2mesh_forward.1} parent=1 // pred_fallthru
      _
    // Predicated region
    $region22: #{pixel2mesh_forward.1} parent=1 // pred_check
      _
    $region23: #{pixel2mesh_forward.1} parent=1 // pred_check_branch
      %41 = sbr.rel (0) target = $region25
    $region24: #{pixel2mesh_forward.1} parent=1 // pred_region
      _
    $region25: #{pixel2mesh_forward.1} parent=1 // pred_fallthru
      _
    // Predicated region
    $region26: #{pixel2mesh_forward.1} parent=1 // pred_check
      _
    $region27: #{pixel2mesh_forward.1} parent=1 // pred_check_branch
      %43 = sbr.rel (0) target = $region29
    $region28: #{pixel2mesh_forward.1} parent=1 // pred_region
      _
    $region29: #{pixel2mesh_forward.1} parent=1 // pred_fallthru
      _
    // Predicated region
    $region30: #{pixel2mesh_forward.1} parent=1 // pred_check
      _
    $region31: #{pixel2mesh_forward.1} parent=1 // pred_check_branch
      %45 = sbr.rel (0) target = $region33
    $region32: #{pixel2mesh_forward.1} parent=1 // pred_region
      _
    $region33: #{pixel2mesh_forward.1} parent=1 // pred_fallthru
      _
    // Predicated region
    $region34: #{pixel2mesh_forward.1} parent=1 // pred_check
      _
    $region35: #{pixel2mesh_forward.1} parent=1 // pred_check_branch
      %47 = sbr.rel (0) target = $region37
    $region36: #{pixel2mesh_forward.1} parent=1 // pred_region
      _
    $region37: #{pixel2mesh_forward.1} parent=1 // pred_fallthru
      _
    // Predicated region
    $region38: #{pixel2mesh_forward.1} parent=1 // pred_check
      _
    $region39: #{pixel2mesh_forward.1} parent=1 // pred_check_branch
      %49 = sbr.rel (0) target = $region41
    $region40: #{pixel2mesh_forward.1} parent=1 // pred_region
      _
    $region41: #{pixel2mesh_forward.1} parent=1 // pred_fallthru
      _
    // Predicated region
    $region42: #{pixel2mesh_forward.1} parent=1 // pred_check
      _
    $region43: #{pixel2mesh_forward.1} parent=1 // pred_check_branch
      %51 = sbr.rel (0) target = $region45
    $region44: #{pixel2mesh_forward.1} parent=1 // pred_region
      _
    $region45: #{pixel2mesh_forward.1} parent=1 // pred_fallthru
      _
    // Predicated region
    $region46: #{pixel2mesh_forward.1} parent=1 // pred_check
      _
    $region47: #{pixel2mesh_forward.1} parent=1 // pred_check_branch
      %53 = sbr.rel (0) target = $region49
    $region48: #{pixel2mesh_forward.1} parent=1 // pred_region
      _
    $region49: #{pixel2mesh_forward.1} parent=1 // pred_fallthru
      _
    // Predicated region
    $region50: #{pixel2mesh_forward.1} parent=1 // pred_check
      _
    $region51: #{pixel2mesh_forward.1} parent=1 // pred_check_branch
      %55 = sbr.rel (0) target = $region53
    $region52: #{pixel2mesh_forward.1} parent=1 // pred_region
      _
    $region53: #{pixel2mesh_forward.1} parent=1 // pred_fallthru
      _
    // Predicated region
    $region54: #{pixel2mesh_forward.1} parent=1 // pred_check
      _
    $region55: #{pixel2mesh_forward.1} parent=1 // pred_check_branch
      %57 = sbr.rel (0) target = $region57
    $region56: #{pixel2mesh_forward.1} parent=1 // pred_region
      _
    $region57: #{pixel2mesh_forward.1} parent=1 // pred_fallthru
      _
    // Predicated region
    $region58: #{pixel2mesh_forward.1} parent=1 // pred_check
      _
    $region59: #{pixel2mesh_forward.1} parent=1 // pred_check_branch
      %59 = sbr.rel (0) target = $region61
    $region60: #{pixel2mesh_forward.1} parent=1 // pred_region
      _
    $region61: #{pixel2mesh_forward.1} parent=1 // pred_fallthru
      _
    // Predicated region
    $region62: #{pixel2mesh_forward.1} parent=1 // pred_check
      _
    $region63: #{pixel2mesh_forward.1} parent=1 // pred_check_branch
      %61 = sbr.rel (0) target = $region65
    $region64: #{pixel2mesh_forward.1} parent=1 // pred_region
      _
    $region65: #{pixel2mesh_forward.1} parent=1 // pred_fallthru
      _
    // Predicated region
    $region66: #{pixel2mesh_forward.1} parent=1 // pred_check
      _
    $region67: #{pixel2mesh_forward.1} parent=1 // pred_check_branch
      %63 = sbr.rel (0) target = $region69
    $region68: #{pixel2mesh_forward.1} parent=1 // pred_region
      _
    $region69: #{pixel2mesh_forward.1} parent=1 // pred_fallthru
      _
    // Predicated region
    $region70: #{pixel2mesh_forward.1} parent=1 // pred_check
      _
    $region71: #{pixel2mesh_forward.1} parent=1 // pred_check_branch
      %65 = sbr.rel (0) target = $region73
    $region72: #{pixel2mesh_forward.1} parent=1 // pred_region
      _
    $region73: #{pixel2mesh_forward.1} parent=1 // pred_fallthru
      _
    // Predicated region
    $region74: #{pixel2mesh_forward.1} parent=1 // pred_check
      _
    $region75: #{pixel2mesh_forward.1} parent=1 // pred_check_branch
      %67 = sbr.rel (0) target = $region77
    $region76: #{pixel2mesh_forward.1} parent=1 // pred_region
      _
    $region77: #{pixel2mesh_forward.1} parent=1 // pred_fallthru
      _
    // Predicated region
    $region78: #{pixel2mesh_forward.1} parent=1 // pred_check
      _
    $region79: #{pixel2mesh_forward.1} parent=1 // pred_check_branch
      %69 = sbr.rel (0) target = $region81
    $region80: #{pixel2mesh_forward.1} parent=1 // pred_region
      _
    $region81: #{pixel2mesh_forward.1} parent=1 // pred_fallthru
      _
    %v70 = vld [vmem:[%s2] sm:$0x3f]
    %v71 = vld [vmem:[%s3] sm:$0xff]
    %v72 = vld [vmem:[%s3 + $0x8] sm:$0xff]
    %v73 = vld [vmem:[%s3 + $0x10] sm:$0xff]
    %v74 = vld [vmem:[%s3 + $0x18] sm:$0xff]
    %v75 = vld [vmem:[%s3 + $0x20] sm:$0xff]
    %v76 = vld [vmem:[%s3 + $0x28] sm:$0xff]
    %v77 = vld [vmem:[%s3 + $0x30] sm:$0xff]
    %v78 = vld [vmem:[%s3 + $0x38] sm:$0xff]
    %v79 = vld [vmem:[%s3 + $0x40] sm:$0xff]
    %v80 = vld [vmem:[%s3 + $0x48] sm:$0xff]
    %v81 = vld [vmem:[%s3 + $0x50] sm:$0xff]
    %v82 = vld [vmem:[%s3 + $0x58] sm:$0xff]
    %v83 = vld [vmem:[%s3 + $0x60] sm:$0xff]
    %v84 = vld [vmem:[%s3 + $0x68] sm:$0xff]
    %v85 = vld [vmem:[%s3 + $0x70] sm:$0xff]
    %v86 = vld [vmem:[%s3 + $0x78] sm:$0xff]
    %v87 = vld [vmem:[%s3 + $0x80] sm:$0xff]
    %v88 = vld [vmem:[%s3 + $0x88] sm:$0xff]
    %v89 = vld [vmem:[%s3 + $0x90] sm:$0xff]
    %v90 = vld [vmem:[%s3 + $0x98] sm:$0xff]
    %v91 = vld [vmem:[%s3 + $0xa0] sm:$0xff]
    %v92 = vld [vmem:[%s3 + $0xa8] sm:$0xff]
    %v93 = vld [vmem:[%s3 + $0xb0] sm:$0xff]
    %v94 = vld [vmem:[%s3 + $0xb8] sm:$0xff]
    %v95 = vld [vmem:[%s3 + $0xc0] sm:$0xff]
    %v96 = vld [vmem:[%s3 + $0xc8] sm:$0xff]
    %v97 = vld [vmem:[%s3 + $0xd0] sm:$0xff]
    %v98 = vld [vmem:[%s3 + $0xd8] sm:$0xff]
    %v99 = vld [vmem:[%s3 + $0xe0] sm:$0xff]
    %v100 = vld [vmem:[%s3 + $0xe8] sm:$0xff]
    %v101 = vld [vmem:[%s3 + $0xf0] sm:$0xff]
    %v102 = vld [vmem:[%s3 + $0xf8] sm:$0xff]
    %v103 = vld [vmem:[%s3 + $0x100] sm:$0xff]
    %v104 = vld [vmem:[%s3 + $0x108] sm:$0xff]
    %v105 = vld [vmem:[%s3 + $0x110] sm:$0xff]
    %v106 = vld [vmem:[%s3 + $0x118] sm:$0xff]
    %v107 = vld [vmem:[%s3 + $0x120] sm:$0xff]
    %v108 = vld [vmem:[%s3 + $0x128] sm:$0xff]
    %v109 = vld [vmem:[%s3 + $0x130] sm:$0xff]
    %v110 = vld [vmem:[%s3 + $0x138] sm:$0xff]
    %v111 = vld [vmem:[%s3 + $0x140] sm:$0xff]
    %v112 = vld [vmem:[%s3 + $0x148] sm:$0xff]
    %v113 = vld [vmem:[%s3 + $0x150] sm:$0xff]
    %v114 = vld [vmem:[%s3 + $0x158] sm:$0xff]
    %v115 = vld [vmem:[%s3 + $0x160] sm:$0xff]
    %v116 = vld [vmem:[%s3 + $0x168] sm:$0xff]
    %v117 = vld [vmem:[%s3 + $0x170] sm:$0xff]
    %v118 = vld [vmem:[%s3 + $0x178] sm:$0xff]
    %v119 = vld [vmem:[%s3 + $0x180] sm:$0xff]
    %v120 = vld [vmem:[%s3 + $0x188] sm:$0xff]
    %v121 = vld [vmem:[%s3 + $0x190] sm:$0xff]
    %v122 = vld [vmem:[%s3 + $0x198] sm:$0xff]
    %v123 = vld [vmem:[%s3 + $0x1a0] sm:$0xff]
    %v124 = vld [vmem:[%s3 + $0x1a8] sm:$0xff]
    %v125 = vld [vmem:[%s3 + $0x1b0] sm:$0xff]
    %v126 = vld [vmem:[%s3 + $0x1b8] sm:$0xff]
    %v127 = vld [vmem:[%s3 + $0x1c0] sm:$0xff]
    %v128 = vld [vmem:[%s3 + $0x1c8] sm:$0xff]
    %v129 = vld [vmem:[%s3 + $0x1d0] sm:$0xff]
    %v130 = vld [vmem:[%s3 + $0x1d8] sm:$0xff]
    %v131 = vld [vmem:[%s3 + $0x1e0] sm:$0xff]
    %v132 = vld [vmem:[%s3 + $0x1e8] sm:$0xff]
    %v133 = vld [vmem:[%s3 + $0x1f0] sm:$0xff]
    %v134 = vld [vmem:[%s3 + $0x1f8] sm:$0xff]
    %v135 = vld [vmem:[%s6] sm:$0x3f]
    %v136 = vlaneseq
    %v137 = vand.u32 %v136, 127
    %v138 = vadd.s32 %v137, 128
    %v139 = vadd.s32 %v137, 256
    %v140 = vadd.s32 %v137, 384
    %v141 = vld [vmem:[%s0] sm:$0x3f]
    %v142 = vld [vmem:[%s1] sm:$0x3f]
    %v143 = vadd.f32 %v142, 1.0
    %v144 = vmul.f32 %v143, 0.5
    %v145 = vmul.f32 %v144, 15.0
    %v146 = vfloor.f32 %v145
    %v147 = vmax.f32 %v146, 0.0
    %v148 = vmin.f32 %v147, 15.0
    %v149 = vadd.f32 %v148, 1.0
    %v150 = vmax.f32 %v149, 0.0
    %v151 = vmin.f32 %v150, 15.0
    %v152 = vsub.f32 %v145, %v148
    %v153 = vcvt.f32.s32.to.zero.pseudo %v148
    %v154 = vcvt.f32.s32.to.zero.pseudo %v151
    %v155 = vmul.u32 %v153, 16
    %156 = vrot.lane.b32.xlu0 %v155, 127
    %v157 = vpop.permute.xlu0 %156
    %v158 = vadd.s32 %v135, %v157
    %v159 = vadd.s32 %v158, %v153
    %v160 = vadd.s32 %v158, %v154
    %v161 = vmul.u32 %v154, 16
    %162 = vrot.lane.b32.xlu0 %v161, 127
    %v163 = vpop.permute.xlu0 %162
    %v164 = vadd.s32 %v135, %v163
    %v165 = vadd.s32 %v164, %v153
    %v166 = vadd.s32 %v164, %v154
    %v167 = vsub.f32 1.0, %v152
    %169 = vrot.lane.b32.xlu0 %v167, 127
    %v170 = vpop.permute.xlu0 %169
    %v172 = vmul.f32 %v167, %v170
    %v173 = vmul.f32 %v152, %v170
    %175 = vrot.lane.b32.xlu0 %v152, 127
    %v176 = vpop.permute.xlu0 %175
    %v178 = vmul.f32 %v167, %v176
    %v179 = vmul.f32 %v152, %v176
    %180 = vset.pattern.permute.xlu0 0
    %181 = vperm.xlu0 %180, %v159
    %v182 = vpop.permute.xlu0 %181
    %vm183 = vcmp.eq.s32.totalorder %v137, %v182
    %vm184 = vcmp.eq.s32.totalorder %v138, %v182
    %vm185 = vcmp.eq.s32.totalorder %v139, %v182
    %vm186 = vcmp.eq.s32.totalorder %v140, %v182
    %188 = vset.pattern.permute.xlu0 0
    %189 = vperm.xlu0 %188, %v172
    %v190 = vpop.permute.xlu0 %189
    %v192 = vsel %vm183, %v190, 0.0
    %v193 = vsel %vm184, %v190, 0.0
    %v194 = vsel %vm185, %v190, 0.0
    %v195 = vsel %vm186, %v190, 0.0
    %196 = vset.pattern.permute.xlu0 0
    %197 = vperm.xlu0 %196, %v160
    %v198 = vpop.permute.xlu0 %197
    %vm199 = vcmp.eq.s32.totalorder %v137, %v198
    %vm200 = vcmp.eq.s32.totalorder %v138, %v198
    %vm201 = vcmp.eq.s32.totalorder %v139, %v198
    %vm202 = vcmp.eq.s32.totalorder %v140, %v198
    %204 = vset.pattern.permute.xlu0 0
    %205 = vperm.xlu0 %204, %v173
    %v206 = vpop.permute.xlu0 %205
    %v208 = vsel %vm199, %v206, 0.0
    %v209 = vsel %vm200, %v206, 0.0
    %v210 = vsel %vm201, %v206, 0.0
    %v211 = vsel %vm202, %v206, 0.0
    %v212 = vadd.f32 %v192, %v208
    %v213 = vadd.f32 %v193, %v209
    %v214 = vadd.f32 %v194, %v210
    %v215 = vadd.f32 %v195, %v211
    %216 = vset.pattern.permute.xlu0 0
    %217 = vperm.xlu0 %216, %v165
    %v218 = vpop.permute.xlu0 %217
    %vm219 = vcmp.eq.s32.totalorder %v137, %v218
    %vm220 = vcmp.eq.s32.totalorder %v138, %v218
    %vm221 = vcmp.eq.s32.totalorder %v139, %v218
    %vm222 = vcmp.eq.s32.totalorder %v140, %v218
    %224 = vset.pattern.permute.xlu0 0
    %225 = vperm.xlu0 %224, %v178
    %v226 = vpop.permute.xlu0 %225
    %v228 = vsel %vm219, %v226, 0.0
    %v229 = vsel %vm220, %v226, 0.0
    %v230 = vsel %vm221, %v226, 0.0
    %v231 = vsel %vm222, %v226, 0.0
    %v232 = vadd.f32 %v212, %v228
    %v233 = vadd.f32 %v213, %v229
    %v234 = vadd.f32 %v214, %v230
    %v235 = vadd.f32 %v215, %v231
    %236 = vset.pattern.permute.xlu0 0
    %237 = vperm.xlu0 %236, %v166
    %v238 = vpop.permute.xlu0 %237
    %vm239 = vcmp.eq.s32.totalorder %v137, %v238
    %vm240 = vcmp.eq.s32.totalorder %v138, %v238
    %vm241 = vcmp.eq.s32.totalorder %v139, %v238
    %vm242 = vcmp.eq.s32.totalorder %v140, %v238
    %244 = vset.pattern.permute.xlu0 0
    %245 = vperm.xlu0 %244, %v179
    %v246 = vpop.permute.xlu0 %245
    %v248 = vsel %vm239, %v246, 0.0
    %v249 = vsel %vm240, %v246, 0.0
    %v250 = vsel %vm241, %v246, 0.0
    %v251 = vsel %vm242, %v246, 0.0
    %v252 = vadd.f32 %v232, %v248
    %v253 = vadd.f32 %v233, %v249
    %v254 = vadd.f32 %v234, %v250
    %v255 = vadd.f32 %v235, %v251
    %256 = vmatprep.subr.mxu0 0.0
    %257 = vmatpush1.msra.mxu0 %v86
    %258 = vmatprep.subr.mxu0 0.0
    %259 = vmatpush1.msra.mxu0 %v85
    %260 = vmatprep.subr.mxu0 0.0
    %261 = vmatpush1.msra.mxu0 %v84
    %262 = vmatprep.subr.mxu0 0.0
    %263 = vmatpush1.msra.mxu0 %v83
    %264 = vmatprep.subr.mxu0 0.0
    %265 = vmatpush1.msra.mxu0 %v82
    %266 = vmatprep.subr.mxu0 0.0
    %267 = vmatpush1.msra.mxu0 %v81
    %268 = vmatprep.subr.mxu0 0.0
    %269 = vmatpush1.msra.mxu0 %v80
    %270 = vmatprep.subr.mxu0 0.0
    %271 = vmatpush1.msra.mxu0 %v79
    %272 = vmatprep.subr.mxu0 0.0
    %273 = vmatpush1.msra.mxu0 %v78
    %274 = vmatprep.subr.mxu0 0.0
    %275 = vmatpush1.msra.mxu0 %v77
    %276 = vmatprep.subr.mxu0 0.0
    %277 = vmatpush1.msra.mxu0 %v76
    %278 = vmatprep.subr.mxu0 0.0
    %279 = vmatpush1.msra.mxu0 %v75
    %280 = vmatprep.subr.mxu0 0.0
    %281 = vmatpush1.msra.mxu0 %v74
    %282 = vmatprep.subr.mxu0 0.0
    %283 = vmatpush1.msra.mxu0 %v73
    %284 = vmatprep.subr.mxu0 0.0
    %285 = vmatpush1.msra.mxu0 %v72
    %286 = vmatprep.subr.mxu0 0.0
    %287 = vmatpush1.msra.mxu0 %v71
    %288 = vmatprep.subr.mxu0 0.0
    %289 = vmatpush2.msra.mxu0 %v102
    %290 = vmatprep.subr.mxu0 0.0
    %291 = vmatpush2.msra.mxu0 %v101
    %292 = vmatprep.subr.mxu0 0.0
    %293 = vmatpush2.msra.mxu0 %v100
    %294 = vmatprep.subr.mxu0 0.0
    %295 = vmatpush2.msra.mxu0 %v99
    %296 = vmatprep.subr.mxu0 0.0
    %297 = vmatpush2.msra.mxu0 %v98
    %298 = vmatprep.subr.mxu0 0.0
    %299 = vmatpush2.msra.mxu0 %v97
    %300 = vmatprep.subr.mxu0 0.0
    %301 = vmatpush2.msra.mxu0 %v96
    %302 = vmatprep.subr.mxu0 0.0
    %303 = vmatpush2.msra.mxu0 %v95
    %304 = vmatprep.subr.mxu0 0.0
    %305 = vmatpush2.msra.mxu0 %v94
    %306 = vmatprep.subr.mxu0 0.0
    %307 = vmatpush2.msra.mxu0 %v93
    %308 = vmatprep.subr.mxu0 0.0
    %309 = vmatpush2.msra.mxu0 %v92
    %310 = vmatprep.subr.mxu0 0.0
    %311 = vmatpush2.msra.mxu0 %v91
    %312 = vmatprep.subr.mxu0 0.0
    %313 = vmatpush2.msra.mxu0 %v90
    %314 = vmatprep.subr.mxu0 0.0
    %315 = vmatpush2.msra.mxu0 %v89
    %316 = vmatprep.subr.mxu0 0.0
    %317 = vmatpush2.msra.mxu0 %v88
    %318 = vmatprep.subr.mxu0 0.0
    %319 = vmatpush2.msra.mxu0 %v87
    %320 = vmatprep.mubr.f32.mxu0 %v253
    %321 = vmatmul.mubr.f32.gmra.mxu0 %v252
    %v322 = vpop.f32.mrf.mxu0
    %v323 = vadd.f32 0.0, %v322
    %v324 = vpop.f32.mrf.mxu0
    %325 = vdwg.mxu0
    %326 = vmatprep.subr.mxu0 0.0
    %327 = vmatpush1.msra.mxu0 %v118
    %328 = vmatprep.subr.mxu0 0.0
    %329 = vmatpush1.msra.mxu0 %v117
    %330 = vmatprep.subr.mxu0 0.0
    %331 = vmatpush1.msra.mxu0 %v116
    %332 = vmatprep.subr.mxu0 0.0
    %333 = vmatpush1.msra.mxu0 %v115
    %334 = vmatprep.subr.mxu0 0.0
    %335 = vmatpush1.msra.mxu0 %v114
    %336 = vmatprep.subr.mxu0 0.0
    %337 = vmatpush1.msra.mxu0 %v113
    %338 = vmatprep.subr.mxu0 0.0
    %339 = vmatpush1.msra.mxu0 %v112
    %340 = vmatprep.subr.mxu0 0.0
    %341 = vmatpush1.msra.mxu0 %v111
    %342 = vmatprep.subr.mxu0 0.0
    %343 = vmatpush1.msra.mxu0 %v110
    %344 = vmatprep.subr.mxu0 0.0
    %345 = vmatpush1.msra.mxu0 %v109
    %346 = vmatprep.subr.mxu0 0.0
    %347 = vmatpush1.msra.mxu0 %v108
    %348 = vmatprep.subr.mxu0 0.0
    %349 = vmatpush1.msra.mxu0 %v107
    %350 = vmatprep.subr.mxu0 0.0
    %351 = vmatpush1.msra.mxu0 %v106
    %352 = vmatprep.subr.mxu0 0.0
    %353 = vmatpush1.msra.mxu0 %v105
    %354 = vmatprep.subr.mxu0 0.0
    %355 = vmatpush1.msra.mxu0 %v104
    %356 = vmatprep.subr.mxu0 0.0
    %357 = vmatpush1.msra.mxu0 %v103
    %358 = vmatprep.subr.mxu0 0.0
    %359 = vmatpush2.msra.mxu0 %v134
    %360 = vmatprep.subr.mxu0 0.0
    %361 = vmatpush2.msra.mxu0 %v133
    %362 = vmatprep.subr.mxu0 0.0
    %363 = vmatpush2.msra.mxu0 %v132
    %364 = vmatprep.subr.mxu0 0.0
    %365 = vmatpush2.msra.mxu0 %v131
    %366 = vmatprep.subr.mxu0 0.0
    %367 = vmatpush2.msra.mxu0 %v130
    %368 = vmatprep.subr.mxu0 0.0
    %369 = vmatpush2.msra.mxu0 %v129
    %370 = vmatprep.subr.mxu0 0.0
    %371 = vmatpush2.msra.mxu0 %v128
    %372 = vmatprep.subr.mxu0 0.0
    %373 = vmatpush2.msra.mxu0 %v127
    %374 = vmatprep.subr.mxu0 0.0
    %375 = vmatpush2.msra.mxu0 %v126
    %376 = vmatprep.subr.mxu0 0.0
    %377 = vmatpush2.msra.mxu0 %v125
    %378 = vmatprep.subr.mxu0 0.0
    %379 = vmatpush2.msra.mxu0 %v124
    %380 = vmatprep.subr.mxu0 0.0
    %381 = vmatpush2.msra.mxu0 %v123
    %382 = vmatprep.subr.mxu0 0.0
    %383 = vmatpush2.msra.mxu0 %v122
    %384 = vmatprep.subr.mxu0 0.0
    %385 = vmatpush2.msra.mxu0 %v121
    %386 = vmatprep.subr.mxu0 0.0
    %387 = vmatpush2.msra.mxu0 %v120
    %388 = vmatprep.subr.mxu0 0.0
    %389 = vmatpush2.msra.mxu0 %v119
    %390 = vmatprep.mubr.f32.mxu0 %v255
    %391 = vmatmul.mubr.f32.gmra.mxu0 %v254
    %v392 = vpop.f32.mrf.mxu0
    %v393 = vadd.f32 %v323, %v392
    %v394 = vpop.f32.mrf.mxu0
    %395 = vdwg.mxu0
    %v396 = vld [vmem:[%s8] sm:$0xff]
    %v397 = vld [vmem:[%s8 + $0x8] sm:$0xff]
    %v398 = vld [vmem:[%s8 + $0x10] sm:$0xff]
    %v399 = vld [vmem:[%s8 + $0x18] sm:$0xff]
    %v400 = vld [vmem:[%s9] sm:$0xf]
    %vm401 = vcmask 31744
    %v403 = vsel %vm401, %v393, 0
    %vm405 = vcmask 1043456
    %v407 = vsel %vm405, %v400, 0
    %409 = vmatprep.subr.mxu0 0.0
    %410 = vmatpush1.msra.mxu0 0.0
    %411 = vmatprep.subr.mxu0 0.0
    %412 = vmatpush1.msra.mxu0 0.0
    %413 = vmatprep.subr.mxu0 0.0
    %414 = vmatpush1.msra.mxu0 0.0
    %415 = vmatprep.subr.mxu0 0.0
    %416 = vmatpush1.msra.mxu0 0.0
    %417 = vmatprep.subr.mxu0 0.0
    %418 = vmatpush1.msra.mxu0 0.0
    %419 = vmatprep.subr.mxu0 0.0
    %420 = vmatpush1.msra.mxu0 0.0
    %421 = vmatprep.subr.mxu0 0.0
    %422 = vmatpush1.msra.mxu0 0.0
    %423 = vmatprep.subr.mxu0 0.0
    %424 = vmatpush1.msra.mxu0 0.0
    %425 = vmatprep.subr.mxu0 0.0
    %426 = vmatpush1.msra.mxu0 0.0
    %427 = vmatprep.subr.mxu0 0.0
    %428 = vmatpush1.msra.mxu0 0.0
    %429 = vmatprep.subr.mxu0 0.0
    %430 = vmatpush1.msra.mxu0 0.0
    %431 = vmatprep.subr.mxu0 0.0
    %432 = vmatpush1.msra.mxu0 0.0
    %433 = vmatprep.subr.mxu0 0.0
    %434 = vmatpush1.msra.mxu0 0.0
    %435 = vmatprep.subr.mxu0 0.0
    %436 = vmatpush1.msra.mxu0 0.0
    %437 = vmatprep.subr.mxu0 0.0
    %438 = vmatpush1.msra.mxu0 0.0
    %439 = vmatprep.subr.mxu0 0.0
    %440 = vmatpush1.msra.mxu0 %v407
    %441 = vmatprep.subr.mxu0 0.0
    %442 = vmatpush2.msra.mxu0 0.0
    %443 = vmatprep.subr.mxu0 0.0
    %444 = vmatpush2.msra.mxu0 0.0
    %445 = vmatprep.subr.mxu0 0.0
    %446 = vmatpush2.msra.mxu0 0.0
    %447 = vmatprep.subr.mxu0 0.0
    %448 = vmatpush2.msra.mxu0 0.0
    %449 = vmatprep.subr.mxu0 0.0
    %450 = vmatpush2.msra.mxu0 0.0
    %451 = vmatprep.subr.mxu0 0.0
    %452 = vmatpush2.msra.mxu0 0.0
    %453 = vmatprep.subr.mxu0 0.0
    %454 = vmatpush2.msra.mxu0 0.0
    %455 = vmatprep.subr.mxu0 0.0
    %456 = vmatpush2.msra.mxu0 0.0
    %457 = vmatprep.subr.mxu0 0.0
    %458 = vmatpush2.msra.mxu0 0.0
    %459 = vmatprep.subr.mxu0 0.0
    %460 = vmatpush2.msra.mxu0 0.0
    %461 = vmatprep.subr.mxu0 0.0
    %462 = vmatpush2.msra.mxu0 0.0
    %463 = vmatprep.subr.mxu0 0.0
    %464 = vmatpush2.msra.mxu0 0.0
    %465 = vmatprep.subr.mxu0 0.0
    %466 = vmatpush2.msra.mxu0 0.0
    %467 = vmatprep.subr.mxu0 0.0
    %468 = vmatpush2.msra.mxu0 0.0
    %469 = vmatprep.subr.mxu0 0.0
    %470 = vmatpush2.msra.mxu0 0.0
    %471 = vmatprep.subr.mxu0 0.0
    %472 = vmatpush2.msra.mxu0 0.0
    %473 = vmatprep.mubr.f32.mxu0 0.0
    %474 = vmatmul.mubr.f32.gmra.mxu0 %v403
    %v475 = vpop.f32.mrf.mxu0
    %v476 = vadd.f32 0.0, %v475
    %v477 = vpop.f32.mrf.mxu0
    %478 = vdwg.mxu0
    %vm479 = vcmask 261120
    %v481 = vsel %vm479, %v141, 0
    %483 = vmatprep.subr.mxu0 0.0
    %484 = vmatpush1.msra.mxu0 0.0
    %485 = vmatprep.subr.mxu0 0.0
    %486 = vmatpush1.msra.mxu0 0.0
    %487 = vmatprep.subr.mxu0 0.0
    %488 = vmatpush1.msra.mxu0 0.0
    %489 = vmatprep.subr.mxu0 0.0
    %490 = vmatpush1.msra.mxu0 0.0
    %491 = vmatprep.subr.mxu0 0.0
    %492 = vmatpush1.msra.mxu0 0.0
    %493 = vmatprep.subr.mxu0 0.0
    %494 = vmatpush1.msra.mxu0 0.0
    %495 = vmatprep.subr.mxu0 0.0
    %496 = vmatpush1.msra.mxu0 0.0
    %497 = vmatprep.subr.mxu0 0.0
    %498 = vmatpush1.msra.mxu0 0.0
    %499 = vmatprep.subr.mxu0 0.0
    %500 = vmatpush1.msra.mxu0 0.0
    %501 = vmatprep.subr.mxu0 0.0
    %502 = vmatpush1.msra.mxu0 0.0
    %503 = vmatprep.subr.mxu0 0.0
    %504 = vmatpush1.msra.mxu0 0.0
    %505 = vmatprep.subr.mxu0 0.0
    %506 = vmatpush1.msra.mxu0 0.0
    %507 = vmatprep.subr.mxu0 0.0
    %508 = vmatpush1.msra.mxu0 %v399
    %509 = vmatprep.subr.mxu0 0.0
    %510 = vmatpush1.msra.mxu0 %v398
    %511 = vmatprep.subr.mxu0 0.0
    %512 = vmatpush1.msra.mxu0 %v397
    %513 = vmatprep.subr.mxu0 0.0
    %514 = vmatpush1.msra.mxu0 %v396
    %515 = vmatprep.subr.mxu0 0.0
    %516 = vmatpush2.msra.mxu0 0.0
    %517 = vmatprep.subr.mxu0 0.0
    %518 = vmatpush2.msra.mxu0 0.0
    %519 = vmatprep.subr.mxu0 0.0
    %520 = vmatpush2.msra.mxu0 0.0
    %521 = vmatprep.subr.mxu0 0.0
    %522 = vmatpush2.msra.mxu0 0.0
    %523 = vmatprep.subr.mxu0 0.0
    %524 = vmatpush2.msra.mxu0 0.0
    %525 = vmatprep.subr.mxu0 0.0
    %526 = vmatpush2.msra.mxu0 0.0
    %527 = vmatprep.subr.mxu0 0.0
    %528 = vmatpush2.msra.mxu0 0.0
    %529 = vmatprep.subr.mxu0 0.0
    %530 = vmatpush2.msra.mxu0 0.0
    %531 = vmatprep.subr.mxu0 0.0
    %532 = vmatpush2.msra.mxu0 0.0
    %533 = vmatprep.subr.mxu0 0.0
    %534 = vmatpush2.msra.mxu0 0.0
    %535 = vmatprep.subr.mxu0 0.0
    %536 = vmatpush2.msra.mxu0 0.0
    %537 = vmatprep.subr.mxu0 0.0
    %538 = vmatpush2.msra.mxu0 0.0
    %539 = vmatprep.subr.mxu0 0.0
    %540 = vmatpush2.msra.mxu0 0.0
    %541 = vmatprep.subr.mxu0 0.0
    %542 = vmatpush2.msra.mxu0 0.0
    %543 = vmatprep.subr.mxu0 0.0
    %544 = vmatpush2.msra.mxu0 0.0
    %545 = vmatprep.subr.mxu0 0.0
    %546 = vmatpush2.msra.mxu0 0.0
    %547 = vmatprep.mubr.f32.mxu0 0.0
    %548 = vmatmul.mubr.f32.gmra.mxu0 %v481
    %v549 = vpop.f32.mrf.mxu0
    %v550 = vadd.f32 %v476, %v549
    %v551 = vpop.f32.mrf.mxu0
    %552 = vdwg.mxu0
    %v553 = vld [vmem:[%s10] sm:$0x3]
    %vm554 = vcmask 15360
    %v556 = vsel %vm554, %v142, 0
    %vm558 = vcmask 1041408
    %v560 = vsel %vm558, %v553, 0
    %562 = vmatprep.subr.mxu0 0.0
    %563 = vmatpush1.msra.mxu0 0.0
    %564 = vmatprep.subr.mxu0 0.0
    %565 = vmatpush1.msra.mxu0 0.0
    %566 = vmatprep.subr.mxu0 0.0
    %567 = vmatpush1.msra.mxu0 0.0
    %568 = vmatprep.subr.mxu0 0.0
    %569 = vmatpush1.msra.mxu0 0.0
    %570 = vmatprep.subr.mxu0 0.0
    %571 = vmatpush1.msra.mxu0 0.0
    %572 = vmatprep.subr.mxu0 0.0
    %573 = vmatpush1.msra.mxu0 0.0
    %574 = vmatprep.subr.mxu0 0.0
    %575 = vmatpush1.msra.mxu0 0.0
    %576 = vmatprep.subr.mxu0 0.0
    %577 = vmatpush1.msra.mxu0 0.0
    %578 = vmatprep.subr.mxu0 0.0
    %579 = vmatpush1.msra.mxu0 0.0
    %580 = vmatprep.subr.mxu0 0.0
    %581 = vmatpush1.msra.mxu0 0.0
    %582 = vmatprep.subr.mxu0 0.0
    %583 = vmatpush1.msra.mxu0 0.0
    %584 = vmatprep.subr.mxu0 0.0
    %585 = vmatpush1.msra.mxu0 0.0
    %586 = vmatprep.subr.mxu0 0.0
    %587 = vmatpush1.msra.mxu0 0.0
    %588 = vmatprep.subr.mxu0 0.0
    %589 = vmatpush1.msra.mxu0 0.0
    %590 = vmatprep.subr.mxu0 0.0
    %591 = vmatpush1.msra.mxu0 0.0
    %592 = vmatprep.subr.mxu0 0.0
    %593 = vmatpush1.msra.mxu0 %v560
    %594 = vmatprep.subr.mxu0 0.0
    %595 = vmatpush2.msra.mxu0 0.0
    %596 = vmatprep.subr.mxu0 0.0
    %597 = vmatpush2.msra.mxu0 0.0
    %598 = vmatprep.subr.mxu0 0.0
    %599 = vmatpush2.msra.mxu0 0.0
    %600 = vmatprep.subr.mxu0 0.0
    %601 = vmatpush2.msra.mxu0 0.0
    %602 = vmatprep.subr.mxu0 0.0
    %603 = vmatpush2.msra.mxu0 0.0
    %604 = vmatprep.subr.mxu0 0.0
    %605 = vmatpush2.msra.mxu0 0.0
    %606 = vmatprep.subr.mxu0 0.0
    %607 = vmatpush2.msra.mxu0 0.0
    %608 = vmatprep.subr.mxu0 0.0
    %609 = vmatpush2.msra.mxu0 0.0
    %610 = vmatprep.subr.mxu0 0.0
    %611 = vmatpush2.msra.mxu0 0.0
    %612 = vmatprep.subr.mxu0 0.0
    %613 = vmatpush2.msra.mxu0 0.0
    %614 = vmatprep.subr.mxu0 0.0
    %615 = vmatpush2.msra.mxu0 0.0
    %616 = vmatprep.subr.mxu0 0.0
    %617 = vmatpush2.msra.mxu0 0.0
    %618 = vmatprep.subr.mxu0 0.0
    %619 = vmatpush2.msra.mxu0 0.0
    %620 = vmatprep.subr.mxu0 0.0
    %621 = vmatpush2.msra.mxu0 0.0
    %622 = vmatprep.subr.mxu0 0.0
    %623 = vmatpush2.msra.mxu0 0.0
    %624 = vmatprep.subr.mxu0 0.0
    %625 = vmatpush2.msra.mxu0 0.0
    %626 = vmatprep.mubr.f32.mxu0 0.0
    %627 = vmatmul.mubr.f32.gmra.mxu0 %v556
    %v628 = vpop.f32.mrf.mxu0
    %v629 = vadd.f32 0.0, %v628
    %v630 = vpop.f32.mrf.mxu0
    %631 = vdwg.mxu0
    %v632 = vadd.f32 %v550, %v629
    %v633 = vld [vmem:[%s11] sm:$0xff]
    %v634 = vld [vmem:[%s11 + $0x8] sm:$0xff]
    %v635 = vld [vmem:[%s11 + $0x10] sm:$0xff]
    %v636 = vld [vmem:[%s11 + $0x18] sm:$0xff]
    %v637 = vld [vmem:[%s12] sm:$0xf]
    %v639 = vsel %vm405, %v637, 0
    %641 = vmatprep.subr.mxu0 0.0
    %642 = vmatpush1.msra.mxu0 0.0
    %643 = vmatprep.subr.mxu0 0.0
    %644 = vmatpush1.msra.mxu0 0.0
    %645 = vmatprep.subr.mxu0 0.0
    %646 = vmatpush1.msra.mxu0 0.0
    %647 = vmatprep.subr.mxu0 0.0
    %648 = vmatpush1.msra.mxu0 0.0
    %649 = vmatprep.subr.mxu0 0.0
    %650 = vmatpush1.msra.mxu0 0.0
    %651 = vmatprep.subr.mxu0 0.0
    %652 = vmatpush1.msra.mxu0 0.0
    %653 = vmatprep.subr.mxu0 0.0
    %654 = vmatpush1.msra.mxu0 0.0
    %655 = vmatprep.subr.mxu0 0.0
    %656 = vmatpush1.msra.mxu0 0.0
    %657 = vmatprep.subr.mxu0 0.0
    %658 = vmatpush1.msra.mxu0 0.0
    %659 = vmatprep.subr.mxu0 0.0
    %660 = vmatpush1.msra.mxu0 0.0
    %661 = vmatprep.subr.mxu0 0.0
    %662 = vmatpush1.msra.mxu0 0.0
    %663 = vmatprep.subr.mxu0 0.0
    %664 = vmatpush1.msra.mxu0 0.0
    %665 = vmatprep.subr.mxu0 0.0
    %666 = vmatpush1.msra.mxu0 0.0
    %667 = vmatprep.subr.mxu0 0.0
    %668 = vmatpush1.msra.mxu0 0.0
    %669 = vmatprep.subr.mxu0 0.0
    %670 = vmatpush1.msra.mxu0 0.0
    %671 = vmatprep.subr.mxu0 0.0
    %672 = vmatpush1.msra.mxu0 %v639
    %673 = vmatprep.subr.mxu0 0.0
    %674 = vmatpush2.msra.mxu0 0.0
    %675 = vmatprep.subr.mxu0 0.0
    %676 = vmatpush2.msra.mxu0 0.0
    %677 = vmatprep.subr.mxu0 0.0
    %678 = vmatpush2.msra.mxu0 0.0
    %679 = vmatprep.subr.mxu0 0.0
    %680 = vmatpush2.msra.mxu0 0.0
    %681 = vmatprep.subr.mxu0 0.0
    %682 = vmatpush2.msra.mxu0 0.0
    %683 = vmatprep.subr.mxu0 0.0
    %684 = vmatpush2.msra.mxu0 0.0
    %685 = vmatprep.subr.mxu0 0.0
    %686 = vmatpush2.msra.mxu0 0.0
    %687 = vmatprep.subr.mxu0 0.0
    %688 = vmatpush2.msra.mxu0 0.0
    %689 = vmatprep.subr.mxu0 0.0
    %690 = vmatpush2.msra.mxu0 0.0
    %691 = vmatprep.subr.mxu0 0.0
    %692 = vmatpush2.msra.mxu0 0.0
    %693 = vmatprep.subr.mxu0 0.0
    %694 = vmatpush2.msra.mxu0 0.0
    %695 = vmatprep.subr.mxu0 0.0
    %696 = vmatpush2.msra.mxu0 0.0
    %697 = vmatprep.subr.mxu0 0.0
    %698 = vmatpush2.msra.mxu0 0.0
    %699 = vmatprep.subr.mxu0 0.0
    %700 = vmatpush2.msra.mxu0 0.0
    %701 = vmatprep.subr.mxu0 0.0
    %702 = vmatpush2.msra.mxu0 0.0
    %703 = vmatprep.subr.mxu0 0.0
    %704 = vmatpush2.msra.mxu0 0.0
    %705 = vmatprep.mubr.f32.mxu0 0.0
    %706 = vmatmul.mubr.f32.gmra.mxu0 %v403
    %v707 = vpop.f32.mrf.mxu0
    %v708 = vadd.f32 0.0, %v707
    %v709 = vpop.f32.mrf.mxu0
    %710 = vdwg.mxu0
    %711 = vmatprep.subr.mxu0 0.0
    %712 = vmatpush1.msra.mxu0 0.0
    %713 = vmatprep.subr.mxu0 0.0
    %714 = vmatpush1.msra.mxu0 0.0
    %715 = vmatprep.subr.mxu0 0.0
    %716 = vmatpush1.msra.mxu0 0.0
    %717 = vmatprep.subr.mxu0 0.0
    %718 = vmatpush1.msra.mxu0 0.0
    %719 = vmatprep.subr.mxu0 0.0
    %720 = vmatpush1.msra.mxu0 0.0
    %721 = vmatprep.subr.mxu0 0.0
    %722 = vmatpush1.msra.mxu0 0.0
    %723 = vmatprep.subr.mxu0 0.0
    %724 = vmatpush1.msra.mxu0 0.0
    %725 = vmatprep.subr.mxu0 0.0
    %726 = vmatpush1.msra.mxu0 0.0
    %727 = vmatprep.subr.mxu0 0.0
    %728 = vmatpush1.msra.mxu0 0.0
    %729 = vmatprep.subr.mxu0 0.0
    %730 = vmatpush1.msra.mxu0 0.0
    %731 = vmatprep.subr.mxu0 0.0
    %732 = vmatpush1.msra.mxu0 0.0
    %733 = vmatprep.subr.mxu0 0.0
    %734 = vmatpush1.msra.mxu0 0.0
    %735 = vmatprep.subr.mxu0 0.0
    %736 = vmatpush1.msra.mxu0 %v636
    %737 = vmatprep.subr.mxu0 0.0
    %738 = vmatpush1.msra.mxu0 %v635
    %739 = vmatprep.subr.mxu0 0.0
    %740 = vmatpush1.msra.mxu0 %v634
    %741 = vmatprep.subr.mxu0 0.0
    %742 = vmatpush1.msra.mxu0 %v633
    %743 = vmatprep.subr.mxu0 0.0
    %744 = vmatpush2.msra.mxu0 0.0
    %745 = vmatprep.subr.mxu0 0.0
    %746 = vmatpush2.msra.mxu0 0.0
    %747 = vmatprep.subr.mxu0 0.0
    %748 = vmatpush2.msra.mxu0 0.0
    %749 = vmatprep.subr.mxu0 0.0
    %750 = vmatpush2.msra.mxu0 0.0
    %751 = vmatprep.subr.mxu0 0.0
    %752 = vmatpush2.msra.mxu0 0.0
    %753 = vmatprep.subr.mxu0 0.0
    %754 = vmatpush2.msra.mxu0 0.0
    %755 = vmatprep.subr.mxu0 0.0
    %756 = vmatpush2.msra.mxu0 0.0
    %757 = vmatprep.subr.mxu0 0.0
    %758 = vmatpush2.msra.mxu0 0.0
    %759 = vmatprep.subr.mxu0 0.0
    %760 = vmatpush2.msra.mxu0 0.0
    %761 = vmatprep.subr.mxu0 0.0
    %762 = vmatpush2.msra.mxu0 0.0
    %763 = vmatprep.subr.mxu0 0.0
    %764 = vmatpush2.msra.mxu0 0.0
    %765 = vmatprep.subr.mxu0 0.0
    %766 = vmatpush2.msra.mxu0 0.0
    %767 = vmatprep.subr.mxu0 0.0
    %768 = vmatpush2.msra.mxu0 0.0
    %769 = vmatprep.subr.mxu0 0.0
    %770 = vmatpush2.msra.mxu0 0.0
    %771 = vmatprep.subr.mxu0 0.0
    %772 = vmatpush2.msra.mxu0 0.0
    %773 = vmatprep.subr.mxu0 0.0
    %774 = vmatpush2.msra.mxu0 0.0
    %775 = vmatprep.mubr.f32.mxu0 0.0
    %776 = vmatmul.mubr.f32.gmra.mxu0 %v481
    %v777 = vpop.f32.mrf.mxu0
    %v778 = vadd.f32 %v708, %v777
    %v779 = vpop.f32.mrf.mxu0
    %780 = vdwg.mxu0
    %v781 = vld [vmem:[%s13] sm:$0x3]
    %v783 = vsel %vm558, %v781, 0
    %785 = vmatprep.subr.mxu0 0.0
    %786 = vmatpush1.msra.mxu0 0.0
    %787 = vmatprep.subr.mxu0 0.0
    %788 = vmatpush1.msra.mxu0 0.0
    %789 = vmatprep.subr.mxu0 0.0
    %790 = vmatpush1.msra.mxu0 0.0
    %791 = vmatprep.subr.mxu0 0.0
    %792 = vmatpush1.msra.mxu0 0.0
    %793 = vmatprep.subr.mxu0 0.0
    %794 = vmatpush1.msra.mxu0 0.0
    %795 = vmatprep.subr.mxu0 0.0
    %796 = vmatpush1.msra.mxu0 0.0
    %797 = vmatprep.subr.mxu0 0.0
    %798 = vmatpush1.msra.mxu0 0.0
    %799 = vmatprep.subr.mxu0 0.0
    %800 = vmatpush1.msra.mxu0 0.0
    %801 = vmatprep.subr.mxu0 0.0
    %802 = vmatpush1.msra.mxu0 0.0
    %803 = vmatprep.subr.mxu0 0.0
    %804 = vmatpush1.msra.mxu0 0.0
    %805 = vmatprep.subr.mxu0 0.0
    %806 = vmatpush1.msra.mxu0 0.0
    %807 = vmatprep.subr.mxu0 0.0
    %808 = vmatpush1.msra.mxu0 0.0
    %809 = vmatprep.subr.mxu0 0.0
    %810 = vmatpush1.msra.mxu0 0.0
    %811 = vmatprep.subr.mxu0 0.0
    %812 = vmatpush1.msra.mxu0 0.0
    %813 = vmatprep.subr.mxu0 0.0
    %814 = vmatpush1.msra.mxu0 0.0
    %815 = vmatprep.subr.mxu0 0.0
    %816 = vmatpush1.msra.mxu0 %v783
    %817 = vmatprep.subr.mxu0 0.0
    %818 = vmatpush2.msra.mxu0 0.0
    %819 = vmatprep.subr.mxu0 0.0
    %820 = vmatpush2.msra.mxu0 0.0
    %821 = vmatprep.subr.mxu0 0.0
    %822 = vmatpush2.msra.mxu0 0.0
    %823 = vmatprep.subr.mxu0 0.0
    %824 = vmatpush2.msra.mxu0 0.0
    %825 = vmatprep.subr.mxu0 0.0
    %826 = vmatpush2.msra.mxu0 0.0
    %827 = vmatprep.subr.mxu0 0.0
    %828 = vmatpush2.msra.mxu0 0.0
    %829 = vmatprep.subr.mxu0 0.0
    %830 = vmatpush2.msra.mxu0 0.0
    %831 = vmatprep.subr.mxu0 0.0
    %832 = vmatpush2.msra.mxu0 0.0
    %833 = vmatprep.subr.mxu0 0.0
    %834 = vmatpush2.msra.mxu0 0.0
    %835 = vmatprep.subr.mxu0 0.0
    %836 = vmatpush2.msra.mxu0 0.0
    %837 = vmatprep.subr.mxu0 0.0
    %838 = vmatpush2.msra.mxu0 0.0
    %839 = vmatprep.subr.mxu0 0.0
    %840 = vmatpush2.msra.mxu0 0.0
    %841 = vmatprep.subr.mxu0 0.0
    %842 = vmatpush2.msra.mxu0 0.0
    %843 = vmatprep.subr.mxu0 0.0
    %844 = vmatpush2.msra.mxu0 0.0
    %845 = vmatprep.subr.mxu0 0.0
    %846 = vmatpush2.msra.mxu0 0.0
    %847 = vmatprep.subr.mxu0 0.0
    %848 = vmatpush2.msra.mxu0 0.0
    %849 = vmatprep.mubr.f32.mxu0 0.0
    %850 = vmatmul.mubr.f32.gmra.mxu0 %v556
    %v851 = vpop.f32.mrf.mxu0
    %v852 = vadd.f32 0.0, %v851
    %v853 = vpop.f32.mrf.mxu0
    %854 = vdwg.mxu0
    %v855 = vadd.f32 %v778, %v852
    %vm856 = vcmask 48128
    %v858 = vsel %vm856, %v70, 0
    %vm860 = vcmask 1045504
    %v862 = vsel %vm860, %v855, 0
    %864 = vmatprep.subr.mxu0 0.0
    %865 = vmatpush1.msra.mxu0 0.0
    %866 = vmatprep.subr.mxu0 0.0
    %867 = vmatpush1.msra.mxu0 0.0
    %868 = vmatprep.subr.mxu0 0.0
    %869 = vmatpush1.msra.mxu0 0.0
    %870 = vmatprep.subr.mxu0 0.0
    %871 = vmatpush1.msra.mxu0 0.0
    %872 = vmatprep.subr.mxu0 0.0
    %873 = vmatpush1.msra.mxu0 0.0
    %874 = vmatprep.subr.mxu0 0.0
    %875 = vmatpush1.msra.mxu0 0.0
    %876 = vmatprep.subr.mxu0 0.0
    %877 = vmatpush1.msra.mxu0 0.0
    %878 = vmatprep.subr.mxu0 0.0
    %879 = vmatpush1.msra.mxu0 0.0
    %880 = vmatprep.subr.mxu0 0.0
    %881 = vmatpush1.msra.mxu0 0.0
    %882 = vmatprep.subr.mxu0 0.0
    %883 = vmatpush1.msra.mxu0 0.0
    %884 = vmatprep.subr.mxu0 0.0
    %885 = vmatpush1.msra.mxu0 0.0
    %886 = vmatprep.subr.mxu0 0.0
    %887 = vmatpush1.msra.mxu0 0.0
    %888 = vmatprep.subr.mxu0 0.0
    %889 = vmatpush1.msra.mxu0 0.0
    %890 = vmatprep.subr.mxu0 0.0
    %891 = vmatpush1.msra.mxu0 0.0
    %892 = vmatprep.subr.mxu0 0.0
    %893 = vmatpush1.msra.mxu0 0.0
    %894 = vmatprep.subr.mxu0 0.0
    %895 = vmatpush1.msra.mxu0 %v862
    %896 = vmatprep.subr.mxu0 0.0
    %897 = vmatpush2.msra.mxu0 0.0
    %898 = vmatprep.subr.mxu0 0.0
    %899 = vmatpush2.msra.mxu0 0.0
    %900 = vmatprep.subr.mxu0 0.0
    %901 = vmatpush2.msra.mxu0 0.0
    %902 = vmatprep.subr.mxu0 0.0
    %903 = vmatpush2.msra.mxu0 0.0
    %904 = vmatprep.subr.mxu0 0.0
    %905 = vmatpush2.msra.mxu0 0.0
    %906 = vmatprep.subr.mxu0 0.0
    %907 = vmatpush2.msra.mxu0 0.0
    %908 = vmatprep.subr.mxu0 0.0
    %909 = vmatpush2.msra.mxu0 0.0
    %910 = vmatprep.subr.mxu0 0.0
    %911 = vmatpush2.msra.mxu0 0.0
    %912 = vmatprep.subr.mxu0 0.0
    %913 = vmatpush2.msra.mxu0 0.0
    %914 = vmatprep.subr.mxu0 0.0
    %915 = vmatpush2.msra.mxu0 0.0
    %916 = vmatprep.subr.mxu0 0.0
    %917 = vmatpush2.msra.mxu0 0.0
    %918 = vmatprep.subr.mxu0 0.0
    %919 = vmatpush2.msra.mxu0 0.0
    %920 = vmatprep.subr.mxu0 0.0
    %921 = vmatpush2.msra.mxu0 0.0
    %922 = vmatprep.subr.mxu0 0.0
    %923 = vmatpush2.msra.mxu0 0.0
    %924 = vmatprep.subr.mxu0 0.0
    %925 = vmatpush2.msra.mxu0 0.0
    %926 = vmatprep.subr.mxu0 0.0
    %927 = vmatpush2.msra.mxu0 0.0
    %928 = vmatprep.mubr.f32.mxu0 0.0
    %929 = vmatmul.mubr.f32.gmra.mxu0 %v858
    %v930 = vpop.f32.mrf.mxu0
    %v931 = vadd.f32 0.0, %v930
    %v932 = vpop.f32.mrf.mxu0
    %933 = vdwg.mxu0
    %v934 = vadd.f32 %v632, %v931
    %v935 = vld [vmem:[%s14] sm:$0x1]
    %v937 = vlaneseq
    %v938 = vshrl.u32 %v937, 7
    %v939 = vsub.s32 0, %v938
    %v940 = vrot.slane %v935, %v939
    %v942 = vadd.f32 %v934, %v940
    %v943 = vmax.f32 %v942, 0.0
    %v944 = vld [vmem:[%s15] sm:$0xff]
    %v945 = vld [vmem:[%s15 + $0x8] sm:$0xff]
    %v946 = vld [vmem:[%s15 + $0x10] sm:$0xff]
    %v947 = vld [vmem:[%s15 + $0x18] sm:$0xff]
    %v948 = vld [vmem:[%s16] sm:$0xff]
    %v949 = vld [vmem:[%s16 + $0x8] sm:$0xff]
    %v950 = vld [vmem:[%s16 + $0x10] sm:$0xff]
    %v951 = vld [vmem:[%s16 + $0x18] sm:$0xff]
    %v953 = vsel %vm479, %v943, 0
    %955 = vmatprep.subr.mxu0 0.0
    %956 = vmatpush1.msra.mxu0 0.0
    %957 = vmatprep.subr.mxu0 0.0
    %958 = vmatpush1.msra.mxu0 0.0
    %959 = vmatprep.subr.mxu0 0.0
    %960 = vmatpush1.msra.mxu0 0.0
    %961 = vmatprep.subr.mxu0 0.0
    %962 = vmatpush1.msra.mxu0 0.0
    %963 = vmatprep.subr.mxu0 0.0
    %964 = vmatpush1.msra.mxu0 0.0
    %965 = vmatprep.subr.mxu0 0.0
    %966 = vmatpush1.msra.mxu0 0.0
    %967 = vmatprep.subr.mxu0 0.0
    %968 = vmatpush1.msra.mxu0 0.0
    %969 = vmatprep.subr.mxu0 0.0
    %970 = vmatpush1.msra.mxu0 0.0
    %971 = vmatprep.subr.mxu0 0.0
    %972 = vmatpush1.msra.mxu0 0.0
    %973 = vmatprep.subr.mxu0 0.0
    %974 = vmatpush1.msra.mxu0 0.0
    %975 = vmatprep.subr.mxu0 0.0
    %976 = vmatpush1.msra.mxu0 0.0
    %977 = vmatprep.subr.mxu0 0.0
    %978 = vmatpush1.msra.mxu0 0.0
    %979 = vmatprep.subr.mxu0 0.0
    %980 = vmatpush1.msra.mxu0 %v951
    %981 = vmatprep.subr.mxu0 0.0
    %982 = vmatpush1.msra.mxu0 %v950
    %983 = vmatprep.subr.mxu0 0.0
    %984 = vmatpush1.msra.mxu0 %v949
    %985 = vmatprep.subr.mxu0 0.0
    %986 = vmatpush1.msra.mxu0 %v948
    %987 = vmatprep.subr.mxu0 0.0
    %988 = vmatpush2.msra.mxu0 0.0
    %989 = vmatprep.subr.mxu0 0.0
    %990 = vmatpush2.msra.mxu0 0.0
    %991 = vmatprep.subr.mxu0 0.0
    %992 = vmatpush2.msra.mxu0 0.0
    %993 = vmatprep.subr.mxu0 0.0
    %994 = vmatpush2.msra.mxu0 0.0
    %995 = vmatprep.subr.mxu0 0.0
    %996 = vmatpush2.msra.mxu0 0.0
    %997 = vmatprep.subr.mxu0 0.0
    %998 = vmatpush2.msra.mxu0 0.0
    %999 = vmatprep.subr.mxu0 0.0
    %1000 = vmatpush2.msra.mxu0 0.0
    %1001 = vmatprep.subr.mxu0 0.0
    %1002 = vmatpush2.msra.mxu0 0.0
    %1003 = vmatprep.subr.mxu0 0.0
    %1004 = vmatpush2.msra.mxu0 0.0
    %1005 = vmatprep.subr.mxu0 0.0
    %1006 = vmatpush2.msra.mxu0 0.0
    %1007 = vmatprep.subr.mxu0 0.0
    %1008 = vmatpush2.msra.mxu0 0.0
    %1009 = vmatprep.subr.mxu0 0.0
    %1010 = vmatpush2.msra.mxu0 0.0
    %1011 = vmatprep.subr.mxu0 0.0
    %1012 = vmatpush2.msra.mxu0 0.0
    %1013 = vmatprep.subr.mxu0 0.0
    %1014 = vmatpush2.msra.mxu0 0.0
    %1015 = vmatprep.subr.mxu0 0.0
    %1016 = vmatpush2.msra.mxu0 0.0
    %1017 = vmatprep.subr.mxu0 0.0
    %1018 = vmatpush2.msra.mxu0 0.0
    %1019 = vmatprep.mubr.f32.mxu0 0.0
    %1020 = vmatmul.mubr.f32.gmra.mxu0 %v953
    %v1021 = vpop.f32.mrf.mxu0
    %v1022 = vadd.f32 0.0, %v1021
    %v1023 = vpop.f32.mrf.mxu0
    %1024 = vdwg.mxu0
    %v1026 = vsel %vm860, %v1022, 0
    %1028 = vmatprep.subr.mxu0 0.0
    %1029 = vmatpush1.msra.mxu0 0.0
    %1030 = vmatprep.subr.mxu0 0.0
    %1031 = vmatpush1.msra.mxu0 0.0
    %1032 = vmatprep.subr.mxu0 0.0
    %1033 = vmatpush1.msra.mxu0 0.0
    %1034 = vmatprep.subr.mxu0 0.0
    %1035 = vmatpush1.msra.mxu0 0.0
    %1036 = vmatprep.subr.mxu0 0.0
    %1037 = vmatpush1.msra.mxu0 0.0
    %1038 = vmatprep.subr.mxu0 0.0
    %1039 = vmatpush1.msra.mxu0 0.0
    %1040 = vmatprep.subr.mxu0 0.0
    %1041 = vmatpush1.msra.mxu0 0.0
    %1042 = vmatprep.subr.mxu0 0.0
    %1043 = vmatpush1.msra.mxu0 0.0
    %1044 = vmatprep.subr.mxu0 0.0
    %1045 = vmatpush1.msra.mxu0 0.0
    %1046 = vmatprep.subr.mxu0 0.0
    %1047 = vmatpush1.msra.mxu0 0.0
    %1048 = vmatprep.subr.mxu0 0.0
    %1049 = vmatpush1.msra.mxu0 0.0
    %1050 = vmatprep.subr.mxu0 0.0
    %1051 = vmatpush1.msra.mxu0 0.0
    %1052 = vmatprep.subr.mxu0 0.0
    %1053 = vmatpush1.msra.mxu0 0.0
    %1054 = vmatprep.subr.mxu0 0.0
    %1055 = vmatpush1.msra.mxu0 0.0
    %1056 = vmatprep.subr.mxu0 0.0
    %1057 = vmatpush1.msra.mxu0 0.0
    %1058 = vmatprep.subr.mxu0 0.0
    %1059 = vmatpush1.msra.mxu0 %v1026
    %1060 = vmatprep.subr.mxu0 0.0
    %1061 = vmatpush2.msra.mxu0 0.0
    %1062 = vmatprep.subr.mxu0 0.0
    %1063 = vmatpush2.msra.mxu0 0.0
    %1064 = vmatprep.subr.mxu0 0.0
    %1065 = vmatpush2.msra.mxu0 0.0
    %1066 = vmatprep.subr.mxu0 0.0
    %1067 = vmatpush2.msra.mxu0 0.0
    %1068 = vmatprep.subr.mxu0 0.0
    %1069 = vmatpush2.msra.mxu0 0.0
    %1070 = vmatprep.subr.mxu0 0.0
    %1071 = vmatpush2.msra.mxu0 0.0
    %1072 = vmatprep.subr.mxu0 0.0
    %1073 = vmatpush2.msra.mxu0 0.0
    %1074 = vmatprep.subr.mxu0 0.0
    %1075 = vmatpush2.msra.mxu0 0.0
    %1076 = vmatprep.subr.mxu0 0.0
    %1077 = vmatpush2.msra.mxu0 0.0
    %1078 = vmatprep.subr.mxu0 0.0
    %1079 = vmatpush2.msra.mxu0 0.0
    %1080 = vmatprep.subr.mxu0 0.0
    %1081 = vmatpush2.msra.mxu0 0.0
    %1082 = vmatprep.subr.mxu0 0.0
    %1083 = vmatpush2.msra.mxu0 0.0
    %1084 = vmatprep.subr.mxu0 0.0
    %1085 = vmatpush2.msra.mxu0 0.0
    %1086 = vmatprep.subr.mxu0 0.0
    %1087 = vmatpush2.msra.mxu0 0.0
    %1088 = vmatprep.subr.mxu0 0.0
    %1089 = vmatpush2.msra.mxu0 0.0
    %1090 = vmatprep.subr.mxu0 0.0
    %1091 = vmatpush2.msra.mxu0 0.0
    %1092 = vmatprep.mubr.f32.mxu0 0.0
    %1093 = vmatmul.mubr.f32.gmra.mxu0 %v858
    %v1094 = vpop.f32.mrf.mxu0
    %v1095 = vadd.f32 0.0, %v1094
    %v1096 = vpop.f32.mrf.mxu0
    %1097 = vdwg.mxu0
    %1098 = vmatprep.subr.mxu0 0.0
    %1099 = vmatpush1.msra.mxu0 0.0
    %1100 = vmatprep.subr.mxu0 0.0
    %1101 = vmatpush1.msra.mxu0 0.0
    %1102 = vmatprep.subr.mxu0 0.0
    %1103 = vmatpush1.msra.mxu0 0.0
    %1104 = vmatprep.subr.mxu0 0.0
    %1105 = vmatpush1.msra.mxu0 0.0
    %1106 = vmatprep.subr.mxu0 0.0
    %1107 = vmatpush1.msra.mxu0 0.0
    %1108 = vmatprep.subr.mxu0 0.0
    %1109 = vmatpush1.msra.mxu0 0.0
    %1110 = vmatprep.subr.mxu0 0.0
    %1111 = vmatpush1.msra.mxu0 0.0
    %1112 = vmatprep.subr.mxu0 0.0
    %1113 = vmatpush1.msra.mxu0 0.0
    %1114 = vmatprep.subr.mxu0 0.0
    %1115 = vmatpush1.msra.mxu0 0.0
    %1116 = vmatprep.subr.mxu0 0.0
    %1117 = vmatpush1.msra.mxu0 0.0
    %1118 = vmatprep.subr.mxu0 0.0
    %1119 = vmatpush1.msra.mxu0 0.0
    %1120 = vmatprep.subr.mxu0 0.0
    %1121 = vmatpush1.msra.mxu0 0.0
    %1122 = vmatprep.subr.mxu0 0.0
    %1123 = vmatpush1.msra.mxu0 %v947
    %1124 = vmatprep.subr.mxu0 0.0
    %1125 = vmatpush1.msra.mxu0 %v946
    %1126 = vmatprep.subr.mxu0 0.0
    %1127 = vmatpush1.msra.mxu0 %v945
    %1128 = vmatprep.subr.mxu0 0.0
    %1129 = vmatpush1.msra.mxu0 %v944
    %1130 = vmatprep.subr.mxu0 0.0
    %1131 = vmatpush2.msra.mxu0 0.0
    %1132 = vmatprep.subr.mxu0 0.0
    %1133 = vmatpush2.msra.mxu0 0.0
    %1134 = vmatprep.subr.mxu0 0.0
    %1135 = vmatpush2.msra.mxu0 0.0
    %1136 = vmatprep.subr.mxu0 0.0
    %1137 = vmatpush2.msra.mxu0 0.0
    %1138 = vmatprep.subr.mxu0 0.0
    %1139 = vmatpush2.msra.mxu0 0.0
    %1140 = vmatprep.subr.mxu0 0.0
    %1141 = vmatpush2.msra.mxu0 0.0
    %1142 = vmatprep.subr.mxu0 0.0
    %1143 = vmatpush2.msra.mxu0 0.0
    %1144 = vmatprep.subr.mxu0 0.0
    %1145 = vmatpush2.msra.mxu0 0.0
    %1146 = vmatprep.subr.mxu0 0.0
    %1147 = vmatpush2.msra.mxu0 0.0
    %1148 = vmatprep.subr.mxu0 0.0
    %1149 = vmatpush2.msra.mxu0 0.0
    %1150 = vmatprep.subr.mxu0 0.0
    %1151 = vmatpush2.msra.mxu0 0.0
    %1152 = vmatprep.subr.mxu0 0.0
    %1153 = vmatpush2.msra.mxu0 0.0
    %1154 = vmatprep.subr.mxu0 0.0
    %1155 = vmatpush2.msra.mxu0 0.0
    %1156 = vmatprep.subr.mxu0 0.0
    %1157 = vmatpush2.msra.mxu0 0.0
    %1158 = vmatprep.subr.mxu0 0.0
    %1159 = vmatpush2.msra.mxu0 0.0
    %1160 = vmatprep.subr.mxu0 0.0
    %1161 = vmatpush2.msra.mxu0 0.0
    %1162 = vmatprep.mubr.f32.mxu0 0.0
    %1163 = vmatmul.mubr.f32.gmra.mxu0 %v953
    %v1164 = vpop.f32.mrf.mxu0
    %v1165 = vadd.f32 %v1095, %v1164
    %v1166 = vpop.f32.mrf.mxu0
    %1167 = vdwg.mxu0
    %v1168 = vld [vmem:[%s17] sm:$0x1]
    %v1170 = vlaneseq
    %v1171 = vshrl.u32 %v1170, 7
    %v1172 = vsub.s32 0, %v1171
    %v1173 = vrot.slane %v1168, %v1172
    %v1175 = vadd.f32 %v1165, %v1173
    %v1176 = vmax.f32 %v1175, 0.0
    %v1177 = vld [vmem:[%s18] sm:$0xff]
    %v1178 = vld [vmem:[%s18 + $0x8] sm:$0xff]
    %v1179 = vld [vmem:[%s18 + $0x10] sm:$0xff]
    %v1180 = vld [vmem:[%s18 + $0x18] sm:$0xff]
    %v1181 = vld [vmem:[%s19] sm:$0x1]
    %v1183 = vlaneseq
    %v1184 = vshrl.u32 %v1183, 7
    %v1185 = vsub.s32 0, %v1184
    %v1186 = vrot.slane %v1181, %v1185
    %v1189 = vsel %vm479, %v1176, 0
    %1191 = vmatprep.subr.mxu0 0.0
    %1192 = vmatpush1.msra.mxu0 0.0
    %1193 = vmatprep.subr.mxu0 0.0
    %1194 = vmatpush1.msra.mxu0 0.0
    %1195 = vmatprep.subr.mxu0 0.0
    %1196 = vmatpush1.msra.mxu0 0.0
    %1197 = vmatprep.subr.mxu0 0.0
    %1198 = vmatpush1.msra.mxu0 0.0
    %1199 = vmatprep.subr.mxu0 0.0
    %1200 = vmatpush1.msra.mxu0 0.0
    %1201 = vmatprep.subr.mxu0 0.0
    %1202 = vmatpush1.msra.mxu0 0.0
    %1203 = vmatprep.subr.mxu0 0.0
    %1204 = vmatpush1.msra.mxu0 0.0
    %1205 = vmatprep.subr.mxu0 0.0
    %1206 = vmatpush1.msra.mxu0 0.0
    %1207 = vmatprep.subr.mxu0 0.0
    %1208 = vmatpush1.msra.mxu0 0.0
    %1209 = vmatprep.subr.mxu0 0.0
    %1210 = vmatpush1.msra.mxu0 0.0
    %1211 = vmatprep.subr.mxu0 0.0
    %1212 = vmatpush1.msra.mxu0 0.0
    %1213 = vmatprep.subr.mxu0 0.0
    %1214 = vmatpush1.msra.mxu0 0.0
    %1215 = vmatprep.subr.mxu0 0.0
    %1216 = vmatpush1.msra.mxu0 %v1180
    %1217 = vmatprep.subr.mxu0 0.0
    %1218 = vmatpush1.msra.mxu0 %v1179
    %1219 = vmatprep.subr.mxu0 0.0
    %1220 = vmatpush1.msra.mxu0 %v1178
    %1221 = vmatprep.subr.mxu0 0.0
    %1222 = vmatpush1.msra.mxu0 %v1177
    %1223 = vmatprep.subr.mxu0 0.0
    %1224 = vmatpush2.msra.mxu0 0.0
    %1225 = vmatprep.subr.mxu0 0.0
    %1226 = vmatpush2.msra.mxu0 0.0
    %1227 = vmatprep.subr.mxu0 0.0
    %1228 = vmatpush2.msra.mxu0 0.0
    %1229 = vmatprep.subr.mxu0 0.0
    %1230 = vmatpush2.msra.mxu0 0.0
    %1231 = vmatprep.subr.mxu0 0.0
    %1232 = vmatpush2.msra.mxu0 0.0
    %1233 = vmatprep.subr.mxu0 0.0
    %1234 = vmatpush2.msra.mxu0 0.0
    %1235 = vmatprep.subr.mxu0 0.0
    %1236 = vmatpush2.msra.mxu0 0.0
    %1237 = vmatprep.subr.mxu0 0.0
    %1238 = vmatpush2.msra.mxu0 0.0
    %1239 = vmatprep.subr.mxu0 0.0
    %1240 = vmatpush2.msra.mxu0 0.0
    %1241 = vmatprep.subr.mxu0 0.0
    %1242 = vmatpush2.msra.mxu0 0.0
    %1243 = vmatprep.subr.mxu0 0.0
    %1244 = vmatpush2.msra.mxu0 0.0
    %1245 = vmatprep.subr.mxu0 0.0
    %1246 = vmatpush2.msra.mxu0 0.0
    %1247 = vmatprep.subr.mxu0 0.0
    %1248 = vmatpush2.msra.mxu0 0.0
    %1249 = vmatprep.subr.mxu0 0.0
    %1250 = vmatpush2.msra.mxu0 0.0
    %1251 = vmatprep.subr.mxu0 0.0
    %1252 = vmatpush2.msra.mxu0 0.0
    %1253 = vmatprep.subr.mxu0 0.0
    %1254 = vmatpush2.msra.mxu0 0.0
    %1255 = vmatprep.mubr.f32.mxu0 0.0
    %1256 = vmatmul.mubr.f32.gmra.mxu0 %v1189
    %v1257 = vpop.f32.mrf.mxu0
    %v1258 = vadd.f32 %v1186, %v1257
    %v1259 = vpop.f32.mrf.mxu0
    %1260 = vdwg.mxu0
    %v1261 = vtanh.pop %v1258
    %v1262 = vadd.f32 %v1261, 1.0
    %v1263 = vmul.f32 %v1262, 0.5
    %v1264 = vmul.f32 %v1263, 15.0
    %v1265 = vfloor.f32 %v1264
    %v1266 = vmax.f32 %v1265, 0.0
    %v1267 = vmin.f32 %v1266, 15.0
    %v1268 = vadd.f32 %v1267, 1.0
    %v1269 = vmax.f32 %v1268, 0.0
    %v1270 = vmin.f32 %v1269, 15.0
    %v1271 = vsub.f32 %v1264, %v1267
    %v1272 = vcvt.f32.s32.to.zero.pseudo %v1267
    %v1273 = vcvt.f32.s32.to.zero.pseudo %v1270
    %v1274 = vmul.u32 %v1272, 16
    %1275 = vrot.lane.b32.xlu0 %v1274, 127
    %v1276 = vpop.permute.xlu0 %1275
    %v1277 = vadd.s32 %v135, %v1276
    %v1278 = vadd.s32 %v1277, %v1272
    %v1279 = vadd.s32 %v1277, %v1273
    %v1280 = vmul.u32 %v1273, 16
    %1281 = vrot.lane.b32.xlu0 %v1280, 127
    %v1282 = vpop.permute.xlu0 %1281
    %v1283 = vadd.s32 %v135, %v1282
    %v1284 = vadd.s32 %v1283, %v1272
    %v1285 = vadd.s32 %v1283, %v1273
    %v1286 = vsub.f32 1.0, %v1271
    %1288 = vrot.lane.b32.xlu0 %v1286, 127
    %v1289 = vpop.permute.xlu0 %1288
    %v1291 = vmul.f32 %v1286, %v1289
    %v1292 = vmul.f32 %v1271, %v1289
    %1294 = vrot.lane.b32.xlu0 %v1271, 127
    %v1295 = vpop.permute.xlu0 %1294
    %v1297 = vmul.f32 %v1286, %v1295
    %v1298 = vmul.f32 %v1271, %v1295
    %1299 = vset.pattern.permute.xlu0 0
    %1300 = vperm.xlu0 %1299, %v1278
    %v1301 = vpop.permute.xlu0 %1300
    %vm1302 = vcmp.eq.s32.totalorder %v137, %v1301
    %vm1303 = vcmp.eq.s32.totalorder %v138, %v1301
    %vm1304 = vcmp.eq.s32.totalorder %v139, %v1301
    %vm1305 = vcmp.eq.s32.totalorder %v140, %v1301
    %1307 = vset.pattern.permute.xlu0 0
    %1308 = vperm.xlu0 %1307, %v1291
    %v1309 = vpop.permute.xlu0 %1308
    %v1311 = vsel %vm1302, %v1309, 0.0
    %v1312 = vsel %vm1303, %v1309, 0.0
    %v1313 = vsel %vm1304, %v1309, 0.0
    %v1314 = vsel %vm1305, %v1309, 0.0
    %1315 = vset.pattern.permute.xlu0 0
    %1316 = vperm.xlu0 %1315, %v1279
    %v1317 = vpop.permute.xlu0 %1316
    %vm1318 = vcmp.eq.s32.totalorder %v137, %v1317
    %vm1319 = vcmp.eq.s32.totalorder %v138, %v1317
    %vm1320 = vcmp.eq.s32.totalorder %v139, %v1317
    %vm1321 = vcmp.eq.s32.totalorder %v140, %v1317
    %1323 = vset.pattern.permute.xlu0 0
    %1324 = vperm.xlu0 %1323, %v1292
    %v1325 = vpop.permute.xlu0 %1324
    %v1327 = vsel %vm1318, %v1325, 0.0
    %v1328 = vsel %vm1319, %v1325, 0.0
    %v1329 = vsel %vm1320, %v1325, 0.0
    %v1330 = vsel %vm1321, %v1325, 0.0
    %v1331 = vadd.f32 %v1311, %v1327
    %v1332 = vadd.f32 %v1312, %v1328
    %v1333 = vadd.f32 %v1313, %v1329
    %v1334 = vadd.f32 %v1314, %v1330
    %1335 = vset.pattern.permute.xlu0 0
    %1336 = vperm.xlu0 %1335, %v1284
    %v1337 = vpop.permute.xlu0 %1336
    %vm1338 = vcmp.eq.s32.totalorder %v137, %v1337
    %vm1339 = vcmp.eq.s32.totalorder %v138, %v1337
    %vm1340 = vcmp.eq.s32.totalorder %v139, %v1337
    %vm1341 = vcmp.eq.s32.totalorder %v140, %v1337
    %1343 = vset.pattern.permute.xlu0 0
    %1344 = vperm.xlu0 %1343, %v1297
    %v1345 = vpop.permute.xlu0 %1344
    %v1347 = vsel %vm1338, %v1345, 0.0
    %v1348 = vsel %vm1339, %v1345, 0.0
    %v1349 = vsel %vm1340, %v1345, 0.0
    %v1350 = vsel %vm1341, %v1345, 0.0
    %v1351 = vadd.f32 %v1331, %v1347
    %v1352 = vadd.f32 %v1332, %v1348
    %v1353 = vadd.f32 %v1333, %v1349
    %v1354 = vadd.f32 %v1334, %v1350
    %1355 = vset.pattern.permute.xlu0 0
    %1356 = vperm.xlu0 %1355, %v1285
    %v1357 = vpop.permute.xlu0 %1356
    %vm1358 = vcmp.eq.s32.totalorder %v137, %v1357
    %vm1359 = vcmp.eq.s32.totalorder %v138, %v1357
    %vm1360 = vcmp.eq.s32.totalorder %v139, %v1357
    %vm1361 = vcmp.eq.s32.totalorder %v140, %v1357
    %1363 = vset.pattern.permute.xlu0 0
    %1364 = vperm.xlu0 %1363, %v1298
    %v1365 = vpop.permute.xlu0 %1364
    %v1367 = vsel %vm1358, %v1365, 0.0
    %v1368 = vsel %vm1359, %v1365, 0.0
    %v1369 = vsel %vm1360, %v1365, 0.0
    %v1370 = vsel %vm1361, %v1365, 0.0
    %v1371 = vadd.f32 %v1351, %v1367
    %v1372 = vadd.f32 %v1352, %v1368
    %v1373 = vadd.f32 %v1353, %v1369
    %v1374 = vadd.f32 %v1354, %v1370
    %1375 = vmatprep.subr.mxu0 0.0
    %1376 = vmatpush1.msra.mxu0 %v86
    %1377 = vmatprep.subr.mxu0 0.0
    %1378 = vmatpush1.msra.mxu0 %v85
    %1379 = vmatprep.subr.mxu0 0.0
    %1380 = vmatpush1.msra.mxu0 %v84
    %1381 = vmatprep.subr.mxu0 0.0
    %1382 = vmatpush1.msra.mxu0 %v83
    %1383 = vmatprep.subr.mxu0 0.0
    %1384 = vmatpush1.msra.mxu0 %v82
    %1385 = vmatprep.subr.mxu0 0.0
    %1386 = vmatpush1.msra.mxu0 %v81
    %1387 = vmatprep.subr.mxu0 0.0
    %1388 = vmatpush1.msra.mxu0 %v80
    %1389 = vmatprep.subr.mxu0 0.0
    %1390 = vmatpush1.msra.mxu0 %v79
    %1391 = vmatprep.subr.mxu0 0.0
    %1392 = vmatpush1.msra.mxu0 %v78
    %1393 = vmatprep.subr.mxu0 0.0
    %1394 = vmatpush1.msra.mxu0 %v77
    %1395 = vmatprep.subr.mxu0 0.0
    %1396 = vmatpush1.msra.mxu0 %v76
    %1397 = vmatprep.subr.mxu0 0.0
    %1398 = vmatpush1.msra.mxu0 %v75
    %1399 = vmatprep.subr.mxu0 0.0
    %1400 = vmatpush1.msra.mxu0 %v74
    %1401 = vmatprep.subr.mxu0 0.0
    %1402 = vmatpush1.msra.mxu0 %v73
    %1403 = vmatprep.subr.mxu0 0.0
    %1404 = vmatpush1.msra.mxu0 %v72
    %1405 = vmatprep.subr.mxu0 0.0
    %1406 = vmatpush1.msra.mxu0 %v71
    %1407 = vmatprep.subr.mxu0 0.0
    %1408 = vmatpush2.msra.mxu0 %v102
    %1409 = vmatprep.subr.mxu0 0.0
    %1410 = vmatpush2.msra.mxu0 %v101
    %1411 = vmatprep.subr.mxu0 0.0
    %1412 = vmatpush2.msra.mxu0 %v100
    %1413 = vmatprep.subr.mxu0 0.0
    %1414 = vmatpush2.msra.mxu0 %v99
    %1415 = vmatprep.subr.mxu0 0.0
    %1416 = vmatpush2.msra.mxu0 %v98
    %1417 = vmatprep.subr.mxu0 0.0
    %1418 = vmatpush2.msra.mxu0 %v97
    %1419 = vmatprep.subr.mxu0 0.0
    %1420 = vmatpush2.msra.mxu0 %v96
    %1421 = vmatprep.subr.mxu0 0.0
    %1422 = vmatpush2.msra.mxu0 %v95
    %1423 = vmatprep.subr.mxu0 0.0
    %1424 = vmatpush2.msra.mxu0 %v94
    %1425 = vmatprep.subr.mxu0 0.0
    %1426 = vmatpush2.msra.mxu0 %v93
    %1427 = vmatprep.subr.mxu0 0.0
    %1428 = vmatpush2.msra.mxu0 %v92
    %1429 = vmatprep.subr.mxu0 0.0
    %1430 = vmatpush2.msra.mxu0 %v91
    %1431 = vmatprep.subr.mxu0 0.0
    %1432 = vmatpush2.msra.mxu0 %v90
    %1433 = vmatprep.subr.mxu0 0.0
    %1434 = vmatpush2.msra.mxu0 %v89
    %1435 = vmatprep.subr.mxu0 0.0
    %1436 = vmatpush2.msra.mxu0 %v88
    %1437 = vmatprep.subr.mxu0 0.0
    %1438 = vmatpush2.msra.mxu0 %v87
    %1439 = vmatprep.mubr.f32.mxu0 %v1372
    %1440 = vmatmul.mubr.f32.gmra.mxu0 %v1371
    %v1441 = vpop.f32.mrf.mxu0
    %v1442 = vadd.f32 0.0, %v1441
    %v1443 = vpop.f32.mrf.mxu0
    %1444 = vdwg.mxu0
    %1445 = vmatprep.subr.mxu0 0.0
    %1446 = vmatpush1.msra.mxu0 %v118
    %1447 = vmatprep.subr.mxu0 0.0
    %1448 = vmatpush1.msra.mxu0 %v117
    %1449 = vmatprep.subr.mxu0 0.0
    %1450 = vmatpush1.msra.mxu0 %v116
    %1451 = vmatprep.subr.mxu0 0.0
    %1452 = vmatpush1.msra.mxu0 %v115
    %1453 = vmatprep.subr.mxu0 0.0
    %1454 = vmatpush1.msra.mxu0 %v114
    %1455 = vmatprep.subr.mxu0 0.0
    %1456 = vmatpush1.msra.mxu0 %v113
    %1457 = vmatprep.subr.mxu0 0.0
    %1458 = vmatpush1.msra.mxu0 %v112
    %1459 = vmatprep.subr.mxu0 0.0
    %1460 = vmatpush1.msra.mxu0 %v111
    %1461 = vmatprep.subr.mxu0 0.0
    %1462 = vmatpush1.msra.mxu0 %v110
    %1463 = vmatprep.subr.mxu0 0.0
    %1464 = vmatpush1.msra.mxu0 %v109
    %1465 = vmatprep.subr.mxu0 0.0
    %1466 = vmatpush1.msra.mxu0 %v108
    %1467 = vmatprep.subr.mxu0 0.0
    %1468 = vmatpush1.msra.mxu0 %v107
    %1469 = vmatprep.subr.mxu0 0.0
    %1470 = vmatpush1.msra.mxu0 %v106
    %1471 = vmatprep.subr.mxu0 0.0
    %1472 = vmatpush1.msra.mxu0 %v105
    %1473 = vmatprep.subr.mxu0 0.0
    %1474 = vmatpush1.msra.mxu0 %v104
    %1475 = vmatprep.subr.mxu0 0.0
    %1476 = vmatpush1.msra.mxu0 %v103
    %1477 = vmatprep.subr.mxu0 0.0
    %1478 = vmatpush2.msra.mxu0 %v134
    %1479 = vmatprep.subr.mxu0 0.0
    %1480 = vmatpush2.msra.mxu0 %v133
    %1481 = vmatprep.subr.mxu0 0.0
    %1482 = vmatpush2.msra.mxu0 %v132
    %1483 = vmatprep.subr.mxu0 0.0
    %1484 = vmatpush2.msra.mxu0 %v131
    %1485 = vmatprep.subr.mxu0 0.0
    %1486 = vmatpush2.msra.mxu0 %v130
    %1487 = vmatprep.subr.mxu0 0.0
    %1488 = vmatpush2.msra.mxu0 %v129
    %1489 = vmatprep.subr.mxu0 0.0
    %1490 = vmatpush2.msra.mxu0 %v128
    %1491 = vmatprep.subr.mxu0 0.0
    %1492 = vmatpush2.msra.mxu0 %v127
    %1493 = vmatprep.subr.mxu0 0.0
    %1494 = vmatpush2.msra.mxu0 %v126
    %1495 = vmatprep.subr.mxu0 0.0
    %1496 = vmatpush2.msra.mxu0 %v125
    %1497 = vmatprep.subr.mxu0 0.0
    %1498 = vmatpush2.msra.mxu0 %v124
    %1499 = vmatprep.subr.mxu0 0.0
    %1500 = vmatpush2.msra.mxu0 %v123
    %1501 = vmatprep.subr.mxu0 0.0
    %1502 = vmatpush2.msra.mxu0 %v122
    %1503 = vmatprep.subr.mxu0 0.0
    %1504 = vmatpush2.msra.mxu0 %v121
    %1505 = vmatprep.subr.mxu0 0.0
    %1506 = vmatpush2.msra.mxu0 %v120
    %1507 = vmatprep.subr.mxu0 0.0
    %1508 = vmatpush2.msra.mxu0 %v119
    %1509 = vmatprep.mubr.f32.mxu0 %v1374
    %1510 = vmatmul.mubr.f32.gmra.mxu0 %v1373
    %v1511 = vpop.f32.mrf.mxu0
    %v1512 = vadd.f32 %v1442, %v1511
    %v1513 = vpop.f32.mrf.mxu0
    %1514 = vdwg.mxu0
    %s1515 = scalar_lea.vmem %s8, 32
    %v1516 = vld [vmem:[%s1515] sm:$0xff]
    %v1517 = vld [vmem:[%s1515 + $0x8] sm:$0xff]
    %v1518 = vld [vmem:[%s1515 + $0x10] sm:$0xff]
    %v1519 = vld [vmem:[%s1515 + $0x18] sm:$0xff]
    %s1520 = scalar_lea.vmem %s9, 4
    %v1521 = vld [vmem:[%s1520] sm:$0xf]
    %v1523 = vsel %vm401, %v1512, 0
    %v1526 = vsel %vm405, %v1521, 0
    %1528 = vmatprep.subr.mxu0 0.0
    %1529 = vmatpush1.msra.mxu0 0.0
    %1530 = vmatprep.subr.mxu0 0.0
    %1531 = vmatpush1.msra.mxu0 0.0
    %1532 = vmatprep.subr.mxu0 0.0
    %1533 = vmatpush1.msra.mxu0 0.0
    %1534 = vmatprep.subr.mxu0 0.0
    %1535 = vmatpush1.msra.mxu0 0.0
    %1536 = vmatprep.subr.mxu0 0.0
    %1537 = vmatpush1.msra.mxu0 0.0
    %1538 = vmatprep.subr.mxu0 0.0
    %1539 = vmatpush1.msra.mxu0 0.0
    %1540 = vmatprep.subr.mxu0 0.0
    %1541 = vmatpush1.msra.mxu0 0.0
    %1542 = vmatprep.subr.mxu0 0.0
    %1543 = vmatpush1.msra.mxu0 0.0
    %1544 = vmatprep.subr.mxu0 0.0
    %1545 = vmatpush1.msra.mxu0 0.0
    %1546 = vmatprep.subr.mxu0 0.0
    %1547 = vmatpush1.msra.mxu0 0.0
    %1548 = vmatprep.subr.mxu0 0.0
    %1549 = vmatpush1.msra.mxu0 0.0
    %1550 = vmatprep.subr.mxu0 0.0
    %1551 = vmatpush1.msra.mxu0 0.0
    %1552 = vmatprep.subr.mxu0 0.0
    %1553 = vmatpush1.msra.mxu0 0.0
    %1554 = vmatprep.subr.mxu0 0.0
    %1555 = vmatpush1.msra.mxu0 0.0
    %1556 = vmatprep.subr.mxu0 0.0
    %1557 = vmatpush1.msra.mxu0 0.0
    %1558 = vmatprep.subr.mxu0 0.0
    %1559 = vmatpush1.msra.mxu0 %v1526
    %1560 = vmatprep.subr.mxu0 0.0
    %1561 = vmatpush2.msra.mxu0 0.0
    %1562 = vmatprep.subr.mxu0 0.0
    %1563 = vmatpush2.msra.mxu0 0.0
    %1564 = vmatprep.subr.mxu0 0.0
    %1565 = vmatpush2.msra.mxu0 0.0
    %1566 = vmatprep.subr.mxu0 0.0
    %1567 = vmatpush2.msra.mxu0 0.0
    %1568 = vmatprep.subr.mxu0 0.0
    %1569 = vmatpush2.msra.mxu0 0.0
    %1570 = vmatprep.subr.mxu0 0.0
    %1571 = vmatpush2.msra.mxu0 0.0
    %1572 = vmatprep.subr.mxu0 0.0
    %1573 = vmatpush2.msra.mxu0 0.0
    %1574 = vmatprep.subr.mxu0 0.0
    %1575 = vmatpush2.msra.mxu0 0.0
    %1576 = vmatprep.subr.mxu0 0.0
    %1577 = vmatpush2.msra.mxu0 0.0
    %1578 = vmatprep.subr.mxu0 0.0
    %1579 = vmatpush2.msra.mxu0 0.0
    %1580 = vmatprep.subr.mxu0 0.0
    %1581 = vmatpush2.msra.mxu0 0.0
    %1582 = vmatprep.subr.mxu0 0.0
    %1583 = vmatpush2.msra.mxu0 0.0
    %1584 = vmatprep.subr.mxu0 0.0
    %1585 = vmatpush2.msra.mxu0 0.0
    %1586 = vmatprep.subr.mxu0 0.0
    %1587 = vmatpush2.msra.mxu0 0.0
    %1588 = vmatprep.subr.mxu0 0.0
    %1589 = vmatpush2.msra.mxu0 0.0
    %1590 = vmatprep.subr.mxu0 0.0
    %1591 = vmatpush2.msra.mxu0 0.0
    %1592 = vmatprep.mubr.f32.mxu0 0.0
    %1593 = vmatmul.mubr.f32.gmra.mxu0 %v1523
    %v1594 = vpop.f32.mrf.mxu0
    %v1595 = vadd.f32 0.0, %v1594
    %v1596 = vpop.f32.mrf.mxu0
    %1597 = vdwg.mxu0
    %1598 = vmatprep.subr.mxu0 0.0
    %1599 = vmatpush1.msra.mxu0 0.0
    %1600 = vmatprep.subr.mxu0 0.0
    %1601 = vmatpush1.msra.mxu0 0.0
    %1602 = vmatprep.subr.mxu0 0.0
    %1603 = vmatpush1.msra.mxu0 0.0
    %1604 = vmatprep.subr.mxu0 0.0
    %1605 = vmatpush1.msra.mxu0 0.0
    %1606 = vmatprep.subr.mxu0 0.0
    %1607 = vmatpush1.msra.mxu0 0.0
    %1608 = vmatprep.subr.mxu0 0.0
    %1609 = vmatpush1.msra.mxu0 0.0
    %1610 = vmatprep.subr.mxu0 0.0
    %1611 = vmatpush1.msra.mxu0 0.0
    %1612 = vmatprep.subr.mxu0 0.0
    %1613 = vmatpush1.msra.mxu0 0.0
    %1614 = vmatprep.subr.mxu0 0.0
    %1615 = vmatpush1.msra.mxu0 0.0
    %1616 = vmatprep.subr.mxu0 0.0
    %1617 = vmatpush1.msra.mxu0 0.0
    %1618 = vmatprep.subr.mxu0 0.0
    %1619 = vmatpush1.msra.mxu0 0.0
    %1620 = vmatprep.subr.mxu0 0.0
    %1621 = vmatpush1.msra.mxu0 0.0
    %1622 = vmatprep.subr.mxu0 0.0
    %1623 = vmatpush1.msra.mxu0 %v1519
    %1624 = vmatprep.subr.mxu0 0.0
    %1625 = vmatpush1.msra.mxu0 %v1518
    %1626 = vmatprep.subr.mxu0 0.0
    %1627 = vmatpush1.msra.mxu0 %v1517
    %1628 = vmatprep.subr.mxu0 0.0
    %1629 = vmatpush1.msra.mxu0 %v1516
    %1630 = vmatprep.subr.mxu0 0.0
    %1631 = vmatpush2.msra.mxu0 0.0
    %1632 = vmatprep.subr.mxu0 0.0
    %1633 = vmatpush2.msra.mxu0 0.0
    %1634 = vmatprep.subr.mxu0 0.0
    %1635 = vmatpush2.msra.mxu0 0.0
    %1636 = vmatprep.subr.mxu0 0.0
    %1637 = vmatpush2.msra.mxu0 0.0
    %1638 = vmatprep.subr.mxu0 0.0
    %1639 = vmatpush2.msra.mxu0 0.0
    %1640 = vmatprep.subr.mxu0 0.0
    %1641 = vmatpush2.msra.mxu0 0.0
    %1642 = vmatprep.subr.mxu0 0.0
    %1643 = vmatpush2.msra.mxu0 0.0
    %1644 = vmatprep.subr.mxu0 0.0
    %1645 = vmatpush2.msra.mxu0 0.0
    %1646 = vmatprep.subr.mxu0 0.0
    %1647 = vmatpush2.msra.mxu0 0.0
    %1648 = vmatprep.subr.mxu0 0.0
    %1649 = vmatpush2.msra.mxu0 0.0
    %1650 = vmatprep.subr.mxu0 0.0
    %1651 = vmatpush2.msra.mxu0 0.0
    %1652 = vmatprep.subr.mxu0 0.0
    %1653 = vmatpush2.msra.mxu0 0.0
    %1654 = vmatprep.subr.mxu0 0.0
    %1655 = vmatpush2.msra.mxu0 0.0
    %1656 = vmatprep.subr.mxu0 0.0
    %1657 = vmatpush2.msra.mxu0 0.0
    %1658 = vmatprep.subr.mxu0 0.0
    %1659 = vmatpush2.msra.mxu0 0.0
    %1660 = vmatprep.subr.mxu0 0.0
    %1661 = vmatpush2.msra.mxu0 0.0
    %1662 = vmatprep.mubr.f32.mxu0 0.0
    %1663 = vmatmul.mubr.f32.gmra.mxu0 %v1189
    %v1664 = vpop.f32.mrf.mxu0
    %v1665 = vadd.f32 %v1595, %v1664
    %v1666 = vpop.f32.mrf.mxu0
    %1667 = vdwg.mxu0
    %s1668 = scalar_lea.vmem %s10, 2
    %v1669 = vld [vmem:[%s1668] sm:$0x3]
    %v1671 = vsel %vm554, %v1261, 0
    %v1674 = vsel %vm558, %v1669, 0
    %1676 = vmatprep.subr.mxu0 0.0
    %1677 = vmatpush1.msra.mxu0 0.0
    %1678 = vmatprep.subr.mxu0 0.0
    %1679 = vmatpush1.msra.mxu0 0.0
    %1680 = vmatprep.subr.mxu0 0.0
    %1681 = vmatpush1.msra.mxu0 0.0
    %1682 = vmatprep.subr.mxu0 0.0
    %1683 = vmatpush1.msra.mxu0 0.0
    %1684 = vmatprep.subr.mxu0 0.0
    %1685 = vmatpush1.msra.mxu0 0.0
    %1686 = vmatprep.subr.mxu0 0.0
    %1687 = vmatpush1.msra.mxu0 0.0
    %1688 = vmatprep.subr.mxu0 0.0
    %1689 = vmatpush1.msra.mxu0 0.0
    %1690 = vmatprep.subr.mxu0 0.0
    %1691 = vmatpush1.msra.mxu0 0.0
    %1692 = vmatprep.subr.mxu0 0.0
    %1693 = vmatpush1.msra.mxu0 0.0
    %1694 = vmatprep.subr.mxu0 0.0
    %1695 = vmatpush1.msra.mxu0 0.0
    %1696 = vmatprep.subr.mxu0 0.0
    %1697 = vmatpush1.msra.mxu0 0.0
    %1698 = vmatprep.subr.mxu0 0.0
    %1699 = vmatpush1.msra.mxu0 0.0
    %1700 = vmatprep.subr.mxu0 0.0
    %1701 = vmatpush1.msra.mxu0 0.0
    %1702 = vmatprep.subr.mxu0 0.0
    %1703 = vmatpush1.msra.mxu0 0.0
    %1704 = vmatprep.subr.mxu0 0.0
    %1705 = vmatpush1.msra.mxu0 0.0
    %1706 = vmatprep.subr.mxu0 0.0
    %1707 = vmatpush1.msra.mxu0 %v1674
    %1708 = vmatprep.subr.mxu0 0.0
    %1709 = vmatpush2.msra.mxu0 0.0
    %1710 = vmatprep.subr.mxu0 0.0
    %1711 = vmatpush2.msra.mxu0 0.0
    %1712 = vmatprep.subr.mxu0 0.0
    %1713 = vmatpush2.msra.mxu0 0.0
    %1714 = vmatprep.subr.mxu0 0.0
    %1715 = vmatpush2.msra.mxu0 0.0
    %1716 = vmatprep.subr.mxu0 0.0
    %1717 = vmatpush2.msra.mxu0 0.0
    %1718 = vmatprep.subr.mxu0 0.0
    %1719 = vmatpush2.msra.mxu0 0.0
    %1720 = vmatprep.subr.mxu0 0.0
    %1721 = vmatpush2.msra.mxu0 0.0
    %1722 = vmatprep.subr.mxu0 0.0
    %1723 = vmatpush2.msra.mxu0 0.0
    %1724 = vmatprep.subr.mxu0 0.0
    %1725 = vmatpush2.msra.mxu0 0.0
    %1726 = vmatprep.subr.mxu0 0.0
    %1727 = vmatpush2.msra.mxu0 0.0
    %1728 = vmatprep.subr.mxu0 0.0
    %1729 = vmatpush2.msra.mxu0 0.0
    %1730 = vmatprep.subr.mxu0 0.0
    %1731 = vmatpush2.msra.mxu0 0.0
    %1732 = vmatprep.subr.mxu0 0.0
    %1733 = vmatpush2.msra.mxu0 0.0
    %1734 = vmatprep.subr.mxu0 0.0
    %1735 = vmatpush2.msra.mxu0 0.0
    %1736 = vmatprep.subr.mxu0 0.0
    %1737 = vmatpush2.msra.mxu0 0.0
    %1738 = vmatprep.subr.mxu0 0.0
    %1739 = vmatpush2.msra.mxu0 0.0
    %1740 = vmatprep.mubr.f32.mxu0 0.0
    %1741 = vmatmul.mubr.f32.gmra.mxu0 %v1671
    %v1742 = vpop.f32.mrf.mxu0
    %v1743 = vadd.f32 0.0, %v1742
    %v1744 = vpop.f32.mrf.mxu0
    %1745 = vdwg.mxu0
    %v1746 = vadd.f32 %v1665, %v1743
    %s1747 = scalar_lea.vmem %s11, 32
    %v1748 = vld [vmem:[%s1747] sm:$0xff]
    %v1749 = vld [vmem:[%s1747 + $0x8] sm:$0xff]
    %v1750 = vld [vmem:[%s1747 + $0x10] sm:$0xff]
    %v1751 = vld [vmem:[%s1747 + $0x18] sm:$0xff]
    %s1752 = scalar_lea.vmem %s12, 4
    %v1753 = vld [vmem:[%s1752] sm:$0xf]
    %v1755 = vsel %vm405, %v1753, 0
    %1757 = vmatprep.subr.mxu0 0.0
    %1758 = vmatpush1.msra.mxu0 0.0
    %1759 = vmatprep.subr.mxu0 0.0
    %1760 = vmatpush1.msra.mxu0 0.0
    %1761 = vmatprep.subr.mxu0 0.0
    %1762 = vmatpush1.msra.mxu0 0.0
    %1763 = vmatprep.subr.mxu0 0.0
    %1764 = vmatpush1.msra.mxu0 0.0
    %1765 = vmatprep.subr.mxu0 0.0
    %1766 = vmatpush1.msra.mxu0 0.0
    %1767 = vmatprep.subr.mxu0 0.0
    %1768 = vmatpush1.msra.mxu0 0.0
    %1769 = vmatprep.subr.mxu0 0.0
    %1770 = vmatpush1.msra.mxu0 0.0
    %1771 = vmatprep.subr.mxu0 0.0
    %1772 = vmatpush1.msra.mxu0 0.0
    %1773 = vmatprep.subr.mxu0 0.0
    %1774 = vmatpush1.msra.mxu0 0.0
    %1775 = vmatprep.subr.mxu0 0.0
    %1776 = vmatpush1.msra.mxu0 0.0
    %1777 = vmatprep.subr.mxu0 0.0
    %1778 = vmatpush1.msra.mxu0 0.0
    %1779 = vmatprep.subr.mxu0 0.0
    %1780 = vmatpush1.msra.mxu0 0.0
    %1781 = vmatprep.subr.mxu0 0.0
    %1782 = vmatpush1.msra.mxu0 0.0
    %1783 = vmatprep.subr.mxu0 0.0
    %1784 = vmatpush1.msra.mxu0 0.0
    %1785 = vmatprep.subr.mxu0 0.0
    %1786 = vmatpush1.msra.mxu0 0.0
    %1787 = vmatprep.subr.mxu0 0.0
    %1788 = vmatpush1.msra.mxu0 %v1755
    %1789 = vmatprep.subr.mxu0 0.0
    %1790 = vmatpush2.msra.mxu0 0.0
    %1791 = vmatprep.subr.mxu0 0.0
    %1792 = vmatpush2.msra.mxu0 0.0
    %1793 = vmatprep.subr.mxu0 0.0
    %1794 = vmatpush2.msra.mxu0 0.0
    %1795 = vmatprep.subr.mxu0 0.0
    %1796 = vmatpush2.msra.mxu0 0.0
    %1797 = vmatprep.subr.mxu0 0.0
    %1798 = vmatpush2.msra.mxu0 0.0
    %1799 = vmatprep.subr.mxu0 0.0
    %1800 = vmatpush2.msra.mxu0 0.0
    %1801 = vmatprep.subr.mxu0 0.0
    %1802 = vmatpush2.msra.mxu0 0.0
    %1803 = vmatprep.subr.mxu0 0.0
    %1804 = vmatpush2.msra.mxu0 0.0
    %1805 = vmatprep.subr.mxu0 0.0
    %1806 = vmatpush2.msra.mxu0 0.0
    %1807 = vmatprep.subr.mxu0 0.0
    %1808 = vmatpush2.msra.mxu0 0.0
    %1809 = vmatprep.subr.mxu0 0.0
    %1810 = vmatpush2.msra.mxu0 0.0
    %1811 = vmatprep.subr.mxu0 0.0
    %1812 = vmatpush2.msra.mxu0 0.0
    %1813 = vmatprep.subr.mxu0 0.0
    %1814 = vmatpush2.msra.mxu0 0.0
    %1815 = vmatprep.subr.mxu0 0.0
    %1816 = vmatpush2.msra.mxu0 0.0
    %1817 = vmatprep.subr.mxu0 0.0
    %1818 = vmatpush2.msra.mxu0 0.0
    %1819 = vmatprep.subr.mxu0 0.0
    %1820 = vmatpush2.msra.mxu0 0.0
    %1821 = vmatprep.mubr.f32.mxu0 0.0
    %1822 = vmatmul.mubr.f32.gmra.mxu0 %v1523
    %v1823 = vpop.f32.mrf.mxu0
    %v1824 = vadd.f32 0.0, %v1823
    %v1825 = vpop.f32.mrf.mxu0
    %1826 = vdwg.mxu0
    %1827 = vmatprep.subr.mxu0 0.0
    %1828 = vmatpush1.msra.mxu0 0.0
    %1829 = vmatprep.subr.mxu0 0.0
    %1830 = vmatpush1.msra.mxu0 0.0
    %1831 = vmatprep.subr.mxu0 0.0
    %1832 = vmatpush1.msra.mxu0 0.0
    %1833 = vmatprep.subr.mxu0 0.0
    %1834 = vmatpush1.msra.mxu0 0.0
    %1835 = vmatprep.subr.mxu0 0.0
    %1836 = vmatpush1.msra.mxu0 0.0
    %1837 = vmatprep.subr.mxu0 0.0
    %1838 = vmatpush1.msra.mxu0 0.0
    %1839 = vmatprep.subr.mxu0 0.0
    %1840 = vmatpush1.msra.mxu0 0.0
    %1841 = vmatprep.subr.mxu0 0.0
    %1842 = vmatpush1.msra.mxu0 0.0
    %1843 = vmatprep.subr.mxu0 0.0
    %1844 = vmatpush1.msra.mxu0 0.0
    %1845 = vmatprep.subr.mxu0 0.0
    %1846 = vmatpush1.msra.mxu0 0.0
    %1847 = vmatprep.subr.mxu0 0.0
    %1848 = vmatpush1.msra.mxu0 0.0
    %1849 = vmatprep.subr.mxu0 0.0
    %1850 = vmatpush1.msra.mxu0 0.0
    %1851 = vmatprep.subr.mxu0 0.0
    %1852 = vmatpush1.msra.mxu0 %v1751
    %1853 = vmatprep.subr.mxu0 0.0
    %1854 = vmatpush1.msra.mxu0 %v1750
    %1855 = vmatprep.subr.mxu0 0.0
    %1856 = vmatpush1.msra.mxu0 %v1749
    %1857 = vmatprep.subr.mxu0 0.0
    %1858 = vmatpush1.msra.mxu0 %v1748
    %1859 = vmatprep.subr.mxu0 0.0
    %1860 = vmatpush2.msra.mxu0 0.0
    %1861 = vmatprep.subr.mxu0 0.0
    %1862 = vmatpush2.msra.mxu0 0.0
    %1863 = vmatprep.subr.mxu0 0.0
    %1864 = vmatpush2.msra.mxu0 0.0
    %1865 = vmatprep.subr.mxu0 0.0
    %1866 = vmatpush2.msra.mxu0 0.0
    %1867 = vmatprep.subr.mxu0 0.0
    %1868 = vmatpush2.msra.mxu0 0.0
    %1869 = vmatprep.subr.mxu0 0.0
    %1870 = vmatpush2.msra.mxu0 0.0
    %1871 = vmatprep.subr.mxu0 0.0
    %1872 = vmatpush2.msra.mxu0 0.0
    %1873 = vmatprep.subr.mxu0 0.0
    %1874 = vmatpush2.msra.mxu0 0.0
    %1875 = vmatprep.subr.mxu0 0.0
    %1876 = vmatpush2.msra.mxu0 0.0
    %1877 = vmatprep.subr.mxu0 0.0
    %1878 = vmatpush2.msra.mxu0 0.0
    %1879 = vmatprep.subr.mxu0 0.0
    %1880 = vmatpush2.msra.mxu0 0.0
    %1881 = vmatprep.subr.mxu0 0.0
    %1882 = vmatpush2.msra.mxu0 0.0
    %1883 = vmatprep.subr.mxu0 0.0
    %1884 = vmatpush2.msra.mxu0 0.0
    %1885 = vmatprep.subr.mxu0 0.0
    %1886 = vmatpush2.msra.mxu0 0.0
    %1887 = vmatprep.subr.mxu0 0.0
    %1888 = vmatpush2.msra.mxu0 0.0
    %1889 = vmatprep.subr.mxu0 0.0
    %1890 = vmatpush2.msra.mxu0 0.0
    %1891 = vmatprep.mubr.f32.mxu0 0.0
    %1892 = vmatmul.mubr.f32.gmra.mxu0 %v1189
    %v1893 = vpop.f32.mrf.mxu0
    %v1894 = vadd.f32 %v1824, %v1893
    %v1895 = vpop.f32.mrf.mxu0
    %1896 = vdwg.mxu0
    %s1897 = scalar_lea.vmem %s13, 2
    %v1898 = vld [vmem:[%s1897] sm:$0x3]
    %v1900 = vsel %vm558, %v1898, 0
    %1902 = vmatprep.subr.mxu0 0.0
    %1903 = vmatpush1.msra.mxu0 0.0
    %1904 = vmatprep.subr.mxu0 0.0
    %1905 = vmatpush1.msra.mxu0 0.0
    %1906 = vmatprep.subr.mxu0 0.0
    %1907 = vmatpush1.msra.mxu0 0.0
    %1908 = vmatprep.subr.mxu0 0.0
    %1909 = vmatpush1.msra.mxu0 0.0
    %1910 = vmatprep.subr.mxu0 0.0
    %1911 = vmatpush1.msra.mxu0 0.0
    %1912 = vmatprep.subr.mxu0 0.0
    %1913 = vmatpush1.msra.mxu0 0.0
    %1914 = vmatprep.subr.mxu0 0.0
    %1915 = vmatpush1.msra.mxu0 0.0
    %1916 = vmatprep.subr.mxu0 0.0
    %1917 = vmatpush1.msra.mxu0 0.0
    %1918 = vmatprep.subr.mxu0 0.0
    %1919 = vmatpush1.msra.mxu0 0.0
    %1920 = vmatprep.subr.mxu0 0.0
    %1921 = vmatpush1.msra.mxu0 0.0
    %1922 = vmatprep.subr.mxu0 0.0
    %1923 = vmatpush1.msra.mxu0 0.0
    %1924 = vmatprep.subr.mxu0 0.0
    %1925 = vmatpush1.msra.mxu0 0.0
    %1926 = vmatprep.subr.mxu0 0.0
    %1927 = vmatpush1.msra.mxu0 0.0
    %1928 = vmatprep.subr.mxu0 0.0
    %1929 = vmatpush1.msra.mxu0 0.0
    %1930 = vmatprep.subr.mxu0 0.0
    %1931 = vmatpush1.msra.mxu0 0.0
    %1932 = vmatprep.subr.mxu0 0.0
    %1933 = vmatpush1.msra.mxu0 %v1900
    %1934 = vmatprep.subr.mxu0 0.0
    %1935 = vmatpush2.msra.mxu0 0.0
    %1936 = vmatprep.subr.mxu0 0.0
    %1937 = vmatpush2.msra.mxu0 0.0
    %1938 = vmatprep.subr.mxu0 0.0
    %1939 = vmatpush2.msra.mxu0 0.0
    %1940 = vmatprep.subr.mxu0 0.0
    %1941 = vmatpush2.msra.mxu0 0.0
    %1942 = vmatprep.subr.mxu0 0.0
    %1943 = vmatpush2.msra.mxu0 0.0
    %1944 = vmatprep.subr.mxu0 0.0
    %1945 = vmatpush2.msra.mxu0 0.0
    %1946 = vmatprep.subr.mxu0 0.0
    %1947 = vmatpush2.msra.mxu0 0.0
    %1948 = vmatprep.subr.mxu0 0.0
    %1949 = vmatpush2.msra.mxu0 0.0
    %1950 = vmatprep.subr.mxu0 0.0
    %1951 = vmatpush2.msra.mxu0 0.0
    %1952 = vmatprep.subr.mxu0 0.0
    %1953 = vmatpush2.msra.mxu0 0.0
    %1954 = vmatprep.subr.mxu0 0.0
    %1955 = vmatpush2.msra.mxu0 0.0
    %1956 = vmatprep.subr.mxu0 0.0
    %1957 = vmatpush2.msra.mxu0 0.0
    %1958 = vmatprep.subr.mxu0 0.0
    %1959 = vmatpush2.msra.mxu0 0.0
    %1960 = vmatprep.subr.mxu0 0.0
    %1961 = vmatpush2.msra.mxu0 0.0
    %1962 = vmatprep.subr.mxu0 0.0
    %1963 = vmatpush2.msra.mxu0 0.0
    %1964 = vmatprep.subr.mxu0 0.0
    %1965 = vmatpush2.msra.mxu0 0.0
    %1966 = vmatprep.mubr.f32.mxu0 0.0
    %1967 = vmatmul.mubr.f32.gmra.mxu0 %v1671
    %v1968 = vpop.f32.mrf.mxu0
    %v1969 = vadd.f32 0.0, %v1968
    %v1970 = vpop.f32.mrf.mxu0
    %1971 = vdwg.mxu0
    %v1972 = vadd.f32 %v1894, %v1969
    %v1974 = vsel %vm860, %v1972, 0
    %1976 = vmatprep.subr.mxu0 0.0
    %1977 = vmatpush1.msra.mxu0 0.0
    %1978 = vmatprep.subr.mxu0 0.0
    %1979 = vmatpush1.msra.mxu0 0.0
    %1980 = vmatprep.subr.mxu0 0.0
    %1981 = vmatpush1.msra.mxu0 0.0
    %1982 = vmatprep.subr.mxu0 0.0
    %1983 = vmatpush1.msra.mxu0 0.0
    %1984 = vmatprep.subr.mxu0 0.0
    %1985 = vmatpush1.msra.mxu0 0.0
    %1986 = vmatprep.subr.mxu0 0.0
    %1987 = vmatpush1.msra.mxu0 0.0
    %1988 = vmatprep.subr.mxu0 0.0
    %1989 = vmatpush1.msra.mxu0 0.0
    %1990 = vmatprep.subr.mxu0 0.0
    %1991 = vmatpush1.msra.mxu0 0.0
    %1992 = vmatprep.subr.mxu0 0.0
    %1993 = vmatpush1.msra.mxu0 0.0
    %1994 = vmatprep.subr.mxu0 0.0
    %1995 = vmatpush1.msra.mxu0 0.0
    %1996 = vmatprep.subr.mxu0 0.0
    %1997 = vmatpush1.msra.mxu0 0.0
    %1998 = vmatprep.subr.mxu0 0.0
    %1999 = vmatpush1.msra.mxu0 0.0
    %2000 = vmatprep.subr.mxu0 0.0
    %2001 = vmatpush1.msra.mxu0 0.0
    %2002 = vmatprep.subr.mxu0 0.0
    %2003 = vmatpush1.msra.mxu0 0.0
    %2004 = vmatprep.subr.mxu0 0.0
    %2005 = vmatpush1.msra.mxu0 0.0
    %2006 = vmatprep.subr.mxu0 0.0
    %2007 = vmatpush1.msra.mxu0 %v1974
    %2008 = vmatprep.subr.mxu0 0.0
    %2009 = vmatpush2.msra.mxu0 0.0
    %2010 = vmatprep.subr.mxu0 0.0
    %2011 = vmatpush2.msra.mxu0 0.0
    %2012 = vmatprep.subr.mxu0 0.0
    %2013 = vmatpush2.msra.mxu0 0.0
    %2014 = vmatprep.subr.mxu0 0.0
    %2015 = vmatpush2.msra.mxu0 0.0
    %2016 = vmatprep.subr.mxu0 0.0
    %2017 = vmatpush2.msra.mxu0 0.0
    %2018 = vmatprep.subr.mxu0 0.0
    %2019 = vmatpush2.msra.mxu0 0.0
    %2020 = vmatprep.subr.mxu0 0.0
    %2021 = vmatpush2.msra.mxu0 0.0
    %2022 = vmatprep.subr.mxu0 0.0
    %2023 = vmatpush2.msra.mxu0 0.0
    %2024 = vmatprep.subr.mxu0 0.0
    %2025 = vmatpush2.msra.mxu0 0.0
    %2026 = vmatprep.subr.mxu0 0.0
    %2027 = vmatpush2.msra.mxu0 0.0
    %2028 = vmatprep.subr.mxu0 0.0
    %2029 = vmatpush2.msra.mxu0 0.0
    %2030 = vmatprep.subr.mxu0 0.0
    %2031 = vmatpush2.msra.mxu0 0.0
    %2032 = vmatprep.subr.mxu0 0.0
    %2033 = vmatpush2.msra.mxu0 0.0
    %2034 = vmatprep.subr.mxu0 0.0
    %2035 = vmatpush2.msra.mxu0 0.0
    %2036 = vmatprep.subr.mxu0 0.0
    %2037 = vmatpush2.msra.mxu0 0.0
    %2038 = vmatprep.subr.mxu0 0.0
    %2039 = vmatpush2.msra.mxu0 0.0
    %2040 = vmatprep.mubr.f32.mxu0 0.0
    %2041 = vmatmul.mubr.f32.gmra.mxu0 %v858
    %v2042 = vpop.f32.mrf.mxu0
    %v2043 = vadd.f32 0.0, %v2042
    %v2044 = vpop.f32.mrf.mxu0
    %2045 = vdwg.mxu0
    %v2046 = vadd.f32 %v1746, %v2043
    %s2047 = scalar_lea.vmem %s14, 1
    %v2048 = vld [vmem:[%s2047] sm:$0x1]
    %v2050 = vlaneseq
    %v2051 = vshrl.u32 %v2050, 7
    %v2052 = vsub.s32 0, %v2051
    %v2053 = vrot.slane %v2048, %v2052
    %v2055 = vadd.f32 %v2046, %v2053
    %v2056 = vmax.f32 %v2055, 0.0
    %s2057 = scalar_lea.vmem %s15, 32
    %v2058 = vld [vmem:[%s2057] sm:$0xff]
    %v2059 = vld [vmem:[%s2057 + $0x8] sm:$0xff]
    %v2060 = vld [vmem:[%s2057 + $0x10] sm:$0xff]
    %v2061 = vld [vmem:[%s2057 + $0x18] sm:$0xff]
    %s2062 = scalar_lea.vmem %s16, 32
    %v2063 = vld [vmem:[%s2062] sm:$0xff]
    %v2064 = vld [vmem:[%s2062 + $0x8] sm:$0xff]
    %v2065 = vld [vmem:[%s2062 + $0x10] sm:$0xff]
    %v2066 = vld [vmem:[%s2062 + $0x18] sm:$0xff]
    %v2068 = vsel %vm479, %v2056, 0
    %2070 = vmatprep.subr.mxu0 0.0
    %2071 = vmatpush1.msra.mxu0 0.0
    %2072 = vmatprep.subr.mxu0 0.0
    %2073 = vmatpush1.msra.mxu0 0.0
    %2074 = vmatprep.subr.mxu0 0.0
    %2075 = vmatpush1.msra.mxu0 0.0
    %2076 = vmatprep.subr.mxu0 0.0
    %2077 = vmatpush1.msra.mxu0 0.0
    %2078 = vmatprep.subr.mxu0 0.0
    %2079 = vmatpush1.msra.mxu0 0.0
    %2080 = vmatprep.subr.mxu0 0.0
    %2081 = vmatpush1.msra.mxu0 0.0
    %2082 = vmatprep.subr.mxu0 0.0
    %2083 = vmatpush1.msra.mxu0 0.0
    %2084 = vmatprep.subr.mxu0 0.0
    %2085 = vmatpush1.msra.mxu0 0.0
    %2086 = vmatprep.subr.mxu0 0.0
    %2087 = vmatpush1.msra.mxu0 0.0
    %2088 = vmatprep.subr.mxu0 0.0
    %2089 = vmatpush1.msra.mxu0 0.0
    %2090 = vmatprep.subr.mxu0 0.0
    %2091 = vmatpush1.msra.mxu0 0.0
    %2092 = vmatprep.subr.mxu0 0.0
    %2093 = vmatpush1.msra.mxu0 0.0
    %2094 = vmatprep.subr.mxu0 0.0
    %2095 = vmatpush1.msra.mxu0 %v2066
    %2096 = vmatprep.subr.mxu0 0.0
    %2097 = vmatpush1.msra.mxu0 %v2065
    %2098 = vmatprep.subr.mxu0 0.0
    %2099 = vmatpush1.msra.mxu0 %v2064
    %2100 = vmatprep.subr.mxu0 0.0
    %2101 = vmatpush1.msra.mxu0 %v2063
    %2102 = vmatprep.subr.mxu0 0.0
    %2103 = vmatpush2.msra.mxu0 0.0
    %2104 = vmatprep.subr.mxu0 0.0
    %2105 = vmatpush2.msra.mxu0 0.0
    %2106 = vmatprep.subr.mxu0 0.0
    %2107 = vmatpush2.msra.mxu0 0.0
    %2108 = vmatprep.subr.mxu0 0.0
    %2109 = vmatpush2.msra.mxu0 0.0
    %2110 = vmatprep.subr.mxu0 0.0
    %2111 = vmatpush2.msra.mxu0 0.0
    %2112 = vmatprep.subr.mxu0 0.0
    %2113 = vmatpush2.msra.mxu0 0.0
    %2114 = vmatprep.subr.mxu0 0.0
    %2115 = vmatpush2.msra.mxu0 0.0
    %2116 = vmatprep.subr.mxu0 0.0
    %2117 = vmatpush2.msra.mxu0 0.0
    %2118 = vmatprep.subr.mxu0 0.0
    %2119 = vmatpush2.msra.mxu0 0.0
    %2120 = vmatprep.subr.mxu0 0.0
    %2121 = vmatpush2.msra.mxu0 0.0
    %2122 = vmatprep.subr.mxu0 0.0
    %2123 = vmatpush2.msra.mxu0 0.0
    %2124 = vmatprep.subr.mxu0 0.0
    %2125 = vmatpush2.msra.mxu0 0.0
    %2126 = vmatprep.subr.mxu0 0.0
    %2127 = vmatpush2.msra.mxu0 0.0
    %2128 = vmatprep.subr.mxu0 0.0
    %2129 = vmatpush2.msra.mxu0 0.0
    %2130 = vmatprep.subr.mxu0 0.0
    %2131 = vmatpush2.msra.mxu0 0.0
    %2132 = vmatprep.subr.mxu0 0.0
    %2133 = vmatpush2.msra.mxu0 0.0
    %2134 = vmatprep.mubr.f32.mxu0 0.0
    %2135 = vmatmul.mubr.f32.gmra.mxu0 %v2068
    %v2136 = vpop.f32.mrf.mxu0
    %v2137 = vadd.f32 0.0, %v2136
    %v2138 = vpop.f32.mrf.mxu0
    %2139 = vdwg.mxu0
    %v2141 = vsel %vm860, %v2137, 0
    %2143 = vmatprep.subr.mxu0 0.0
    %2144 = vmatpush1.msra.mxu0 0.0
    %2145 = vmatprep.subr.mxu0 0.0
    %2146 = vmatpush1.msra.mxu0 0.0
    %2147 = vmatprep.subr.mxu0 0.0
    %2148 = vmatpush1.msra.mxu0 0.0
    %2149 = vmatprep.subr.mxu0 0.0
    %2150 = vmatpush1.msra.mxu0 0.0
    %2151 = vmatprep.subr.mxu0 0.0
    %2152 = vmatpush1.msra.mxu0 0.0
    %2153 = vmatprep.subr.mxu0 0.0
    %2154 = vmatpush1.msra.mxu0 0.0
    %2155 = vmatprep.subr.mxu0 0.0
    %2156 = vmatpush1.msra.mxu0 0.0
    %2157 = vmatprep.subr.mxu0 0.0
    %2158 = vmatpush1.msra.mxu0 0.0
    %2159 = vmatprep.subr.mxu0 0.0
    %2160 = vmatpush1.msra.mxu0 0.0
    %2161 = vmatprep.subr.mxu0 0.0
    %2162 = vmatpush1.msra.mxu0 0.0
    %2163 = vmatprep.subr.mxu0 0.0
    %2164 = vmatpush1.msra.mxu0 0.0
    %2165 = vmatprep.subr.mxu0 0.0
    %2166 = vmatpush1.msra.mxu0 0.0
    %2167 = vmatprep.subr.mxu0 0.0
    %2168 = vmatpush1.msra.mxu0 0.0
    %2169 = vmatprep.subr.mxu0 0.0
    %2170 = vmatpush1.msra.mxu0 0.0
    %2171 = vmatprep.subr.mxu0 0.0
    %2172 = vmatpush1.msra.mxu0 0.0
    %2173 = vmatprep.subr.mxu0 0.0
    %2174 = vmatpush1.msra.mxu0 %v2141
    %2175 = vmatprep.subr.mxu0 0.0
    %2176 = vmatpush2.msra.mxu0 0.0
    %2177 = vmatprep.subr.mxu0 0.0
    %2178 = vmatpush2.msra.mxu0 0.0
    %2179 = vmatprep.subr.mxu0 0.0
    %2180 = vmatpush2.msra.mxu0 0.0
    %2181 = vmatprep.subr.mxu0 0.0
    %2182 = vmatpush2.msra.mxu0 0.0
    %2183 = vmatprep.subr.mxu0 0.0
    %2184 = vmatpush2.msra.mxu0 0.0
    %2185 = vmatprep.subr.mxu0 0.0
    %2186 = vmatpush2.msra.mxu0 0.0
    %2187 = vmatprep.subr.mxu0 0.0
    %2188 = vmatpush2.msra.mxu0 0.0
    %2189 = vmatprep.subr.mxu0 0.0
    %2190 = vmatpush2.msra.mxu0 0.0
    %2191 = vmatprep.subr.mxu0 0.0
    %2192 = vmatpush2.msra.mxu0 0.0
    %2193 = vmatprep.subr.mxu0 0.0
    %2194 = vmatpush2.msra.mxu0 0.0
    %2195 = vmatprep.subr.mxu0 0.0
    %2196 = vmatpush2.msra.mxu0 0.0
    %2197 = vmatprep.subr.mxu0 0.0
    %2198 = vmatpush2.msra.mxu0 0.0
    %2199 = vmatprep.subr.mxu0 0.0
    %2200 = vmatpush2.msra.mxu0 0.0
    %2201 = vmatprep.subr.mxu0 0.0
    %2202 = vmatpush2.msra.mxu0 0.0
    %2203 = vmatprep.subr.mxu0 0.0
    %2204 = vmatpush2.msra.mxu0 0.0
    %2205 = vmatprep.subr.mxu0 0.0
    %2206 = vmatpush2.msra.mxu0 0.0
    %2207 = vmatprep.mubr.f32.mxu0 0.0
    %2208 = vmatmul.mubr.f32.gmra.mxu0 %v858
    %v2209 = vpop.f32.mrf.mxu0
    %v2210 = vadd.f32 0.0, %v2209
    %v2211 = vpop.f32.mrf.mxu0
    %2212 = vdwg.mxu0
    %2213 = vmatprep.subr.mxu0 0.0
    %2214 = vmatpush1.msra.mxu0 0.0
    %2215 = vmatprep.subr.mxu0 0.0
    %2216 = vmatpush1.msra.mxu0 0.0
    %2217 = vmatprep.subr.mxu0 0.0
    %2218 = vmatpush1.msra.mxu0 0.0
    %2219 = vmatprep.subr.mxu0 0.0
    %2220 = vmatpush1.msra.mxu0 0.0
    %2221 = vmatprep.subr.mxu0 0.0
    %2222 = vmatpush1.msra.mxu0 0.0
    %2223 = vmatprep.subr.mxu0 0.0
    %2224 = vmatpush1.msra.mxu0 0.0
    %2225 = vmatprep.subr.mxu0 0.0
    %2226 = vmatpush1.msra.mxu0 0.0
    %2227 = vmatprep.subr.mxu0 0.0
    %2228 = vmatpush1.msra.mxu0 0.0
    %2229 = vmatprep.subr.mxu0 0.0
    %2230 = vmatpush1.msra.mxu0 0.0
    %2231 = vmatprep.subr.mxu0 0.0
    %2232 = vmatpush1.msra.mxu0 0.0
    %2233 = vmatprep.subr.mxu0 0.0
    %2234 = vmatpush1.msra.mxu0 0.0
    %2235 = vmatprep.subr.mxu0 0.0
    %2236 = vmatpush1.msra.mxu0 0.0
    %2237 = vmatprep.subr.mxu0 0.0
    %2238 = vmatpush1.msra.mxu0 %v2061
    %2239 = vmatprep.subr.mxu0 0.0
    %2240 = vmatpush1.msra.mxu0 %v2060
    %2241 = vmatprep.subr.mxu0 0.0
    %2242 = vmatpush1.msra.mxu0 %v2059
    %2243 = vmatprep.subr.mxu0 0.0
    %2244 = vmatpush1.msra.mxu0 %v2058
    %2245 = vmatprep.subr.mxu0 0.0
    %2246 = vmatpush2.msra.mxu0 0.0
    %2247 = vmatprep.subr.mxu0 0.0
    %2248 = vmatpush2.msra.mxu0 0.0
    %2249 = vmatprep.subr.mxu0 0.0
    %2250 = vmatpush2.msra.mxu0 0.0
    %2251 = vmatprep.subr.mxu0 0.0
    %2252 = vmatpush2.msra.mxu0 0.0
    %2253 = vmatprep.subr.mxu0 0.0
    %2254 = vmatpush2.msra.mxu0 0.0
    %2255 = vmatprep.subr.mxu0 0.0
    %2256 = vmatpush2.msra.mxu0 0.0
    %2257 = vmatprep.subr.mxu0 0.0
    %2258 = vmatpush2.msra.mxu0 0.0
    %2259 = vmatprep.subr.mxu0 0.0
    %2260 = vmatpush2.msra.mxu0 0.0
    %2261 = vmatprep.subr.mxu0 0.0
    %2262 = vmatpush2.msra.mxu0 0.0
    %2263 = vmatprep.subr.mxu0 0.0
    %2264 = vmatpush2.msra.mxu0 0.0
    %2265 = vmatprep.subr.mxu0 0.0
    %2266 = vmatpush2.msra.mxu0 0.0
    %2267 = vmatprep.subr.mxu0 0.0
    %2268 = vmatpush2.msra.mxu0 0.0
    %2269 = vmatprep.subr.mxu0 0.0
    %2270 = vmatpush2.msra.mxu0 0.0
    %2271 = vmatprep.subr.mxu0 0.0
    %2272 = vmatpush2.msra.mxu0 0.0
    %2273 = vmatprep.subr.mxu0 0.0
    %2274 = vmatpush2.msra.mxu0 0.0
    %2275 = vmatprep.subr.mxu0 0.0
    %2276 = vmatpush2.msra.mxu0 0.0
    %2277 = vmatprep.mubr.f32.mxu0 0.0
    %2278 = vmatmul.mubr.f32.gmra.mxu0 %v2068
    %v2279 = vpop.f32.mrf.mxu0
    %v2280 = vadd.f32 %v2210, %v2279
    %v2281 = vpop.f32.mrf.mxu0
    %2282 = vdwg.mxu0
    %s2283 = scalar_lea.vmem %s17, 1
    %v2284 = vld [vmem:[%s2283] sm:$0x1]
    %v2286 = vlaneseq
    %v2287 = vshrl.u32 %v2286, 7
    %v2288 = vsub.s32 0, %v2287
    %v2289 = vrot.slane %v2284, %v2288
    %v2291 = vadd.f32 %v2280, %v2289
    %v2292 = vmax.f32 %v2291, 0.0
    %s2293 = scalar_lea.vmem %s18, 32
    %v2294 = vld [vmem:[%s2293] sm:$0xff]
    %v2295 = vld [vmem:[%s2293 + $0x8] sm:$0xff]
    %v2296 = vld [vmem:[%s2293 + $0x10] sm:$0xff]
    %v2297 = vld [vmem:[%s2293 + $0x18] sm:$0xff]
    %s2298 = scalar_lea.vmem %s19, 1
    %v2299 = vld [vmem:[%s2298] sm:$0x1]
    %v2301 = vlaneseq
    %v2302 = vshrl.u32 %v2301, 7
    %v2303 = vsub.s32 0, %v2302
    %v2304 = vrot.slane %v2299, %v2303
    %v2307 = vsel %vm479, %v2292, 0
    %2309 = vmatprep.subr.mxu0 0.0
    %2310 = vmatpush1.msra.mxu0 0.0
    %2311 = vmatprep.subr.mxu0 0.0
    %2312 = vmatpush1.msra.mxu0 0.0
    %2313 = vmatprep.subr.mxu0 0.0
    %2314 = vmatpush1.msra.mxu0 0.0
    %2315 = vmatprep.subr.mxu0 0.0
    %2316 = vmatpush1.msra.mxu0 0.0
    %2317 = vmatprep.subr.mxu0 0.0
    %2318 = vmatpush1.msra.mxu0 0.0
    %2319 = vmatprep.subr.mxu0 0.0
    %2320 = vmatpush1.msra.mxu0 0.0
    %2321 = vmatprep.subr.mxu0 0.0
    %2322 = vmatpush1.msra.mxu0 0.0
    %2323 = vmatprep.subr.mxu0 0.0
    %2324 = vmatpush1.msra.mxu0 0.0
    %2325 = vmatprep.subr.mxu0 0.0
    %2326 = vmatpush1.msra.mxu0 0.0
    %2327 = vmatprep.subr.mxu0 0.0
    %2328 = vmatpush1.msra.mxu0 0.0
    %2329 = vmatprep.subr.mxu0 0.0
    %2330 = vmatpush1.msra.mxu0 0.0
    %2331 = vmatprep.subr.mxu0 0.0
    %2332 = vmatpush1.msra.mxu0 0.0
    %2333 = vmatprep.subr.mxu0 0.0
    %2334 = vmatpush1.msra.mxu0 %v2297
    %2335 = vmatprep.subr.mxu0 0.0
    %2336 = vmatpush1.msra.mxu0 %v2296
    %2337 = vmatprep.subr.mxu0 0.0
    %2338 = vmatpush1.msra.mxu0 %v2295
    %2339 = vmatprep.subr.mxu0 0.0
    %2340 = vmatpush1.msra.mxu0 %v2294
    %2341 = vmatprep.subr.mxu0 0.0
    %2342 = vmatpush2.msra.mxu0 0.0
    %2343 = vmatprep.subr.mxu0 0.0
    %2344 = vmatpush2.msra.mxu0 0.0
    %2345 = vmatprep.subr.mxu0 0.0
    %2346 = vmatpush2.msra.mxu0 0.0
    %2347 = vmatprep.subr.mxu0 0.0
    %2348 = vmatpush2.msra.mxu0 0.0
    %2349 = vmatprep.subr.mxu0 0.0
    %2350 = vmatpush2.msra.mxu0 0.0
    %2351 = vmatprep.subr.mxu0 0.0
    %2352 = vmatpush2.msra.mxu0 0.0
    %2353 = vmatprep.subr.mxu0 0.0
    %2354 = vmatpush2.msra.mxu0 0.0
    %2355 = vmatprep.subr.mxu0 0.0
    %2356 = vmatpush2.msra.mxu0 0.0
    %2357 = vmatprep.subr.mxu0 0.0
    %2358 = vmatpush2.msra.mxu0 0.0
    %2359 = vmatprep.subr.mxu0 0.0
    %2360 = vmatpush2.msra.mxu0 0.0
    %2361 = vmatprep.subr.mxu0 0.0
    %2362 = vmatpush2.msra.mxu0 0.0
    %2363 = vmatprep.subr.mxu0 0.0
    %2364 = vmatpush2.msra.mxu0 0.0
    %2365 = vmatprep.subr.mxu0 0.0
    %2366 = vmatpush2.msra.mxu0 0.0
    %2367 = vmatprep.subr.mxu0 0.0
    %2368 = vmatpush2.msra.mxu0 0.0
    %2369 = vmatprep.subr.mxu0 0.0
    %2370 = vmatpush2.msra.mxu0 0.0
    %2371 = vmatprep.subr.mxu0 0.0
    %2372 = vmatpush2.msra.mxu0 0.0
    %2373 = vmatprep.mubr.f32.mxu0 0.0
    %2374 = vmatmul.mubr.f32.gmra.mxu0 %v2307
    %v2375 = vpop.f32.mrf.mxu0
    %v2376 = vadd.f32 %v2304, %v2375
    %v2377 = vpop.f32.mrf.mxu0
    %2378 = vdwg.mxu0
    %v2379 = vtanh.pop %v2376
    %v2380 = vadd.f32 %v2379, 1.0
    %v2381 = vmul.f32 %v2380, 0.5
    %v2382 = vmul.f32 %v2381, 15.0
    %v2383 = vfloor.f32 %v2382
    %v2384 = vmax.f32 %v2383, 0.0
    %v2385 = vmin.f32 %v2384, 15.0
    %v2386 = vadd.f32 %v2385, 1.0
    %v2387 = vmax.f32 %v2386, 0.0
    %v2388 = vmin.f32 %v2387, 15.0
    %v2389 = vsub.f32 %v2382, %v2385
    %v2390 = vcvt.f32.s32.to.zero.pseudo %v2385
    %v2391 = vcvt.f32.s32.to.zero.pseudo %v2388
    %v2392 = vmul.u32 %v2390, 16
    %2393 = vrot.lane.b32.xlu0 %v2392, 127
    %v2394 = vpop.permute.xlu0 %2393
    %v2395 = vadd.s32 %v135, %v2394
    %v2396 = vadd.s32 %v2395, %v2390
    %v2397 = vadd.s32 %v2395, %v2391
    %v2398 = vmul.u32 %v2391, 16
    %2399 = vrot.lane.b32.xlu0 %v2398, 127
    %v2400 = vpop.permute.xlu0 %2399
    %v2401 = vadd.s32 %v135, %v2400
    %v2402 = vadd.s32 %v2401, %v2390
    %v2403 = vadd.s32 %v2401, %v2391
    %v2404 = vsub.f32 1.0, %v2389
    %2406 = vrot.lane.b32.xlu0 %v2404, 127
    %v2407 = vpop.permute.xlu0 %2406
    %v2409 = vmul.f32 %v2404, %v2407
    %v2410 = vmul.f32 %v2389, %v2407
    %2412 = vrot.lane.b32.xlu0 %v2389, 127
    %v2413 = vpop.permute.xlu0 %2412
    %v2415 = vmul.f32 %v2404, %v2413
    %v2416 = vmul.f32 %v2389, %v2413
    %2417 = vset.pattern.permute.xlu0 0
    %2418 = vperm.xlu0 %2417, %v2396
    %v2419 = vpop.permute.xlu0 %2418
    %vm2420 = vcmp.eq.s32.totalorder %v137, %v2419
    %vm2421 = vcmp.eq.s32.totalorder %v138, %v2419
    %vm2422 = vcmp.eq.s32.totalorder %v139, %v2419
    %vm2423 = vcmp.eq.s32.totalorder %v140, %v2419
    %2425 = vset.pattern.permute.xlu0 0
    %2426 = vperm.xlu0 %2425, %v2409
    %v2427 = vpop.permute.xlu0 %2426
    %v2429 = vsel %vm2420, %v2427, 0.0
    %v2430 = vsel %vm2421, %v2427, 0.0
    %v2431 = vsel %vm2422, %v2427, 0.0
    %v2432 = vsel %vm2423, %v2427, 0.0
    %2433 = vset.pattern.permute.xlu0 0
    %2434 = vperm.xlu0 %2433, %v2397
    %v2435 = vpop.permute.xlu0 %2434
    %vm2436 = vcmp.eq.s32.totalorder %v137, %v2435
    %vm2437 = vcmp.eq.s32.totalorder %v138, %v2435
    %vm2438 = vcmp.eq.s32.totalorder %v139, %v2435
    %vm2439 = vcmp.eq.s32.totalorder %v140, %v2435
    %2441 = vset.pattern.permute.xlu0 0
    %2442 = vperm.xlu0 %2441, %v2410
    %v2443 = vpop.permute.xlu0 %2442
    %v2445 = vsel %vm2436, %v2443, 0.0
    %v2446 = vsel %vm2437, %v2443, 0.0
    %v2447 = vsel %vm2438, %v2443, 0.0
    %v2448 = vsel %vm2439, %v2443, 0.0
    %v2449 = vadd.f32 %v2429, %v2445
    %v2450 = vadd.f32 %v2430, %v2446
    %v2451 = vadd.f32 %v2431, %v2447
    %v2452 = vadd.f32 %v2432, %v2448
    %2453 = vset.pattern.permute.xlu0 0
    %2454 = vperm.xlu0 %2453, %v2402
    %v2455 = vpop.permute.xlu0 %2454
    %vm2456 = vcmp.eq.s32.totalorder %v137, %v2455
    %vm2457 = vcmp.eq.s32.totalorder %v138, %v2455
    %vm2458 = vcmp.eq.s32.totalorder %v139, %v2455
    %vm2459 = vcmp.eq.s32.totalorder %v140, %v2455
    %2461 = vset.pattern.permute.xlu0 0
    %2462 = vperm.xlu0 %2461, %v2415
    %v2463 = vpop.permute.xlu0 %2462
    %v2465 = vsel %vm2456, %v2463, 0.0
    %v2466 = vsel %vm2457, %v2463, 0.0
    %v2467 = vsel %vm2458, %v2463, 0.0
    %v2468 = vsel %vm2459, %v2463, 0.0
    %v2469 = vadd.f32 %v2449, %v2465
    %v2470 = vadd.f32 %v2450, %v2466
    %v2471 = vadd.f32 %v2451, %v2467
    %v2472 = vadd.f32 %v2452, %v2468
    %2473 = vset.pattern.permute.xlu0 0
    %2474 = vperm.xlu0 %2473, %v2403
    %v2475 = vpop.permute.xlu0 %2474
    %vm2476 = vcmp.eq.s32.totalorder %v137, %v2475
    %vm2477 = vcmp.eq.s32.totalorder %v138, %v2475
    %vm2478 = vcmp.eq.s32.totalorder %v139, %v2475
    %vm2479 = vcmp.eq.s32.totalorder %v140, %v2475
    %2481 = vset.pattern.permute.xlu0 0
    %2482 = vperm.xlu0 %2481, %v2416
    %v2483 = vpop.permute.xlu0 %2482
    %v2485 = vsel %vm2476, %v2483, 0.0
    %v2486 = vsel %vm2477, %v2483, 0.0
    %v2487 = vsel %vm2478, %v2483, 0.0
    %v2488 = vsel %vm2479, %v2483, 0.0
    %v2489 = vadd.f32 %v2469, %v2485
    %v2490 = vadd.f32 %v2470, %v2486
    %v2491 = vadd.f32 %v2471, %v2487
    %v2492 = vadd.f32 %v2472, %v2488
    %2493 = vmatprep.subr.mxu0 0.0
    %2494 = vmatpush1.msra.mxu0 %v86
    %2495 = vmatprep.subr.mxu0 0.0
    %2496 = vmatpush1.msra.mxu0 %v85
    %2497 = vmatprep.subr.mxu0 0.0
    %2498 = vmatpush1.msra.mxu0 %v84
    %2499 = vmatprep.subr.mxu0 0.0
    %2500 = vmatpush1.msra.mxu0 %v83
    %2501 = vmatprep.subr.mxu0 0.0
    %2502 = vmatpush1.msra.mxu0 %v82
    %2503 = vmatprep.subr.mxu0 0.0
    %2504 = vmatpush1.msra.mxu0 %v81
    %2505 = vmatprep.subr.mxu0 0.0
    %2506 = vmatpush1.msra.mxu0 %v80
    %2507 = vmatprep.subr.mxu0 0.0
    %2508 = vmatpush1.msra.mxu0 %v79
    %2509 = vmatprep.subr.mxu0 0.0
    %2510 = vmatpush1.msra.mxu0 %v78
    %2511 = vmatprep.subr.mxu0 0.0
    %2512 = vmatpush1.msra.mxu0 %v77
    %2513 = vmatprep.subr.mxu0 0.0
    %2514 = vmatpush1.msra.mxu0 %v76
    %2515 = vmatprep.subr.mxu0 0.0
    %2516 = vmatpush1.msra.mxu0 %v75
    %2517 = vmatprep.subr.mxu0 0.0
    %2518 = vmatpush1.msra.mxu0 %v74
    %2519 = vmatprep.subr.mxu0 0.0
    %2520 = vmatpush1.msra.mxu0 %v73
    %2521 = vmatprep.subr.mxu0 0.0
    %2522 = vmatpush1.msra.mxu0 %v72
    %2523 = vmatprep.subr.mxu0 0.0
    %2524 = vmatpush1.msra.mxu0 %v71
    %2525 = vmatprep.subr.mxu0 0.0
    %2526 = vmatpush2.msra.mxu0 %v102
    %2527 = vmatprep.subr.mxu0 0.0
    %2528 = vmatpush2.msra.mxu0 %v101
    %2529 = vmatprep.subr.mxu0 0.0
    %2530 = vmatpush2.msra.mxu0 %v100
    %2531 = vmatprep.subr.mxu0 0.0
    %2532 = vmatpush2.msra.mxu0 %v99
    %2533 = vmatprep.subr.mxu0 0.0
    %2534 = vmatpush2.msra.mxu0 %v98
    %2535 = vmatprep.subr.mxu0 0.0
    %2536 = vmatpush2.msra.mxu0 %v97
    %2537 = vmatprep.subr.mxu0 0.0
    %2538 = vmatpush2.msra.mxu0 %v96
    %2539 = vmatprep.subr.mxu0 0.0
    %2540 = vmatpush2.msra.mxu0 %v95
    %2541 = vmatprep.subr.mxu0 0.0
    %2542 = vmatpush2.msra.mxu0 %v94
    %2543 = vmatprep.subr.mxu0 0.0
    %2544 = vmatpush2.msra.mxu0 %v93
    %2545 = vmatprep.subr.mxu0 0.0
    %2546 = vmatpush2.msra.mxu0 %v92
    %2547 = vmatprep.subr.mxu0 0.0
    %2548 = vmatpush2.msra.mxu0 %v91
    %2549 = vmatprep.subr.mxu0 0.0
    %2550 = vmatpush2.msra.mxu0 %v90
    %2551 = vmatprep.subr.mxu0 0.0
    %2552 = vmatpush2.msra.mxu0 %v89
    %2553 = vmatprep.subr.mxu0 0.0
    %2554 = vmatpush2.msra.mxu0 %v88
    %2555 = vmatprep.subr.mxu0 0.0
    %2556 = vmatpush2.msra.mxu0 %v87
    %2557 = vmatprep.mubr.f32.mxu0 %v2490
    %2558 = vmatmul.mubr.f32.gmra.mxu0 %v2489
    %v2559 = vpop.f32.mrf.mxu0
    %v2560 = vadd.f32 0.0, %v2559
    %v2561 = vpop.f32.mrf.mxu0
    %2562 = vdwg.mxu0
    %2563 = vmatprep.subr.mxu0 0.0
    %2564 = vmatpush1.msra.mxu0 %v118
    %2565 = vmatprep.subr.mxu0 0.0
    %2566 = vmatpush1.msra.mxu0 %v117
    %2567 = vmatprep.subr.mxu0 0.0
    %2568 = vmatpush1.msra.mxu0 %v116
    %2569 = vmatprep.subr.mxu0 0.0
    %2570 = vmatpush1.msra.mxu0 %v115
    %2571 = vmatprep.subr.mxu0 0.0
    %2572 = vmatpush1.msra.mxu0 %v114
    %2573 = vmatprep.subr.mxu0 0.0
    %2574 = vmatpush1.msra.mxu0 %v113
    %2575 = vmatprep.subr.mxu0 0.0
    %2576 = vmatpush1.msra.mxu0 %v112
    %2577 = vmatprep.subr.mxu0 0.0
    %2578 = vmatpush1.msra.mxu0 %v111
    %2579 = vmatprep.subr.mxu0 0.0
    %2580 = vmatpush1.msra.mxu0 %v110
    %2581 = vmatprep.subr.mxu0 0.0
    %2582 = vmatpush1.msra.mxu0 %v109
    %2583 = vmatprep.subr.mxu0 0.0
    %2584 = vmatpush1.msra.mxu0 %v108
    %2585 = vmatprep.subr.mxu0 0.0
    %2586 = vmatpush1.msra.mxu0 %v107
    %2587 = vmatprep.subr.mxu0 0.0
    %2588 = vmatpush1.msra.mxu0 %v106
    %2589 = vmatprep.subr.mxu0 0.0
    %2590 = vmatpush1.msra.mxu0 %v105
    %2591 = vmatprep.subr.mxu0 0.0
    %2592 = vmatpush1.msra.mxu0 %v104
    %2593 = vmatprep.subr.mxu0 0.0
    %2594 = vmatpush1.msra.mxu0 %v103
    %2595 = vmatprep.subr.mxu0 0.0
    %2596 = vmatpush2.msra.mxu0 %v134
    %2597 = vmatprep.subr.mxu0 0.0
    %2598 = vmatpush2.msra.mxu0 %v133
    %2599 = vmatprep.subr.mxu0 0.0
    %2600 = vmatpush2.msra.mxu0 %v132
    %2601 = vmatprep.subr.mxu0 0.0
    %2602 = vmatpush2.msra.mxu0 %v131
    %2603 = vmatprep.subr.mxu0 0.0
    %2604 = vmatpush2.msra.mxu0 %v130
    %2605 = vmatprep.subr.mxu0 0.0
    %2606 = vmatpush2.msra.mxu0 %v129
    %2607 = vmatprep.subr.mxu0 0.0
    %2608 = vmatpush2.msra.mxu0 %v128
    %2609 = vmatprep.subr.mxu0 0.0
    %2610 = vmatpush2.msra.mxu0 %v127
    %2611 = vmatprep.subr.mxu0 0.0
    %2612 = vmatpush2.msra.mxu0 %v126
    %2613 = vmatprep.subr.mxu0 0.0
    %2614 = vmatpush2.msra.mxu0 %v125
    %2615 = vmatprep.subr.mxu0 0.0
    %2616 = vmatpush2.msra.mxu0 %v124
    %2617 = vmatprep.subr.mxu0 0.0
    %2618 = vmatpush2.msra.mxu0 %v123
    %2619 = vmatprep.subr.mxu0 0.0
    %2620 = vmatpush2.msra.mxu0 %v122
    %2621 = vmatprep.subr.mxu0 0.0
    %2622 = vmatpush2.msra.mxu0 %v121
    %2623 = vmatprep.subr.mxu0 0.0
    %2624 = vmatpush2.msra.mxu0 %v120
    %2625 = vmatprep.subr.mxu0 0.0
    %2626 = vmatpush2.msra.mxu0 %v119
    %2627 = vmatprep.mubr.f32.mxu0 %v2492
    %2628 = vmatmul.mubr.f32.gmra.mxu0 %v2491
    %v2629 = vpop.f32.mrf.mxu0
    %v2630 = vadd.f32 %v2560, %v2629
    %v2631 = vpop.f32.mrf.mxu0
    %2632 = vdwg.mxu0
    %s2633 = scalar_lea.vmem %s8, 64
    %v2634 = vld [vmem:[%s2633] sm:$0xff]
    %v2635 = vld [vmem:[%s2633 + $0x8] sm:$0xff]
    %v2636 = vld [vmem:[%s2633 + $0x10] sm:$0xff]
    %v2637 = vld [vmem:[%s2633 + $0x18] sm:$0xff]
    %s2638 = scalar_lea.vmem %s9, 8
    %v2639 = vld [vmem:[%s2638] sm:$0xf]
    %v2641 = vsel %vm401, %v2630, 0
    %v2644 = vsel %vm405, %v2639, 0
    %2646 = vmatprep.subr.mxu0 0.0
    %2647 = vmatpush1.msra.mxu0 0.0
    %2648 = vmatprep.subr.mxu0 0.0
    %2649 = vmatpush1.msra.mxu0 0.0
    %2650 = vmatprep.subr.mxu0 0.0
    %2651 = vmatpush1.msra.mxu0 0.0
    %2652 = vmatprep.subr.mxu0 0.0
    %2653 = vmatpush1.msra.mxu0 0.0
    %2654 = vmatprep.subr.mxu0 0.0
    %2655 = vmatpush1.msra.mxu0 0.0
    %2656 = vmatprep.subr.mxu0 0.0
    %2657 = vmatpush1.msra.mxu0 0.0
    %2658 = vmatprep.subr.mxu0 0.0
    %2659 = vmatpush1.msra.mxu0 0.0
    %2660 = vmatprep.subr.mxu0 0.0
    %2661 = vmatpush1.msra.mxu0 0.0
    %2662 = vmatprep.subr.mxu0 0.0
    %2663 = vmatpush1.msra.mxu0 0.0
    %2664 = vmatprep.subr.mxu0 0.0
    %2665 = vmatpush1.msra.mxu0 0.0
    %2666 = vmatprep.subr.mxu0 0.0
    %2667 = vmatpush1.msra.mxu0 0.0
    %2668 = vmatprep.subr.mxu0 0.0
    %2669 = vmatpush1.msra.mxu0 0.0
    %2670 = vmatprep.subr.mxu0 0.0
    %2671 = vmatpush1.msra.mxu0 0.0
    %2672 = vmatprep.subr.mxu0 0.0
    %2673 = vmatpush1.msra.mxu0 0.0
    %2674 = vmatprep.subr.mxu0 0.0
    %2675 = vmatpush1.msra.mxu0 0.0
    %2676 = vmatprep.subr.mxu0 0.0
    %2677 = vmatpush1.msra.mxu0 %v2644
    %2678 = vmatprep.subr.mxu0 0.0
    %2679 = vmatpush2.msra.mxu0 0.0
    %2680 = vmatprep.subr.mxu0 0.0
    %2681 = vmatpush2.msra.mxu0 0.0
    %2682 = vmatprep.subr.mxu0 0.0
    %2683 = vmatpush2.msra.mxu0 0.0
    %2684 = vmatprep.subr.mxu0 0.0
    %2685 = vmatpush2.msra.mxu0 0.0
    %2686 = vmatprep.subr.mxu0 0.0
    %2687 = vmatpush2.msra.mxu0 0.0
    %2688 = vmatprep.subr.mxu0 0.0
    %2689 = vmatpush2.msra.mxu0 0.0
    %2690 = vmatprep.subr.mxu0 0.0
    %2691 = vmatpush2.msra.mxu0 0.0
    %2692 = vmatprep.subr.mxu0 0.0
    %2693 = vmatpush2.msra.mxu0 0.0
    %2694 = vmatprep.subr.mxu0 0.0
    %2695 = vmatpush2.msra.mxu0 0.0
    %2696 = vmatprep.subr.mxu0 0.0
    %2697 = vmatpush2.msra.mxu0 0.0
    %2698 = vmatprep.subr.mxu0 0.0
    %2699 = vmatpush2.msra.mxu0 0.0
    %2700 = vmatprep.subr.mxu0 0.0
    %2701 = vmatpush2.msra.mxu0 0.0
    %2702 = vmatprep.subr.mxu0 0.0
    %2703 = vmatpush2.msra.mxu0 0.0
    %2704 = vmatprep.subr.mxu0 0.0
    %2705 = vmatpush2.msra.mxu0 0.0
    %2706 = vmatprep.subr.mxu0 0.0
    %2707 = vmatpush2.msra.mxu0 0.0
    %2708 = vmatprep.subr.mxu0 0.0
    %2709 = vmatpush2.msra.mxu0 0.0
    %2710 = vmatprep.mubr.f32.mxu0 0.0
    %2711 = vmatmul.mubr.f32.gmra.mxu0 %v2641
    %v2712 = vpop.f32.mrf.mxu0
    %v2713 = vadd.f32 0.0, %v2712
    %v2714 = vpop.f32.mrf.mxu0
    %2715 = vdwg.mxu0
    %2716 = vmatprep.subr.mxu0 0.0
    %2717 = vmatpush1.msra.mxu0 0.0
    %2718 = vmatprep.subr.mxu0 0.0
    %2719 = vmatpush1.msra.mxu0 0.0
    %2720 = vmatprep.subr.mxu0 0.0
    %2721 = vmatpush1.msra.mxu0 0.0
    %2722 = vmatprep.subr.mxu0 0.0
    %2723 = vmatpush1.msra.mxu0 0.0
    %2724 = vmatprep.subr.mxu0 0.0
    %2725 = vmatpush1.msra.mxu0 0.0
    %2726 = vmatprep.subr.mxu0 0.0
    %2727 = vmatpush1.msra.mxu0 0.0
    %2728 = vmatprep.subr.mxu0 0.0
    %2729 = vmatpush1.msra.mxu0 0.0
    %2730 = vmatprep.subr.mxu0 0.0
    %2731 = vmatpush1.msra.mxu0 0.0
    %2732 = vmatprep.subr.mxu0 0.0
    %2733 = vmatpush1.msra.mxu0 0.0
    %2734 = vmatprep.subr.mxu0 0.0
    %2735 = vmatpush1.msra.mxu0 0.0
    %2736 = vmatprep.subr.mxu0 0.0
    %2737 = vmatpush1.msra.mxu0 0.0
    %2738 = vmatprep.subr.mxu0 0.0
    %2739 = vmatpush1.msra.mxu0 0.0
    %2740 = vmatprep.subr.mxu0 0.0
    %2741 = vmatpush1.msra.mxu0 %v2637
    %2742 = vmatprep.subr.mxu0 0.0
    %2743 = vmatpush1.msra.mxu0 %v2636
    %2744 = vmatprep.subr.mxu0 0.0
    %2745 = vmatpush1.msra.mxu0 %v2635
    %2746 = vmatprep.subr.mxu0 0.0
    %2747 = vmatpush1.msra.mxu0 %v2634
    %2748 = vmatprep.subr.mxu0 0.0
    %2749 = vmatpush2.msra.mxu0 0.0
    %2750 = vmatprep.subr.mxu0 0.0
    %2751 = vmatpush2.msra.mxu0 0.0
    %2752 = vmatprep.subr.mxu0 0.0
    %2753 = vmatpush2.msra.mxu0 0.0
    %2754 = vmatprep.subr.mxu0 0.0
    %2755 = vmatpush2.msra.mxu0 0.0
    %2756 = vmatprep.subr.mxu0 0.0
    %2757 = vmatpush2.msra.mxu0 0.0
    %2758 = vmatprep.subr.mxu0 0.0
    %2759 = vmatpush2.msra.mxu0 0.0
    %2760 = vmatprep.subr.mxu0 0.0
    %2761 = vmatpush2.msra.mxu0 0.0
    %2762 = vmatprep.subr.mxu0 0.0
    %2763 = vmatpush2.msra.mxu0 0.0
    %2764 = vmatprep.subr.mxu0 0.0
    %2765 = vmatpush2.msra.mxu0 0.0
    %2766 = vmatprep.subr.mxu0 0.0
    %2767 = vmatpush2.msra.mxu0 0.0
    %2768 = vmatprep.subr.mxu0 0.0
    %2769 = vmatpush2.msra.mxu0 0.0
    %2770 = vmatprep.subr.mxu0 0.0
    %2771 = vmatpush2.msra.mxu0 0.0
    %2772 = vmatprep.subr.mxu0 0.0
    %2773 = vmatpush2.msra.mxu0 0.0
    %2774 = vmatprep.subr.mxu0 0.0
    %2775 = vmatpush2.msra.mxu0 0.0
    %2776 = vmatprep.subr.mxu0 0.0
    %2777 = vmatpush2.msra.mxu0 0.0
    %2778 = vmatprep.subr.mxu0 0.0
    %2779 = vmatpush2.msra.mxu0 0.0
    %2780 = vmatprep.mubr.f32.mxu0 0.0
    %2781 = vmatmul.mubr.f32.gmra.mxu0 %v2307
    %v2782 = vpop.f32.mrf.mxu0
    %v2783 = vadd.f32 %v2713, %v2782
    %v2784 = vpop.f32.mrf.mxu0
    %2785 = vdwg.mxu0
    %s2786 = scalar_lea.vmem %s10, 4
    %v2787 = vld [vmem:[%s2786] sm:$0x3]
    %v2789 = vsel %vm554, %v2379, 0
    %v2792 = vsel %vm558, %v2787, 0
    %2794 = vmatprep.subr.mxu0 0.0
    %2795 = vmatpush1.msra.mxu0 0.0
    %2796 = vmatprep.subr.mxu0 0.0
    %2797 = vmatpush1.msra.mxu0 0.0
    %2798 = vmatprep.subr.mxu0 0.0
    %2799 = vmatpush1.msra.mxu0 0.0
    %2800 = vmatprep.subr.mxu0 0.0
    %2801 = vmatpush1.msra.mxu0 0.0
    %2802 = vmatprep.subr.mxu0 0.0
    %2803 = vmatpush1.msra.mxu0 0.0
    %2804 = vmatprep.subr.mxu0 0.0
    %2805 = vmatpush1.msra.mxu0 0.0
    %2806 = vmatprep.subr.mxu0 0.0
    %2807 = vmatpush1.msra.mxu0 0.0
    %2808 = vmatprep.subr.mxu0 0.0
    %2809 = vmatpush1.msra.mxu0 0.0
    %2810 = vmatprep.subr.mxu0 0.0
    %2811 = vmatpush1.msra.mxu0 0.0
    %2812 = vmatprep.subr.mxu0 0.0
    %2813 = vmatpush1.msra.mxu0 0.0
    %2814 = vmatprep.subr.mxu0 0.0
    %2815 = vmatpush1.msra.mxu0 0.0
    %2816 = vmatprep.subr.mxu0 0.0
    %2817 = vmatpush1.msra.mxu0 0.0
    %2818 = vmatprep.subr.mxu0 0.0
    %2819 = vmatpush1.msra.mxu0 0.0
    %2820 = vmatprep.subr.mxu0 0.0
    %2821 = vmatpush1.msra.mxu0 0.0
    %2822 = vmatprep.subr.mxu0 0.0
    %2823 = vmatpush1.msra.mxu0 0.0
    %2824 = vmatprep.subr.mxu0 0.0
    %2825 = vmatpush1.msra.mxu0 %v2792
    %2826 = vmatprep.subr.mxu0 0.0
    %2827 = vmatpush2.msra.mxu0 0.0
    %2828 = vmatprep.subr.mxu0 0.0
    %2829 = vmatpush2.msra.mxu0 0.0
    %2830 = vmatprep.subr.mxu0 0.0
    %2831 = vmatpush2.msra.mxu0 0.0
    %2832 = vmatprep.subr.mxu0 0.0
    %2833 = vmatpush2.msra.mxu0 0.0
    %2834 = vmatprep.subr.mxu0 0.0
    %2835 = vmatpush2.msra.mxu0 0.0
    %2836 = vmatprep.subr.mxu0 0.0
    %2837 = vmatpush2.msra.mxu0 0.0
    %2838 = vmatprep.subr.mxu0 0.0
    %2839 = vmatpush2.msra.mxu0 0.0
    %2840 = vmatprep.subr.mxu0 0.0
    %2841 = vmatpush2.msra.mxu0 0.0
    %2842 = vmatprep.subr.mxu0 0.0
    %2843 = vmatpush2.msra.mxu0 0.0
    %2844 = vmatprep.subr.mxu0 0.0
    %2845 = vmatpush2.msra.mxu0 0.0
    %2846 = vmatprep.subr.mxu0 0.0
    %2847 = vmatpush2.msra.mxu0 0.0
    %2848 = vmatprep.subr.mxu0 0.0
    %2849 = vmatpush2.msra.mxu0 0.0
    %2850 = vmatprep.subr.mxu0 0.0
    %2851 = vmatpush2.msra.mxu0 0.0
    %2852 = vmatprep.subr.mxu0 0.0
    %2853 = vmatpush2.msra.mxu0 0.0
    %2854 = vmatprep.subr.mxu0 0.0
    %2855 = vmatpush2.msra.mxu0 0.0
    %2856 = vmatprep.subr.mxu0 0.0
    %2857 = vmatpush2.msra.mxu0 0.0
    %2858 = vmatprep.mubr.f32.mxu0 0.0
    %2859 = vmatmul.mubr.f32.gmra.mxu0 %v2789
    %v2860 = vpop.f32.mrf.mxu0
    %v2861 = vadd.f32 0.0, %v2860
    %v2862 = vpop.f32.mrf.mxu0
    %2863 = vdwg.mxu0
    %v2864 = vadd.f32 %v2783, %v2861
    %s2865 = scalar_lea.vmem %s11, 64
    %v2866 = vld [vmem:[%s2865] sm:$0xff]
    %v2867 = vld [vmem:[%s2865 + $0x8] sm:$0xff]
    %v2868 = vld [vmem:[%s2865 + $0x10] sm:$0xff]
    %v2869 = vld [vmem:[%s2865 + $0x18] sm:$0xff]
    %s2870 = scalar_lea.vmem %s12, 8
    %v2871 = vld [vmem:[%s2870] sm:$0xf]
    %v2873 = vsel %vm405, %v2871, 0
    %2875 = vmatprep.subr.mxu0 0.0
    %2876 = vmatpush1.msra.mxu0 0.0
    %2877 = vmatprep.subr.mxu0 0.0
    %2878 = vmatpush1.msra.mxu0 0.0
    %2879 = vmatprep.subr.mxu0 0.0
    %2880 = vmatpush1.msra.mxu0 0.0
    %2881 = vmatprep.subr.mxu0 0.0
    %2882 = vmatpush1.msra.mxu0 0.0
    %2883 = vmatprep.subr.mxu0 0.0
    %2884 = vmatpush1.msra.mxu0 0.0
    %2885 = vmatprep.subr.mxu0 0.0
    %2886 = vmatpush1.msra.mxu0 0.0
    %2887 = vmatprep.subr.mxu0 0.0
    %2888 = vmatpush1.msra.mxu0 0.0
    %2889 = vmatprep.subr.mxu0 0.0
    %2890 = vmatpush1.msra.mxu0 0.0
    %2891 = vmatprep.subr.mxu0 0.0
    %2892 = vmatpush1.msra.mxu0 0.0
    %2893 = vmatprep.subr.mxu0 0.0
    %2894 = vmatpush1.msra.mxu0 0.0
    %2895 = vmatprep.subr.mxu0 0.0
    %2896 = vmatpush1.msra.mxu0 0.0
    %2897 = vmatprep.subr.mxu0 0.0
    %2898 = vmatpush1.msra.mxu0 0.0
    %2899 = vmatprep.subr.mxu0 0.0
    %2900 = vmatpush1.msra.mxu0 0.0
    %2901 = vmatprep.subr.mxu0 0.0
    %2902 = vmatpush1.msra.mxu0 0.0
    %2903 = vmatprep.subr.mxu0 0.0
    %2904 = vmatpush1.msra.mxu0 0.0
    %2905 = vmatprep.subr.mxu0 0.0
    %2906 = vmatpush1.msra.mxu0 %v2873
    %2907 = vmatprep.subr.mxu0 0.0
    %2908 = vmatpush2.msra.mxu0 0.0
    %2909 = vmatprep.subr.mxu0 0.0
    %2910 = vmatpush2.msra.mxu0 0.0
    %2911 = vmatprep.subr.mxu0 0.0
    %2912 = vmatpush2.msra.mxu0 0.0
    %2913 = vmatprep.subr.mxu0 0.0
    %2914 = vmatpush2.msra.mxu0 0.0
    %2915 = vmatprep.subr.mxu0 0.0
    %2916 = vmatpush2.msra.mxu0 0.0
    %2917 = vmatprep.subr.mxu0 0.0
    %2918 = vmatpush2.msra.mxu0 0.0
    %2919 = vmatprep.subr.mxu0 0.0
    %2920 = vmatpush2.msra.mxu0 0.0
    %2921 = vmatprep.subr.mxu0 0.0
    %2922 = vmatpush2.msra.mxu0 0.0
    %2923 = vmatprep.subr.mxu0 0.0
    %2924 = vmatpush2.msra.mxu0 0.0
    %2925 = vmatprep.subr.mxu0 0.0
    %2926 = vmatpush2.msra.mxu0 0.0
    %2927 = vmatprep.subr.mxu0 0.0
    %2928 = vmatpush2.msra.mxu0 0.0
    %2929 = vmatprep.subr.mxu0 0.0
    %2930 = vmatpush2.msra.mxu0 0.0
    %2931 = vmatprep.subr.mxu0 0.0
    %2932 = vmatpush2.msra.mxu0 0.0
    %2933 = vmatprep.subr.mxu0 0.0
    %2934 = vmatpush2.msra.mxu0 0.0
    %2935 = vmatprep.subr.mxu0 0.0
    %2936 = vmatpush2.msra.mxu0 0.0
    %2937 = vmatprep.subr.mxu0 0.0
    %2938 = vmatpush2.msra.mxu0 0.0
    %2939 = vmatprep.mubr.f32.mxu0 0.0
    %2940 = vmatmul.mubr.f32.gmra.mxu0 %v2641
    %v2941 = vpop.f32.mrf.mxu0
    %v2942 = vadd.f32 0.0, %v2941
    %v2943 = vpop.f32.mrf.mxu0
    %2944 = vdwg.mxu0
    %2945 = vmatprep.subr.mxu0 0.0
    %2946 = vmatpush1.msra.mxu0 0.0
    %2947 = vmatprep.subr.mxu0 0.0
    %2948 = vmatpush1.msra.mxu0 0.0
    %2949 = vmatprep.subr.mxu0 0.0
    %2950 = vmatpush1.msra.mxu0 0.0
    %2951 = vmatprep.subr.mxu0 0.0
    %2952 = vmatpush1.msra.mxu0 0.0
    %2953 = vmatprep.subr.mxu0 0.0
    %2954 = vmatpush1.msra.mxu0 0.0
    %2955 = vmatprep.subr.mxu0 0.0
    %2956 = vmatpush1.msra.mxu0 0.0
    %2957 = vmatprep.subr.mxu0 0.0
    %2958 = vmatpush1.msra.mxu0 0.0
    %2959 = vmatprep.subr.mxu0 0.0
    %2960 = vmatpush1.msra.mxu0 0.0
    %2961 = vmatprep.subr.mxu0 0.0
    %2962 = vmatpush1.msra.mxu0 0.0
    %2963 = vmatprep.subr.mxu0 0.0
    %2964 = vmatpush1.msra.mxu0 0.0
    %2965 = vmatprep.subr.mxu0 0.0
    %2966 = vmatpush1.msra.mxu0 0.0
    %2967 = vmatprep.subr.mxu0 0.0
    %2968 = vmatpush1.msra.mxu0 0.0
    %2969 = vmatprep.subr.mxu0 0.0
    %2970 = vmatpush1.msra.mxu0 %v2869
    %2971 = vmatprep.subr.mxu0 0.0
    %2972 = vmatpush1.msra.mxu0 %v2868
    %2973 = vmatprep.subr.mxu0 0.0
    %2974 = vmatpush1.msra.mxu0 %v2867
    %2975 = vmatprep.subr.mxu0 0.0
    %2976 = vmatpush1.msra.mxu0 %v2866
    %2977 = vmatprep.subr.mxu0 0.0
    %2978 = vmatpush2.msra.mxu0 0.0
    %2979 = vmatprep.subr.mxu0 0.0
    %2980 = vmatpush2.msra.mxu0 0.0
    %2981 = vmatprep.subr.mxu0 0.0
    %2982 = vmatpush2.msra.mxu0 0.0
    %2983 = vmatprep.subr.mxu0 0.0
    %2984 = vmatpush2.msra.mxu0 0.0
    %2985 = vmatprep.subr.mxu0 0.0
    %2986 = vmatpush2.msra.mxu0 0.0
    %2987 = vmatprep.subr.mxu0 0.0
    %2988 = vmatpush2.msra.mxu0 0.0
    %2989 = vmatprep.subr.mxu0 0.0
    %2990 = vmatpush2.msra.mxu0 0.0
    %2991 = vmatprep.subr.mxu0 0.0
    %2992 = vmatpush2.msra.mxu0 0.0
    %2993 = vmatprep.subr.mxu0 0.0
    %2994 = vmatpush2.msra.mxu0 0.0
    %2995 = vmatprep.subr.mxu0 0.0
    %2996 = vmatpush2.msra.mxu0 0.0
    %2997 = vmatprep.subr.mxu0 0.0
    %2998 = vmatpush2.msra.mxu0 0.0
    %2999 = vmatprep.subr.mxu0 0.0
    %3000 = vmatpush2.msra.mxu0 0.0
    %3001 = vmatprep.subr.mxu0 0.0
    %3002 = vmatpush2.msra.mxu0 0.0
    %3003 = vmatprep.subr.mxu0 0.0
    %3004 = vmatpush2.msra.mxu0 0.0
    %3005 = vmatprep.subr.mxu0 0.0
    %3006 = vmatpush2.msra.mxu0 0.0
    %3007 = vmatprep.subr.mxu0 0.0
    %3008 = vmatpush2.msra.mxu0 0.0
    %3009 = vmatprep.mubr.f32.mxu0 0.0
    %3010 = vmatmul.mubr.f32.gmra.mxu0 %v2307
    %v3011 = vpop.f32.mrf.mxu0
    %v3012 = vadd.f32 %v2942, %v3011
    %v3013 = vpop.f32.mrf.mxu0
    %3014 = vdwg.mxu0
    %s3015 = scalar_lea.vmem %s13, 4
    %v3016 = vld [vmem:[%s3015] sm:$0x3]
    %v3018 = vsel %vm558, %v3016, 0
    %3020 = vmatprep.subr.mxu0 0.0
    %3021 = vmatpush1.msra.mxu0 0.0
    %3022 = vmatprep.subr.mxu0 0.0
    %3023 = vmatpush1.msra.mxu0 0.0
    %3024 = vmatprep.subr.mxu0 0.0
    %3025 = vmatpush1.msra.mxu0 0.0
    %3026 = vmatprep.subr.mxu0 0.0
    %3027 = vmatpush1.msra.mxu0 0.0
    %3028 = vmatprep.subr.mxu0 0.0
    %3029 = vmatpush1.msra.mxu0 0.0
    %3030 = vmatprep.subr.mxu0 0.0
    %3031 = vmatpush1.msra.mxu0 0.0
    %3032 = vmatprep.subr.mxu0 0.0
    %3033 = vmatpush1.msra.mxu0 0.0
    %3034 = vmatprep.subr.mxu0 0.0
    %3035 = vmatpush1.msra.mxu0 0.0
    %3036 = vmatprep.subr.mxu0 0.0
    %3037 = vmatpush1.msra.mxu0 0.0
    %3038 = vmatprep.subr.mxu0 0.0
    %3039 = vmatpush1.msra.mxu0 0.0
    %3040 = vmatprep.subr.mxu0 0.0
    %3041 = vmatpush1.msra.mxu0 0.0
    %3042 = vmatprep.subr.mxu0 0.0
    %3043 = vmatpush1.msra.mxu0 0.0
    %3044 = vmatprep.subr.mxu0 0.0
    %3045 = vmatpush1.msra.mxu0 0.0
    %3046 = vmatprep.subr.mxu0 0.0
    %3047 = vmatpush1.msra.mxu0 0.0
    %3048 = vmatprep.subr.mxu0 0.0
    %3049 = vmatpush1.msra.mxu0 0.0
    %3050 = vmatprep.subr.mxu0 0.0
    %3051 = vmatpush1.msra.mxu0 %v3018
    %3052 = vmatprep.subr.mxu0 0.0
    %3053 = vmatpush2.msra.mxu0 0.0
    %3054 = vmatprep.subr.mxu0 0.0
    %3055 = vmatpush2.msra.mxu0 0.0
    %3056 = vmatprep.subr.mxu0 0.0
    %3057 = vmatpush2.msra.mxu0 0.0
    %3058 = vmatprep.subr.mxu0 0.0
    %3059 = vmatpush2.msra.mxu0 0.0
    %3060 = vmatprep.subr.mxu0 0.0
    %3061 = vmatpush2.msra.mxu0 0.0
    %3062 = vmatprep.subr.mxu0 0.0
    %3063 = vmatpush2.msra.mxu0 0.0
    %3064 = vmatprep.subr.mxu0 0.0
    %3065 = vmatpush2.msra.mxu0 0.0
    %3066 = vmatprep.subr.mxu0 0.0
    %3067 = vmatpush2.msra.mxu0 0.0
    %3068 = vmatprep.subr.mxu0 0.0
    %3069 = vmatpush2.msra.mxu0 0.0
    %3070 = vmatprep.subr.mxu0 0.0
    %3071 = vmatpush2.msra.mxu0 0.0
    %3072 = vmatprep.subr.mxu0 0.0
    %3073 = vmatpush2.msra.mxu0 0.0
    %3074 = vmatprep.subr.mxu0 0.0
    %3075 = vmatpush2.msra.mxu0 0.0
    %3076 = vmatprep.subr.mxu0 0.0
    %3077 = vmatpush2.msra.mxu0 0.0
    %3078 = vmatprep.subr.mxu0 0.0
    %3079 = vmatpush2.msra.mxu0 0.0
    %3080 = vmatprep.subr.mxu0 0.0
    %3081 = vmatpush2.msra.mxu0 0.0
    %3082 = vmatprep.subr.mxu0 0.0
    %3083 = vmatpush2.msra.mxu0 0.0
    %3084 = vmatprep.mubr.f32.mxu0 0.0
    %3085 = vmatmul.mubr.f32.gmra.mxu0 %v2789
    %v3086 = vpop.f32.mrf.mxu0
    %v3087 = vadd.f32 0.0, %v3086
    %v3088 = vpop.f32.mrf.mxu0
    %3089 = vdwg.mxu0
    %v3090 = vadd.f32 %v3012, %v3087
    %v3092 = vsel %vm860, %v3090, 0
    %3094 = vmatprep.subr.mxu0 0.0
    %3095 = vmatpush1.msra.mxu0 0.0
    %3096 = vmatprep.subr.mxu0 0.0
    %3097 = vmatpush1.msra.mxu0 0.0
    %3098 = vmatprep.subr.mxu0 0.0
    %3099 = vmatpush1.msra.mxu0 0.0
    %3100 = vmatprep.subr.mxu0 0.0
    %3101 = vmatpush1.msra.mxu0 0.0
    %3102 = vmatprep.subr.mxu0 0.0
    %3103 = vmatpush1.msra.mxu0 0.0
    %3104 = vmatprep.subr.mxu0 0.0
    %3105 = vmatpush1.msra.mxu0 0.0
    %3106 = vmatprep.subr.mxu0 0.0
    %3107 = vmatpush1.msra.mxu0 0.0
    %3108 = vmatprep.subr.mxu0 0.0
    %3109 = vmatpush1.msra.mxu0 0.0
    %3110 = vmatprep.subr.mxu0 0.0
    %3111 = vmatpush1.msra.mxu0 0.0
    %3112 = vmatprep.subr.mxu0 0.0
    %3113 = vmatpush1.msra.mxu0 0.0
    %3114 = vmatprep.subr.mxu0 0.0
    %3115 = vmatpush1.msra.mxu0 0.0
    %3116 = vmatprep.subr.mxu0 0.0
    %3117 = vmatpush1.msra.mxu0 0.0
    %3118 = vmatprep.subr.mxu0 0.0
    %3119 = vmatpush1.msra.mxu0 0.0
    %3120 = vmatprep.subr.mxu0 0.0
    %3121 = vmatpush1.msra.mxu0 0.0
    %3122 = vmatprep.subr.mxu0 0.0
    %3123 = vmatpush1.msra.mxu0 0.0
    %3124 = vmatprep.subr.mxu0 0.0
    %3125 = vmatpush1.msra.mxu0 %v3092
    %3126 = vmatprep.subr.mxu0 0.0
    %3127 = vmatpush2.msra.mxu0 0.0
    %3128 = vmatprep.subr.mxu0 0.0
    %3129 = vmatpush2.msra.mxu0 0.0
    %3130 = vmatprep.subr.mxu0 0.0
    %3131 = vmatpush2.msra.mxu0 0.0
    %3132 = vmatprep.subr.mxu0 0.0
    %3133 = vmatpush2.msra.mxu0 0.0
    %3134 = vmatprep.subr.mxu0 0.0
    %3135 = vmatpush2.msra.mxu0 0.0
    %3136 = vmatprep.subr.mxu0 0.0
    %3137 = vmatpush2.msra.mxu0 0.0
    %3138 = vmatprep.subr.mxu0 0.0
    %3139 = vmatpush2.msra.mxu0 0.0
    %3140 = vmatprep.subr.mxu0 0.0
    %3141 = vmatpush2.msra.mxu0 0.0
    %3142 = vmatprep.subr.mxu0 0.0
    %3143 = vmatpush2.msra.mxu0 0.0
    %3144 = vmatprep.subr.mxu0 0.0
    %3145 = vmatpush2.msra.mxu0 0.0
    %3146 = vmatprep.subr.mxu0 0.0
    %3147 = vmatpush2.msra.mxu0 0.0
    %3148 = vmatprep.subr.mxu0 0.0
    %3149 = vmatpush2.msra.mxu0 0.0
    %3150 = vmatprep.subr.mxu0 0.0
    %3151 = vmatpush2.msra.mxu0 0.0
    %3152 = vmatprep.subr.mxu0 0.0
    %3153 = vmatpush2.msra.mxu0 0.0
    %3154 = vmatprep.subr.mxu0 0.0
    %3155 = vmatpush2.msra.mxu0 0.0
    %3156 = vmatprep.subr.mxu0 0.0
    %3157 = vmatpush2.msra.mxu0 0.0
    %3158 = vmatprep.mubr.f32.mxu0 0.0
    %3159 = vmatmul.mubr.f32.gmra.mxu0 %v858
    %v3160 = vpop.f32.mrf.mxu0
    %v3161 = vadd.f32 0.0, %v3160
    %v3162 = vpop.f32.mrf.mxu0
    %3163 = vdwg.mxu0
    %v3164 = vadd.f32 %v2864, %v3161
    %s3165 = scalar_lea.vmem %s14, 2
    %v3166 = vld [vmem:[%s3165] sm:$0x1]
    %v3168 = vlaneseq
    %v3169 = vshrl.u32 %v3168, 7
    %v3170 = vsub.s32 0, %v3169
    %v3171 = vrot.slane %v3166, %v3170
    %v3173 = vadd.f32 %v3164, %v3171
    %v3174 = vmax.f32 %v3173, 0.0
    %s3175 = scalar_lea.vmem %s15, 64
    %v3176 = vld [vmem:[%s3175] sm:$0xff]
    %v3177 = vld [vmem:[%s3175 + $0x8] sm:$0xff]
    %v3178 = vld [vmem:[%s3175 + $0x10] sm:$0xff]
    %v3179 = vld [vmem:[%s3175 + $0x18] sm:$0xff]
    %s3180 = scalar_lea.vmem %s16, 64
    %v3181 = vld [vmem:[%s3180] sm:$0xff]
    %v3182 = vld [vmem:[%s3180 + $0x8] sm:$0xff]
    %v3183 = vld [vmem:[%s3180 + $0x10] sm:$0xff]
    %v3184 = vld [vmem:[%s3180 + $0x18] sm:$0xff]
    %v3186 = vsel %vm479, %v3174, 0
    %3188 = vmatprep.subr.mxu0 0.0
    %3189 = vmatpush1.msra.mxu0 0.0
    %3190 = vmatprep.subr.mxu0 0.0
    %3191 = vmatpush1.msra.mxu0 0.0
    %3192 = vmatprep.subr.mxu0 0.0
    %3193 = vmatpush1.msra.mxu0 0.0
    %3194 = vmatprep.subr.mxu0 0.0
    %3195 = vmatpush1.msra.mxu0 0.0
    %3196 = vmatprep.subr.mxu0 0.0
    %3197 = vmatpush1.msra.mxu0 0.0
    %3198 = vmatprep.subr.mxu0 0.0
    %3199 = vmatpush1.msra.mxu0 0.0
    %3200 = vmatprep.subr.mxu0 0.0
    %3201 = vmatpush1.msra.mxu0 0.0
    %3202 = vmatprep.subr.mxu0 0.0
    %3203 = vmatpush1.msra.mxu0 0.0
    %3204 = vmatprep.subr.mxu0 0.0
    %3205 = vmatpush1.msra.mxu0 0.0
    %3206 = vmatprep.subr.mxu0 0.0
    %3207 = vmatpush1.msra.mxu0 0.0
    %3208 = vmatprep.subr.mxu0 0.0
    %3209 = vmatpush1.msra.mxu0 0.0
    %3210 = vmatprep.subr.mxu0 0.0
    %3211 = vmatpush1.msra.mxu0 0.0
    %3212 = vmatprep.subr.mxu0 0.0
    %3213 = vmatpush1.msra.mxu0 %v3184
    %3214 = vmatprep.subr.mxu0 0.0
    %3215 = vmatpush1.msra.mxu0 %v3183
    %3216 = vmatprep.subr.mxu0 0.0
    %3217 = vmatpush1.msra.mxu0 %v3182
    %3218 = vmatprep.subr.mxu0 0.0
    %3219 = vmatpush1.msra.mxu0 %v3181
    %3220 = vmatprep.subr.mxu0 0.0
    %3221 = vmatpush2.msra.mxu0 0.0
    %3222 = vmatprep.subr.mxu0 0.0
    %3223 = vmatpush2.msra.mxu0 0.0
    %3224 = vmatprep.subr.mxu0 0.0
    %3225 = vmatpush2.msra.mxu0 0.0
    %3226 = vmatprep.subr.mxu0 0.0
    %3227 = vmatpush2.msra.mxu0 0.0
    %3228 = vmatprep.subr.mxu0 0.0
    %3229 = vmatpush2.msra.mxu0 0.0
    %3230 = vmatprep.subr.mxu0 0.0
    %3231 = vmatpush2.msra.mxu0 0.0
    %3232 = vmatprep.subr.mxu0 0.0
    %3233 = vmatpush2.msra.mxu0 0.0
    %3234 = vmatprep.subr.mxu0 0.0
    %3235 = vmatpush2.msra.mxu0 0.0
    %3236 = vmatprep.subr.mxu0 0.0
    %3237 = vmatpush2.msra.mxu0 0.0
    %3238 = vmatprep.subr.mxu0 0.0
    %3239 = vmatpush2.msra.mxu0 0.0
    %3240 = vmatprep.subr.mxu0 0.0
    %3241 = vmatpush2.msra.mxu0 0.0
    %3242 = vmatprep.subr.mxu0 0.0
    %3243 = vmatpush2.msra.mxu0 0.0
    %3244 = vmatprep.subr.mxu0 0.0
    %3245 = vmatpush2.msra.mxu0 0.0
    %3246 = vmatprep.subr.mxu0 0.0
    %3247 = vmatpush2.msra.mxu0 0.0
    %3248 = vmatprep.subr.mxu0 0.0
    %3249 = vmatpush2.msra.mxu0 0.0
    %3250 = vmatprep.subr.mxu0 0.0
    %3251 = vmatpush2.msra.mxu0 0.0
    %3252 = vmatprep.mubr.f32.mxu0 0.0
    %3253 = vmatmul.mubr.f32.gmra.mxu0 %v3186
    %v3254 = vpop.f32.mrf.mxu0
    %v3255 = vadd.f32 0.0, %v3254
    %v3256 = vpop.f32.mrf.mxu0
    %3257 = vdwg.mxu0
    %v3259 = vsel %vm860, %v3255, 0
    %3261 = vmatprep.subr.mxu0 0.0
    %3262 = vmatpush1.msra.mxu0 0.0
    %3263 = vmatprep.subr.mxu0 0.0
    %3264 = vmatpush1.msra.mxu0 0.0
    %3265 = vmatprep.subr.mxu0 0.0
    %3266 = vmatpush1.msra.mxu0 0.0
    %3267 = vmatprep.subr.mxu0 0.0
    %3268 = vmatpush1.msra.mxu0 0.0
    %3269 = vmatprep.subr.mxu0 0.0
    %3270 = vmatpush1.msra.mxu0 0.0
    %3271 = vmatprep.subr.mxu0 0.0
    %3272 = vmatpush1.msra.mxu0 0.0
    %3273 = vmatprep.subr.mxu0 0.0
    %3274 = vmatpush1.msra.mxu0 0.0
    %3275 = vmatprep.subr.mxu0 0.0
    %3276 = vmatpush1.msra.mxu0 0.0
    %3277 = vmatprep.subr.mxu0 0.0
    %3278 = vmatpush1.msra.mxu0 0.0
    %3279 = vmatprep.subr.mxu0 0.0
    %3280 = vmatpush1.msra.mxu0 0.0
    %3281 = vmatprep.subr.mxu0 0.0
    %3282 = vmatpush1.msra.mxu0 0.0
    %3283 = vmatprep.subr.mxu0 0.0
    %3284 = vmatpush1.msra.mxu0 0.0
    %3285 = vmatprep.subr.mxu0 0.0
    %3286 = vmatpush1.msra.mxu0 0.0
    %3287 = vmatprep.subr.mxu0 0.0
    %3288 = vmatpush1.msra.mxu0 0.0
    %3289 = vmatprep.subr.mxu0 0.0
    %3290 = vmatpush1.msra.mxu0 0.0
    %3291 = vmatprep.subr.mxu0 0.0
    %3292 = vmatpush1.msra.mxu0 %v3259
    %3293 = vmatprep.subr.mxu0 0.0
    %3294 = vmatpush2.msra.mxu0 0.0
    %3295 = vmatprep.subr.mxu0 0.0
    %3296 = vmatpush2.msra.mxu0 0.0
    %3297 = vmatprep.subr.mxu0 0.0
    %3298 = vmatpush2.msra.mxu0 0.0
    %3299 = vmatprep.subr.mxu0 0.0
    %3300 = vmatpush2.msra.mxu0 0.0
    %3301 = vmatprep.subr.mxu0 0.0
    %3302 = vmatpush2.msra.mxu0 0.0
    %3303 = vmatprep.subr.mxu0 0.0
    %3304 = vmatpush2.msra.mxu0 0.0
    %3305 = vmatprep.subr.mxu0 0.0
    %3306 = vmatpush2.msra.mxu0 0.0
    %3307 = vmatprep.subr.mxu0 0.0
    %3308 = vmatpush2.msra.mxu0 0.0
    %3309 = vmatprep.subr.mxu0 0.0
    %3310 = vmatpush2.msra.mxu0 0.0
    %3311 = vmatprep.subr.mxu0 0.0
    %3312 = vmatpush2.msra.mxu0 0.0
    %3313 = vmatprep.subr.mxu0 0.0
    %3314 = vmatpush2.msra.mxu0 0.0
    %3315 = vmatprep.subr.mxu0 0.0
    %3316 = vmatpush2.msra.mxu0 0.0
    %3317 = vmatprep.subr.mxu0 0.0
    %3318 = vmatpush2.msra.mxu0 0.0
    %3319 = vmatprep.subr.mxu0 0.0
    %3320 = vmatpush2.msra.mxu0 0.0
    %3321 = vmatprep.subr.mxu0 0.0
    %3322 = vmatpush2.msra.mxu0 0.0
    %3323 = vmatprep.subr.mxu0 0.0
    %3324 = vmatpush2.msra.mxu0 0.0
    %3325 = vmatprep.mubr.f32.mxu0 0.0
    %3326 = vmatmul.mubr.f32.gmra.mxu0 %v858
    %v3327 = vpop.f32.mrf.mxu0
    %v3328 = vadd.f32 0.0, %v3327
    %v3329 = vpop.f32.mrf.mxu0
    %3330 = vdwg.mxu0
    %3331 = vmatprep.subr.mxu0 0.0
    %3332 = vmatpush1.msra.mxu0 0.0
    %3333 = vmatprep.subr.mxu0 0.0
    %3334 = vmatpush1.msra.mxu0 0.0
    %3335 = vmatprep.subr.mxu0 0.0
    %3336 = vmatpush1.msra.mxu0 0.0
    %3337 = vmatprep.subr.mxu0 0.0
    %3338 = vmatpush1.msra.mxu0 0.0
    %3339 = vmatprep.subr.mxu0 0.0
    %3340 = vmatpush1.msra.mxu0 0.0
    %3341 = vmatprep.subr.mxu0 0.0
    %3342 = vmatpush1.msra.mxu0 0.0
    %3343 = vmatprep.subr.mxu0 0.0
    %3344 = vmatpush1.msra.mxu0 0.0
    %3345 = vmatprep.subr.mxu0 0.0
    %3346 = vmatpush1.msra.mxu0 0.0
    %3347 = vmatprep.subr.mxu0 0.0
    %3348 = vmatpush1.msra.mxu0 0.0
    %3349 = vmatprep.subr.mxu0 0.0
    %3350 = vmatpush1.msra.mxu0 0.0
    %3351 = vmatprep.subr.mxu0 0.0
    %3352 = vmatpush1.msra.mxu0 0.0
    %3353 = vmatprep.subr.mxu0 0.0
    %3354 = vmatpush1.msra.mxu0 0.0
    %3355 = vmatprep.subr.mxu0 0.0
    %3356 = vmatpush1.msra.mxu0 %v3179
    %3357 = vmatprep.subr.mxu0 0.0
    %3358 = vmatpush1.msra.mxu0 %v3178
    %3359 = vmatprep.subr.mxu0 0.0
    %3360 = vmatpush1.msra.mxu0 %v3177
    %3361 = vmatprep.subr.mxu0 0.0
    %3362 = vmatpush1.msra.mxu0 %v3176
    %3363 = vmatprep.subr.mxu0 0.0
    %3364 = vmatpush2.msra.mxu0 0.0
    %3365 = vmatprep.subr.mxu0 0.0
    %3366 = vmatpush2.msra.mxu0 0.0
    %3367 = vmatprep.subr.mxu0 0.0
    %3368 = vmatpush2.msra.mxu0 0.0
    %3369 = vmatprep.subr.mxu0 0.0
    %3370 = vmatpush2.msra.mxu0 0.0
    %3371 = vmatprep.subr.mxu0 0.0
    %3372 = vmatpush2.msra.mxu0 0.0
    %3373 = vmatprep.subr.mxu0 0.0
    %3374 = vmatpush2.msra.mxu0 0.0
    %3375 = vmatprep.subr.mxu0 0.0
    %3376 = vmatpush2.msra.mxu0 0.0
    %3377 = vmatprep.subr.mxu0 0.0
    %3378 = vmatpush2.msra.mxu0 0.0
    %3379 = vmatprep.subr.mxu0 0.0
    %3380 = vmatpush2.msra.mxu0 0.0
    %3381 = vmatprep.subr.mxu0 0.0
    %3382 = vmatpush2.msra.mxu0 0.0
    %3383 = vmatprep.subr.mxu0 0.0
    %3384 = vmatpush2.msra.mxu0 0.0
    %3385 = vmatprep.subr.mxu0 0.0
    %3386 = vmatpush2.msra.mxu0 0.0
    %3387 = vmatprep.subr.mxu0 0.0
    %3388 = vmatpush2.msra.mxu0 0.0
    %3389 = vmatprep.subr.mxu0 0.0
    %3390 = vmatpush2.msra.mxu0 0.0
    %3391 = vmatprep.subr.mxu0 0.0
    %3392 = vmatpush2.msra.mxu0 0.0
    %3393 = vmatprep.subr.mxu0 0.0
    %3394 = vmatpush2.msra.mxu0 0.0
    %3395 = vmatprep.mubr.f32.mxu0 0.0
    %3396 = vmatmul.mubr.f32.gmra.mxu0 %v3186
    %v3397 = vpop.f32.mrf.mxu0
    %v3398 = vadd.f32 %v3328, %v3397
    %v3399 = vpop.f32.mrf.mxu0
    %3400 = vdwg.mxu0
    %s3401 = scalar_lea.vmem %s17, 2
    %v3402 = vld [vmem:[%s3401] sm:$0x1]
    %v3404 = vlaneseq
    %v3405 = vshrl.u32 %v3404, 7
    %v3406 = vsub.s32 0, %v3405
    %v3407 = vrot.slane %v3402, %v3406
    %v3409 = vadd.f32 %v3398, %v3407
    %v3410 = vmax.f32 %v3409, 0.0
    %s3411 = scalar_lea.vmem %s18, 64
    %v3412 = vld [vmem:[%s3411] sm:$0xff]
    %v3413 = vld [vmem:[%s3411 + $0x8] sm:$0xff]
    %v3414 = vld [vmem:[%s3411 + $0x10] sm:$0xff]
    %v3415 = vld [vmem:[%s3411 + $0x18] sm:$0xff]
    %s3416 = scalar_lea.vmem %s19, 2
    %v3417 = vld [vmem:[%s3416] sm:$0x1]
    %v3419 = vlaneseq
    %v3420 = vshrl.u32 %v3419, 7
    %v3421 = vsub.s32 0, %v3420
    %v3422 = vrot.slane %v3417, %v3421
    %v3425 = vsel %vm479, %v3410, 0
    %3427 = vmatprep.subr.mxu0 0.0
    %3428 = vmatpush1.msra.mxu0 0.0
    %3429 = vmatprep.subr.mxu0 0.0
    %3430 = vmatpush1.msra.mxu0 0.0
    %3431 = vmatprep.subr.mxu0 0.0
    %3432 = vmatpush1.msra.mxu0 0.0
    %3433 = vmatprep.subr.mxu0 0.0
    %3434 = vmatpush1.msra.mxu0 0.0
    %3435 = vmatprep.subr.mxu0 0.0
    %3436 = vmatpush1.msra.mxu0 0.0
    %3437 = vmatprep.subr.mxu0 0.0
    %3438 = vmatpush1.msra.mxu0 0.0
    %3439 = vmatprep.subr.mxu0 0.0
    %3440 = vmatpush1.msra.mxu0 0.0
    %3441 = vmatprep.subr.mxu0 0.0
    %3442 = vmatpush1.msra.mxu0 0.0
    %3443 = vmatprep.subr.mxu0 0.0
    %3444 = vmatpush1.msra.mxu0 0.0
    %3445 = vmatprep.subr.mxu0 0.0
    %3446 = vmatpush1.msra.mxu0 0.0
    %3447 = vmatprep.subr.mxu0 0.0
    %3448 = vmatpush1.msra.mxu0 0.0
    %3449 = vmatprep.subr.mxu0 0.0
    %3450 = vmatpush1.msra.mxu0 0.0
    %3451 = vmatprep.subr.mxu0 0.0
    %3452 = vmatpush1.msra.mxu0 %v3415
    %3453 = vmatprep.subr.mxu0 0.0
    %3454 = vmatpush1.msra.mxu0 %v3414
    %3455 = vmatprep.subr.mxu0 0.0
    %3456 = vmatpush1.msra.mxu0 %v3413
    %3457 = vmatprep.subr.mxu0 0.0
    %3458 = vmatpush1.msra.mxu0 %v3412
    %3459 = vmatprep.subr.mxu0 0.0
    %3460 = vmatpush2.msra.mxu0 0.0
    %3461 = vmatprep.subr.mxu0 0.0
    %3462 = vmatpush2.msra.mxu0 0.0
    %3463 = vmatprep.subr.mxu0 0.0
    %3464 = vmatpush2.msra.mxu0 0.0
    %3465 = vmatprep.subr.mxu0 0.0
    %3466 = vmatpush2.msra.mxu0 0.0
    %3467 = vmatprep.subr.mxu0 0.0
    %3468 = vmatpush2.msra.mxu0 0.0
    %3469 = vmatprep.subr.mxu0 0.0
    %3470 = vmatpush2.msra.mxu0 0.0
    %3471 = vmatprep.subr.mxu0 0.0
    %3472 = vmatpush2.msra.mxu0 0.0
    %3473 = vmatprep.subr.mxu0 0.0
    %3474 = vmatpush2.msra.mxu0 0.0
    %3475 = vmatprep.subr.mxu0 0.0
    %3476 = vmatpush2.msra.mxu0 0.0
    %3477 = vmatprep.subr.mxu0 0.0
    %3478 = vmatpush2.msra.mxu0 0.0
    %3479 = vmatprep.subr.mxu0 0.0
    %3480 = vmatpush2.msra.mxu0 0.0
    %3481 = vmatprep.subr.mxu0 0.0
    %3482 = vmatpush2.msra.mxu0 0.0
    %3483 = vmatprep.subr.mxu0 0.0
    %3484 = vmatpush2.msra.mxu0 0.0
    %3485 = vmatprep.subr.mxu0 0.0
    %3486 = vmatpush2.msra.mxu0 0.0
    %3487 = vmatprep.subr.mxu0 0.0
    %3488 = vmatpush2.msra.mxu0 0.0
    %3489 = vmatprep.subr.mxu0 0.0
    %3490 = vmatpush2.msra.mxu0 0.0
    %3491 = vmatprep.mubr.f32.mxu0 0.0
    %3492 = vmatmul.mubr.f32.gmra.mxu0 %v3425
    %v3493 = vpop.f32.mrf.mxu0
    %v3494 = vadd.f32 %v3422, %v3493
    %v3495 = vpop.f32.mrf.mxu0
    %3496 = vdwg.mxu0
    %v3497 = vtanh.pop %v3494
    %vm3498 = vcmask 259072
    %3499 = vst.msk [vmem:[#allocation2] sm:$0x3f] %vm3498, %v3410
    %vm3500 = vcmask 13312
    %3501 = vst.msk [vmem:[%s21] sm:$0x3f] %vm3500, %v3497
    %v3503 = vsel %vm860, %v3497, 0
    %3505 = vmatprep.subr.mxu0 0.0
    %3506 = vmatpush1.msra.mxu0 0.0
    %3507 = vmatprep.subr.mxu0 0.0
    %3508 = vmatpush1.msra.mxu0 0.0
    %3509 = vmatprep.subr.mxu0 0.0
    %3510 = vmatpush1.msra.mxu0 0.0
    %3511 = vmatprep.subr.mxu0 0.0
    %3512 = vmatpush1.msra.mxu0 0.0
    %3513 = vmatprep.subr.mxu0 0.0
    %3514 = vmatpush1.msra.mxu0 0.0
    %3515 = vmatprep.subr.mxu0 0.0
    %3516 = vmatpush1.msra.mxu0 0.0
    %3517 = vmatprep.subr.mxu0 0.0
    %3518 = vmatpush1.msra.mxu0 0.0
    %3519 = vmatprep.subr.mxu0 0.0
    %3520 = vmatpush1.msra.mxu0 0.0
    %3521 = vmatprep.subr.mxu0 0.0
    %3522 = vmatpush1.msra.mxu0 0.0
    %3523 = vmatprep.subr.mxu0 0.0
    %3524 = vmatpush1.msra.mxu0 0.0
    %3525 = vmatprep.subr.mxu0 0.0
    %3526 = vmatpush1.msra.mxu0 0.0
    %3527 = vmatprep.subr.mxu0 0.0
    %3528 = vmatpush1.msra.mxu0 0.0
    %3529 = vmatprep.subr.mxu0 0.0
    %3530 = vmatpush1.msra.mxu0 0.0
    %3531 = vmatprep.subr.mxu0 0.0
    %3532 = vmatpush1.msra.mxu0 0.0
    %3533 = vmatprep.subr.mxu0 0.0
    %3534 = vmatpush1.msra.mxu0 0.0
    %3535 = vmatprep.subr.mxu0 0.0
    %3536 = vmatpush1.msra.mxu0 %v3503
    %3537 = vmatprep.subr.mxu0 0.0
    %3538 = vmatpush2.msra.mxu0 0.0
    %3539 = vmatprep.subr.mxu0 0.0
    %3540 = vmatpush2.msra.mxu0 0.0
    %3541 = vmatprep.subr.mxu0 0.0
    %3542 = vmatpush2.msra.mxu0 0.0
    %3543 = vmatprep.subr.mxu0 0.0
    %3544 = vmatpush2.msra.mxu0 0.0
    %3545 = vmatprep.subr.mxu0 0.0
    %3546 = vmatpush2.msra.mxu0 0.0
    %3547 = vmatprep.subr.mxu0 0.0
    %3548 = vmatpush2.msra.mxu0 0.0
    %3549 = vmatprep.subr.mxu0 0.0
    %3550 = vmatpush2.msra.mxu0 0.0
    %3551 = vmatprep.subr.mxu0 0.0
    %3552 = vmatpush2.msra.mxu0 0.0
    %3553 = vmatprep.subr.mxu0 0.0
    %3554 = vmatpush2.msra.mxu0 0.0
    %3555 = vmatprep.subr.mxu0 0.0
    %3556 = vmatpush2.msra.mxu0 0.0
    %3557 = vmatprep.subr.mxu0 0.0
    %3558 = vmatpush2.msra.mxu0 0.0
    %3559 = vmatprep.subr.mxu0 0.0
    %3560 = vmatpush2.msra.mxu0 0.0
    %3561 = vmatprep.subr.mxu0 0.0
    %3562 = vmatpush2.msra.mxu0 0.0
    %3563 = vmatprep.subr.mxu0 0.0
    %3564 = vmatpush2.msra.mxu0 0.0
    %3565 = vmatprep.subr.mxu0 0.0
    %3566 = vmatpush2.msra.mxu0 0.0
    %3567 = vmatprep.subr.mxu0 0.0
    %3568 = vmatpush2.msra.mxu0 0.0
    %3569 = vmatprep.mubr.f32.mxu0 0.0
    %3570 = vmatmul.mubr.f32.gmra.mxu0 %v858
    %v3571 = vpop.f32.mrf.mxu0
    %v3572 = vadd.f32 0.0, %v3571
    %v3573 = vpop.f32.mrf.mxu0
    %3574 = vdwg.mxu0
    %v3575 = vsub.f32 %v3497, %v3572
    %v3576 = vmul.f32 %v3575, %v3575
    %v3577 = vsel %vm3500, %v3576, 0.0
    %3578 = vadd.xlane.f32.xlu0 %v3577
    %v3579 = vpop.xlane.xlu0 %3578
    %v3580 = vrot.slane %v3579, 4
    %v3581 = vadd.f32 %v3579, %v3580
    %v3582 = vrot.slane %v3581, 2
    %v3583 = vadd.f32 %v3581, %v3582
    %v3584 = vrot.slane %v3583, 1
    %v3585 = vadd.f32 %v3583, %v3584
    %s3586 = vtos %v3585
    %v3587 = vrcp.pop 6.0
    %s3588 = vtos %v3587
    %s3589 = smul.f32 %s3586, %s3588
    %v3590 = vmul.f32 %v3497, %v3575
    %v3591 = vsel %vm3500, %v3590, 0.0
    %3592 = vadd.xlane.f32.xlu0 %v3591
    %v3593 = vpop.xlane.xlu0 %3592
    %v3594 = vrot.slane %v3593, 4
    %v3595 = vadd.f32 %v3593, %v3594
    %v3596 = vrot.slane %v3595, 2
    %v3597 = vadd.f32 %v3595, %v3596
    %v3598 = vrot.slane %v3597, 1
    %v3599 = vadd.f32 %v3597, %v3598
    %s3600 = vtos %v3599
    %s3601 = smul.f32 %s3600, 2.0
    %v3602 = vrcp.pop 6.0
    %s3603 = vtos %v3602
    %s3604 = smul.f32 %s3601, %s3603
    %v3605 = vld [vmem:[%s4] sm:$0x3]
    %v3606 = vld [vmem:[%s5] sm:$0x1]
    %v3607 = vld [vmem:[%s7] sm:$0x3f]
    %v3608 = vmul.f32 %v3497, %v3497
    %v3609 = vsel %vm3500, %v3608, 0.0
    %3610 = vadd.xlane.f32.xlu0 %v3609
    %v3611 = vpop.xlane.xlu0 %3610
    %v3613 = vlaneseq
    %v3614 = vshrl.u32 %v3613, 7
    %v3615 = vsub.s32 0, %v3614
    %v3616 = vrot.slane %v3606, %v3615
    %v3618 = vadd.f32 %v3611, %v3616
    %v3619 = vsel %vm554, %v3497, 0
    %v3622 = vsel %vm558, %v3605, 0
    %3624 = vmatprep.subr.mxu0 0.0
    %3625 = vmatpush1.msra.mxu0 0.0
    %3626 = vmatprep.subr.mxu0 0.0
    %3627 = vmatpush1.msra.mxu0 0.0
    %3628 = vmatprep.subr.mxu0 0.0
    %3629 = vmatpush1.msra.mxu0 0.0
    %3630 = vmatprep.subr.mxu0 0.0
    %3631 = vmatpush1.msra.mxu0 0.0
    %3632 = vmatprep.subr.mxu0 0.0
    %3633 = vmatpush1.msra.mxu0 0.0
    %3634 = vmatprep.subr.mxu0 0.0
    %3635 = vmatpush1.msra.mxu0 0.0
    %3636 = vmatprep.subr.mxu0 0.0
    %3637 = vmatpush1.msra.mxu0 0.0
    %3638 = vmatprep.subr.mxu0 0.0
    %3639 = vmatpush1.msra.mxu0 0.0
    %3640 = vmatprep.subr.mxu0 0.0
    %3641 = vmatpush1.msra.mxu0 0.0
    %3642 = vmatprep.subr.mxu0 0.0
    %3643 = vmatpush1.msra.mxu0 0.0
    %3644 = vmatprep.subr.mxu0 0.0
    %3645 = vmatpush1.msra.mxu0 0.0
    %3646 = vmatprep.subr.mxu0 0.0
    %3647 = vmatpush1.msra.mxu0 0.0
    %3648 = vmatprep.subr.mxu0 0.0
    %3649 = vmatpush1.msra.mxu0 0.0
    %3650 = vmatprep.subr.mxu0 0.0
    %3651 = vmatpush1.msra.mxu0 0.0
    %3652 = vmatprep.subr.mxu0 0.0
    %3653 = vmatpush1.msra.mxu0 0.0
    %3654 = vmatprep.subr.mxu0 0.0
    %3655 = vmatpush1.msra.mxu0 %v3622
    %3656 = vmatprep.subr.mxu0 0.0
    %3657 = vmatpush2.msra.mxu0 0.0
    %3658 = vmatprep.subr.mxu0 0.0
    %3659 = vmatpush2.msra.mxu0 0.0
    %3660 = vmatprep.subr.mxu0 0.0
    %3661 = vmatpush2.msra.mxu0 0.0
    %3662 = vmatprep.subr.mxu0 0.0
    %3663 = vmatpush2.msra.mxu0 0.0
    %3664 = vmatprep.subr.mxu0 0.0
    %3665 = vmatpush2.msra.mxu0 0.0
    %3666 = vmatprep.subr.mxu0 0.0
    %3667 = vmatpush2.msra.mxu0 0.0
    %3668 = vmatprep.subr.mxu0 0.0
    %3669 = vmatpush2.msra.mxu0 0.0
    %3670 = vmatprep.subr.mxu0 0.0
    %3671 = vmatpush2.msra.mxu0 0.0
    %3672 = vmatprep.subr.mxu0 0.0
    %3673 = vmatpush2.msra.mxu0 0.0
    %3674 = vmatprep.subr.mxu0 0.0
    %3675 = vmatpush2.msra.mxu0 0.0
    %3676 = vmatprep.subr.mxu0 0.0
    %3677 = vmatpush2.msra.mxu0 0.0
    %3678 = vmatprep.subr.mxu0 0.0
    %3679 = vmatpush2.msra.mxu0 0.0
    %3680 = vmatprep.subr.mxu0 0.0
    %3681 = vmatpush2.msra.mxu0 0.0
    %3682 = vmatprep.subr.mxu0 0.0
    %3683 = vmatpush2.msra.mxu0 0.0
    %3684 = vmatprep.subr.mxu0 0.0
    %3685 = vmatpush2.msra.mxu0 0.0
    %3686 = vmatprep.subr.mxu0 0.0
    %3687 = vmatpush2.msra.mxu0 0.0
    %3688 = vmatprep.mubr.f32.mxu0 0.0
    %3689 = vmatmul.mubr.f32.gmra.mxu0 %v3619
    %v3690 = vpop.f32.mrf.mxu0
    %v3691 = vadd.f32 0.0, %v3690
    %v3692 = vpop.f32.mrf.mxu0
    %3693 = vdwg.mxu0
    %v3694 = vmul.f32 %v3691, 2.0
    %v3695 = vsub.f32 %v3618, %v3694
    %v3696 = vmax.f32 %v3695, 0.0
    %v3697 = vadd.f32 %v3696, %v3607
    %v3698 = vsel %vm3498, %v3697, inf
    %3699 = vmin.xlane.f32.xlu0 %v3698
    %v3700 = vpop.xlane.xlu0 %3699
    %vm3701 = vcmask 5120
    %v3702 = vsel %vm3701, %v3700, 0.0
    %3703 = vadd.xlane.f32.xlu0 %v3702
    %v3704 = vpop.xlane.xlu0 %3703
    %v3705 = vrot.slane %v3704, 4
    %v3706 = vadd.f32 %v3704, %v3705
    %v3707 = vrot.slane %v3706, 2
    %v3708 = vadd.f32 %v3706, %v3707
    %v3709 = vrot.slane %v3708, 1
    %v3710 = vadd.f32 %v3708, %v3709
    %s3711 = vtos %v3710
    %v3712 = vrcp.pop 6.0
    %s3713 = vtos %v3712
    %s3714 = smul.f32 %s3711, %s3713
    %v3715 = vrot.slane %v3698, 4
    %v3716 = vmin.f32 %v3698, %v3715
    %v3717 = vrot.slane %v3716, 2
    %v3718 = vmin.f32 %v3716, %v3717
    %v3719 = vrot.slane %v3718, 1
    %v3720 = vmin.f32 %v3718, %v3719
    %vm3721 = vcmask 253952
    %v3722 = vsel %vm3721, %v3720, 0.0
    %3723 = vadd.xlane.f32.xlu0 %v3722
    %v3724 = vpop.xlane.xlu0 %3723
    %v3725 = vrot.slane %v3724, 4
    %v3726 = vadd.f32 %v3724, %v3725
    %v3727 = vrot.slane %v3726, 2
    %v3728 = vadd.f32 %v3726, %v3727
    %v3729 = vrot.slane %v3728, 1
    %v3730 = vadd.f32 %v3728, %v3729
    %s3731 = vtos %v3730
    %v3732 = vrcp.pop 32.0
    %s3733 = vtos %v3732
    %s3734 = smul.f32 %s3731, %s3733
    %s3735 = sadd.f32 %s3714, %s3734
    %s3736 = scalar_lea.smem [#allocation5], 0
    %3737 = sst [smem:[%s3736]] %s3735
    %s3738 = scalar_lea.smem [#allocation5], 1
    %3739 = sst [smem:[%s3738]] %s3604
    %s3740 = scalar_lea.smem [#allocation5], 2
    %3741 = sst [smem:[%s3740]] %s3589
    %s3742 = sadd.f32 %s3735, %s3604
    %s3743 = sadd.f32 %s3742, %s3589
    %s3744 = sadd.f32 %s3743, 0.0
    %s3745 = scalar_lea.smem [#allocation5], 3
    %3746 = sst [smem:[%s3745]] %s3744
    // Predicated region
    $region82: #{pixel2mesh_forward.1} parent=1 // pred_check
      _
    $region83: #{pixel2mesh_forward.1} parent=1 // pred_check_branch
      %3748 = sbr.rel (0) target = $region85
    $region84: #{pixel2mesh_forward.1} parent=1 // pred_region
      %s3750 = ssub.s32 128, 128
      %3751 = vsyncadd [#allocation3], %s3750
      %s3753 = sshll.u32 [#allocation2], 4
      %s3754 = int_to_ptr.vmem [resolvable:$true] %s3753
      %3756 = dma.vmem_to_hbm [thread:$0]  %s3754, 128, %s20, [#allocation3]
    $region85: #{pixel2mesh_forward.1} parent=1 // pred_fallthru
      _
    // Predicated region
    $region86: #{pixel2mesh_forward.1} parent=1 // pred_check
      _
    $region87: #{pixel2mesh_forward.1} parent=1 // pred_check_branch
      %3758 = sbr.rel (0) target = $region89
    $region88: #{pixel2mesh_forward.1} parent=1 // pred_region
      _
    $region89: #{pixel2mesh_forward.1} parent=1 // pred_fallthru
      _
    // Predicated region
    $region90: #{pixel2mesh_forward.1} parent=1 // pred_check
      _
    $region91: #{pixel2mesh_forward.1} parent=1 // pred_check_branch
      %3760 = sbr.rel (0) target = $region93
    $region92: #{pixel2mesh_forward.1} parent=1 // pred_region
      %s3762 = ssub.s32 16, 16
      %3763 = vsyncadd [#allocation4], %s3762
      %s3765 = sshll.u32 %s22, 4
      %s3766 = int_to_ptr.vmem [resolvable:$true] %s3765
      %3768 = dma.smem_to_vmem [#allocation5], 16, %s3766, [#allocation4]
    $region93: #{pixel2mesh_forward.1} parent=1 // pred_fallthru
      _
    // Predicated region
    $region94: #{pixel2mesh_forward.1} parent=1 // pred_check
      _
    $region95: #{pixel2mesh_forward.1} parent=1 // pred_check_branch
      %3770 = sbr.rel (0) target = $region97
    $region96: #{pixel2mesh_forward.1} parent=1 // pred_region
      %3771 = dma.done [#allocation3], 128
    $region97: #{pixel2mesh_forward.1} parent=1 // pred_fallthru
      _
    // Predicated region
    $region98: #{pixel2mesh_forward.1} parent=1 // pred_check
      _
    $region99: #{pixel2mesh_forward.1} parent=1 // pred_check_branch
      %3773 = sbr.rel (0) target = $region101
    $region100: #{pixel2mesh_forward.1} parent=1 // pred_region
      _
    $region101: #{pixel2mesh_forward.1} parent=1 // pred_fallthru
      _
    // Predicated region
    $region102: #{pixel2mesh_forward.1} parent=1 // pred_check
      _
    $region103: #{pixel2mesh_forward.1} parent=1 // pred_check_branch
      %3775 = sbr.rel (0) target = $region105
    $region104: #{pixel2mesh_forward.1} parent=1 // pred_region
      %3776 = dma.done [#allocation4], 16
    $region105: #{pixel2mesh_forward.1} parent=1 // pred_fallthru
      _
    %3777 = sfence
    %3778 = vsyncpa [#allocation3], 1
    %3779 = vsyncpa [#allocation4], 1

</llo_original>
